<compile_context>
chip_gen: v7x
topology: tpu7x:2x2x1
jax: 0.10.0
libtpu: 0.0.40
codegen_flags: <defaults>
</compile_context>

<pallas_src>
import math

import numpy as np

import jax
import jax.numpy as jnp
from jax.experimental import pallas as pl
from jax.experimental.pallas import tpu as pltpu


_SQRT_HALF = math.sqrt(0.5)


def _round_up(x, m):
    return ((x + m - 1) // m) * m


# ---------------------------------------------------------------------------
# Generation-aware VMEM budgets
# ---------------------------------------------------------------------------
def _vmem_caps():
    """(tile budget bytes, vmem_limit_bytes) derived from the chip's VMEM."""
    cap = 64 * 1024 * 1024  # conservative fallback (v7x per-TC VMEM)
    try:
        info = pltpu.get_tpu_info()
        cap = int(getattr(info, "vmem_capacity_bytes", cap)) or cap
    except Exception:
        pass
    budget = int(cap * 0.62)   # ~40 MiB on v7x, ~79 MiB on v5e/v6e
    limit = int(cap * 0.85)    # ~54 MiB on v7x, ~108 MiB on v5e/v6e
    return budget, limit


# ---------------------------------------------------------------------------
# Kernel 1a: causal conv + GLU + encoder attention, per-beam encoder states
# ---------------------------------------------------------------------------
def _h2_beam_kernel(xu_ref, ea_ref, eb_ref, mask_ref, cw_ref, cb_ref, h2_ref):
    D = h2_ref.shape[1]
    KD = xu_ref.shape[1]
    xu = xu_ref[...]                                               # (tb, K*D) bf16
    # residual = embedding of the last target token (last D lanes of the window)
    x_last = xu[:, KD - D:].astype(jnp.float32)                    # (tb, D)
    # causal conv at the last position: one (K*D -> 2D) MXU contraction
    conv = jnp.dot(xu, cw_ref[...],
                   preferred_element_type=jnp.float32) + cb_ref[...]
    a = conv[:, :D]
    g = conv[:, D:]
    h = (a * (1.0 / (1.0 + jnp.exp(-g))) + x_last) * _SQRT_HALF    # (tb, D) f32
    # single-query attention over per-beam encoder states (bf16 MXU, f32 acc)
    hb = h.astype(jnp.bfloat16)[:, None, :]                        # (tb, 1, D)
    scores = jnp.einsum('btd,bsd->bts', hb, ea_ref[...],
                        preferred_element_type=jnp.float32)[:, 0, :]   # (tb, S)
    scores = jnp.where(mask_ref[...] > 0.5, -1e9, scores)          # 1.0 == padded
    m = jnp.max(scores, axis=-1, keepdims=True)
    p = jnp.exp(scores - m)
    p = p * pl.reciprocal(jnp.sum(p, axis=-1, keepdims=True), approx=True)
    pb = p.astype(jnp.bfloat16)[:, None, :]                        # (tb, 1, S)
    ctx = jnp.einsum('bts,bsd->btd', pb, eb_ref[...],
                     preferred_element_type=jnp.float32)[:, 0, :]  # (tb, D)
    h2_ref[...] = ((h + ctx) * _SQRT_HALF).astype(jnp.bfloat16)


# ---------------------------------------------------------------------------
# Kernel 1b: same computation with a single SHARED encoder (single-hyp path)
# ---------------------------------------------------------------------------
def _h2_shared_kernel(xu_ref, eat_ref, eb_ref, mask_ref, cw_ref, cb_ref, h2_ref):
    D = h2_ref.shape[1]
    KD = xu_ref.shape[1]
    xu = xu_ref[...]                                               # (tt, K*D) bf16
    x_last = xu[:, KD - D:].astype(jnp.float32)
    conv = jnp.dot(xu, cw_ref[...],
                   preferred_element_type=jnp.float32) + cb_ref[...]
    a = conv[:, :D]
    g = conv[:, D:]
    h = (a * (1.0 / (1.0 + jnp.exp(-g))) + x_last) * _SQRT_HALF    # (tt, D) f32
    # shared keys: (tt, D) @ (D, S) MXU matmul (keys pre-transposed in wrapper)
    scores = jnp.dot(h.astype(jnp.bfloat16), eat_ref[...],
                     preferred_element_type=jnp.float32)           # (tt, S)
    scores = jnp.where(mask_ref[...] > 0.5, -1e9, scores)          # mask (1,S) bcasts
    m = jnp.max(scores, axis=-1, keepdims=True)
    p = jnp.exp(scores - m)
    p = p * pl.reciprocal(jnp.sum(p, axis=-1, keepdims=True), approx=True)
    ctx = jnp.dot(p.astype(jnp.bfloat16), eb_ref[...],
                  preferred_element_type=jnp.float32)              # (tt, D)
    h2_ref[...] = ((h + ctx) * _SQRT_HALF).astype(jnp.bfloat16)


# ---------------------------------------------------------------------------
# Kernel 2: vocab projection, h2 resident, out_w streamed once
# ---------------------------------------------------------------------------
def _vocab_proj_kernel(h2_ref, ow_ref, ob_ref, o_ref):
    o_ref[...] = jnp.dot(h2_ref[...], ow_ref[...],
                         preferred_element_type=jnp.float32) + ob_ref[...]


# ---------------------------------------------------------------------------
# Tiling heuristics
# ---------------------------------------------------------------------------
def _pick_tile_rows(rows, S, D, KD, budget, per_row_enc):
    """Largest multiple-of-8 divisor of `rows` fitting the VMEM budget (nb=1
    preferred: extra grid steps buy nothing and would re-stream weights)."""
    def est(tb):
        b = 2 * tb * KD * 2                                 # xu (bf16, 2-buf)
        if per_row_enc:
            b += 2 * 2 * tb * S * D * 2                     # enc keys+values per row
            b += 2 * tb * S * 4                             # mask
        else:
            b += 2 * 2 * S * D * 2                          # shared enc keys+values
            b += 2 * S * 4                                  # mask (1, S)
        b += 2 * (KD * 2 * D * 2 + 2 * D * 4)               # conv weight + bias
        b += 2 * tb * D * 2                                 # h2 output (bf16)
        b += 4 * tb * max(S, 2 * D) * 4                     # f32 intermediates headroom
        return b

    for tb in range(rows, 7, -8):
        if rows % tb == 0 and est(tb) <= budget:
            return tb
    return 8


def _pick_tile_v(V_pad, B, D, budget):
    """Largest vocab tile (multiple of 128) fitting the VMEM budget."""
    for tv in (4096, 2048, 1024, 512, 256, 128):
        if V_pad % tv != 0:
            continue
        b = 3 * D * tv * 2            # out_w tiles (up to 3-deep buffering)
        b += 2 * tv * 4               # out_b tiles
        b += 2 * B * tv * 4           # output tiles (f32)
        b += 2 * B * D * 2            # resident h2 (bf16)
        if b <= budget:
            return tv
    return 128


def _weight_block_spec(D, tile_v, nv):
    idx = lambda j: (0, j)
    if nv >= 3:
        try:
            # 3-deep buffering keeps the out_w HBM stream continuously outstanding
            return pl.BlockSpec((D, tile_v), idx, pipeline_mode=pl.Buffered(3))
        except Exception:
            pass
    return pl.BlockSpec((D, tile_v), idx)


# ---------------------------------------------------------------------------
# pallas_call wrappers
# ---------------------------------------------------------------------------
def _h2_beam(xu, enc_a, enc_b, mask, conv_w_flat, conv_b, budget, limit):
    """xu: (B, K*D) bf16; enc_*: (B, S, D) bf16; mask: (B, S) f32 -> (B, D) bf16."""
    B, KD = xu.shape
    S, D = enc_a.shape[1], enc_a.shape[2]
    tile_b = _pick_tile_rows(B, S, D, KD, budget, per_row_enc=True)
    nb = B // tile_b
    return pl.pallas_call(
        _h2_beam_kernel,
        out_shape=jax.ShapeDtypeStruct((B, D), jnp.bfloat16),
        grid_spec=pltpu.PrefetchScalarGridSpec(
            num_scalar_prefetch=0,
            grid=(nb,),
            in_specs=[
                pl.BlockSpec((tile_b, KD), lambda i: (i, 0)),        # x window
                pl.BlockSpec((tile_b, S, D), lambda i: (i, 0, 0)),   # enc keys
                pl.BlockSpec((tile_b, S, D), lambda i: (i, 0, 0)),   # enc values
                pl.BlockSpec((tile_b, S), lambda i: (i, 0)),         # padding mask
                pl.BlockSpec((KD, conv_w_flat.shape[1]), lambda i: (0, 0)),
                pl.BlockSpec((1, conv_b.shape[1]), lambda i: (0, 0)),
            ],
            out_specs=pl.BlockSpec((tile_b, D), lambda i: (i, 0)),
        ),
        compiler_params=pltpu.CompilerParams(
            dimension_semantics=("parallel",),
            vmem_limit_bytes=limit),
    )(xu, enc_a, enc_b, mask, conv_w_flat, conv_b)


def _h2_shared_enc(xu, enc_a_t, enc_b, mask, conv_w_flat, conv_b, budget, limit):
    """xu: (R, K*D) bf16; enc_a_t: (D, S) bf16; enc_b: (S, D) bf16; mask: (1, S)."""
    R, KD = xu.shape
    D, S = enc_a_t.shape
    tile_r = _pick_tile_rows(R, S, D, KD, budget, per_row_enc=False)
    nr = R // tile_r
    return pl.pallas_call(
        _h2_shared_kernel,
        out_shape=jax.ShapeDtypeStruct((R, D), jnp.bfloat16),
        grid_spec=pltpu.PrefetchScalarGridSpec(
            num_scalar_prefetch=0,
            grid=(nr,),
            in_specs=[
                pl.BlockSpec((tile_r, KD), lambda i: (i, 0)),        # x windows
                pl.BlockSpec((D, S), lambda i: (0, 0)),              # shared keys^T
                pl.BlockSpec((S, D), lambda i: (0, 0)),              # shared values
                pl.BlockSpec((1, S), lambda i: (0, 0)),              # padding mask
                pl.BlockSpec((KD, conv_w_flat.shape[1]), lambda i: (0, 0)),
                pl.BlockSpec((1, conv_b.shape[1]), lambda i: (0, 0)),
            ],
            out_specs=pl.BlockSpec((tile_r, D), lambda i: (i, 0)),
        ),
        compiler_params=pltpu.CompilerParams(
            dimension_semantics=("parallel",),
            vmem_limit_bytes=limit),
    )(xu, enc_a_t, enc_b, mask, conv_w_flat, conv_b)


def _vocab_project(h2, out_w, out_b, budget, limit):
    """h2: (B, D) bf16; out_w: (D, V_pad) bf16; out_b: (1, V_pad) f32 -> (B, V_pad) f32."""
    B, D = h2.shape
    V = out_w.shape[1]
    tile_v = _pick_tile_v(V, B, D, budget)
    nv = V // tile_v
    return pl.pallas_call(
        _vocab_proj_kernel,
        out_shape=jax.ShapeDtypeStruct((B, V), jnp.float32),
        grid_spec=pltpu.PrefetchScalarGridSpec(
            num_scalar_prefetch=0,
            grid=(nv,),
            in_specs=[
                pl.BlockSpec((B, D), lambda j: (0, 0)),              # resident h2
                _weight_block_spec(D, tile_v, nv),                   # out_w tile
                pl.BlockSpec((1, tile_v), lambda j: (0, j)),         # out_b tile
            ],
            out_specs=pl.BlockSpec((B, tile_v), lambda j: (0, j)),
        ),
        compiler_params=pltpu.CompilerParams(
            dimension_semantics=("parallel",),   # v7x: two cores split the vocab tiles
            vmem_limit_bytes=limit),
    )(h2, out_w, out_b)


# ---------------------------------------------------------------------------
# Module analogue
# ---------------------------------------------------------------------------
class GPTFConvModelPallas:
    """JAX/Pallas analogue of GPTFConvModelCuda (decode path)."""

    def __init__(self, params, beam_size):
        self.beam_size = beam_size
        self.split_size = beam_size
        self.split_size_list = [self.split_size]
        K, D, D2 = params['conv_w'].shape
        self.K, self.D = K, D
        # weight prep (once): bf16 MXU operands, f32 biases, flattened conv weight
        self.embed = jnp.asarray(params['embed'], jnp.float32)
        self.conv_w_flat = jnp.asarray(params['conv_w'], jnp.float32) \
                              .reshape(K * D, D2).astype(jnp.bfloat16)
        self.conv_b = jnp.asarray(params['conv_b'], jnp.float32).reshape(1, -1)
        out_w = jnp.asarray(params['out_w'], jnp.float32)
        out_b = jnp.asarray(params['out_b'], jnp.float32).reshape(1, -1)
        self.V = out_w.shape[1]
        self.V_pad = _round_up(self.V, 128)
        if self.V_pad != self.V:                       # lane-dense vocab padding
            out_w = jnp.pad(out_w, ((0, 0), (0, self.V_pad - self.V)))
            out_b = jnp.pad(out_b, ((0, 0), (0, self.V_pad - self.V)))
        self.out_w = out_w.astype(jnp.bfloat16)
        self.out_b = out_b
        self.vmem_budget, self.vmem_limit = _vmem_caps()

    # embedding window of the last K target tokens, flattened to (b, K*D)
    def _last_window(self, prev_tokens):
        b, T = prev_tokens.shape
        K, D = self.K, self.D
        if T >= K:
            x = jnp.take(self.embed, prev_tokens[:, T - K:], axis=0)   # (b, K, D)
        else:
            x = jnp.concatenate(
                [jnp.zeros((b, K - T, D), self.embed.dtype),
                 jnp.take(self.embed, prev_tokens, axis=0)], axis=1)
        return x.reshape(b, K * D).astype(jnp.bfloat16)

    def decode(self, prev_tokens_index, encoder_out, prev_tokens):
        # --- beam-split heuristic (host-side; pass prev_tokens_index as a host
        #     array to avoid a device->host sync) ---
        pti0 = prev_tokens_index[0]
        if isinstance(pti0, jax.Array):
            pti0 = jax.device_get(pti0)
        step = int(np.asarray(pti0).sum())
        ctx_len = prev_tokens.shape[1]
        if step * ctx_len <= 3000:
            self.split_size = min(self.beam_size, 200)
        elif step * ctx_len <= 5000:
            self.split_size = min(self.beam_size, 100)
        elif step * ctx_len <= 10000:
            self.split_size = min(self.beam_size, 50)
        else:
            self.split_size = min(self.beam_size, 20)
        split_num = self.beam_size // self.split_size
        self.split_size_list = [self.split_size] * split_num
        if self.beam_size % self.split_size != 0:
            self.split_size_list += [self.beam_size % self.split_size]

        enc_a, enc_b = encoder_out['encoder_out']
        pad_mask = encoder_out['encoder_padding_mask']
        K, D = self.K, self.D

        if prev_tokens_index.shape[0] == 1:
            # single-hypothesis path: full (1, T, V) logits.  The fconv decoder has
            # no cross-position state beyond the K-wide causal conv window, so each
            # position is an independent row; encoder keys/values are SHARED across
            # positions and passed once (no (T, S, D) broadcast).
            T = prev_tokens.shape[1]
            x = jnp.take(self.embed, prev_tokens[0], axis=0)             # (T, D)
            x_pad = jnp.pad(x, ((K - 1, 0), (0, 0)))                     # (T+K-1, D)
            idx = jnp.arange(T)[:, None] + jnp.arange(K)[None, :]        # (T, K)
            xu = x_pad[idx].reshape(T, K * D).astype(jnp.bfloat16)
            T_pad = _round_up(T, 8)
            if T_pad != T:
                xu = jnp.pad(xu, ((0, T_pad - T), (0, 0)))
            ea_t = jnp.transpose(enc_a[0]).astype(jnp.bfloat16)          # (D, S)
            eb0 = enc_b[0].astype(jnp.bfloat16)                          # (S, D)
            mk = pad_mask[:1].astype(jnp.float32)                        # (1, S)
            h2 = _h2_shared_enc(xu, ea_t, eb0, mk, self.conv_w_flat, self.conv_b,
                                self.vmem_budget, self.vmem_limit)       # (T_pad, D)
            logits = _vocab_project(h2, self.out_w, self.out_b,
                                    self.vmem_budget, self.vmem_limit)   # (T_pad, V_pad)
            return logits[:T, :self.V][None]                             # (1, T, V)

        beam = prev_tokens_index.shape[0]
        assert beam == sum(self.split_size_list)
        # The reference runs each chunk against encoder_out[:chunk_size]; collapse
        # that per-chunk slicing into one gather (skipped when it is the identity).
        enc_idx = np.concatenate([np.arange(s) for s in self.split_size_list])
        if not np.array_equal(enc_idx, np.arange(beam)):
            gidx = jnp.asarray(enc_idx)
            enc_a = jnp.take(enc_a, gidx, axis=0)
            enc_b = jnp.take(enc_b, gidx, axis=0)
            pad_mask = jnp.take(pad_mask, gidx, axis=0)

        xu = self._last_window(prev_tokens)                              # (beam, K*D)
        ea = enc_a.astype(jnp.bfloat16)
        eb = enc_b.astype(jnp.bfloat16)
        mk = pad_mask.astype(jnp.float32)
        B_pad = _round_up(beam, 8)
        if B_pad != beam:                                                # sublane padding
            pad = B_pad - beam
            xu = jnp.pad(xu, ((0, pad), (0, 0)))
            ea = jnp.pad(ea, ((0, pad), (0, 0), (0, 0)))
            eb = jnp.pad(eb, ((0, pad), (0, 0), (0, 0)))
            mk = jnp.pad(mk, ((0, pad), (0, 0)))
        h2 = _h2_beam(xu, ea, eb, mk, self.conv_w_flat, self.conv_b,
                      self.vmem_budget, self.vmem_limit)                 # (B_pad, D)
        logits = _vocab_project(h2, self.out_w, self.out_b,
                                self.vmem_budget, self.vmem_limit)       # (B_pad, V_pad)
        return logits[:beam, :self.V]                                    # (beam, V)


# ---------------------------------------------------------------------------
# Pure-JAX f32 reference (correctness check of the bf16 / tiled kernels)
# ---------------------------------------------------------------------------
def _reference_full_logits(prev_tokens, enc_a, enc_b, pad_mask, params):
    embed, conv_w, conv_b = params['embed'], params['conv_w'], params['conv_b']
    out_w, out_b = params['out_w'], params['out_b']
    K, D, _ = conv_w.shape
    b, T = prev_tokens.shape
    x = jnp.take(embed, prev_tokens, axis=0)                             # (b, T, D)
    x_pad = jnp.pad(x, ((0, 0), (K - 1, 0), (0, 0)))
    conv = jnp.zeros((b, T, 2 * D), jnp.float32)
    for k in range(K):
        conv = conv + jnp.einsum('btd,de->bte', x_pad[:, k:k + T], conv_w[k])
    conv = conv + conv_b
    a, g = conv[..., :D], conv[..., D:]
    h = (a * jax.nn.sigmoid(g) + x) * math.sqrt(0.5)
    scores = jnp.einsum('btd,bsd->bts', h, enc_a)
    scores = jnp.where(pad_mask[:, None, :] > 0.5, -1e9, scores)
    p = jax.nn.softmax(scores, axis=-1)
    ctx = jnp.einsum('bts,bsd->btd', p, enc_b)
    h2 = (h + ctx) * math.sqrt(0.5)
    return jnp.einsum('btd,dv->btv', h2, out_w) + out_b


if __name__ == "__main__":
    # small shapes; beam=12 / T=10 / V=4000 deliberately exercise the beam-,
    # time- and vocab-padding paths (pad to 16 / 16 / 4096).
    beam, T, S, D, V, K = 12, 10, 128, 128, 4000, 3

    key = jax.random.PRNGKey(0)
    ks = jax.random.split(key, 10)

    params = {
        'embed': jax.random.normal(ks[0], (V, D), jnp.float32) * 0.02,
        'conv_w': jax.random.normal(ks[1], (K, D, 2 * D), jnp.float32)
                  * (1.0 / math.sqrt(K * D)),
        'conv_b': jax.random.normal(ks[2], (1, 2 * D), jnp.float32) * 0.02,
        'out_w': jax.random.normal(ks[3], (D, V), jnp.float32)
                 * (1.0 / math.sqrt(D)),
        'out_b': jax.random.normal(ks[4], (1, V), jnp.float32) * 0.02,
    }

    prev_tokens = jax.random.randint(ks[5], (beam, T), 0, V)
    prev_tokens_index = np.ones((beam, T), np.int32)      # host array: no device sync
    enc_a = jax.random.normal(ks[6], (beam, S, D), jnp.float32)
    enc_b = jax.random.normal(ks[7], (beam, S, D), jnp.float32)
    src_tokens = jax.random.randint(ks[8], (beam, S), 0, V)
    pad_mask = (jax.random.uniform(ks[9], (beam, S)) < 0.1).astype(jnp.float32)
    encoder_out = {
        'src_tokens': src_tokens,
        'encoder_out': (enc_a, enc_b),
        'encoder_padding_mask': pad_mask,
    }

    model = GPTFConvModelPallas(params, beam_size=beam)

    # multi-beam (hot) path: (beam, V) last-step logits (h2 kernel + vocab kernel)
    logits = jax.block_until_ready(
        model.decode(prev_tokens_index, encoder_out, prev_tokens))
    assert logits.shape == (beam, V), logits.shape
    assert logits.dtype == jnp.float32
    assert bool(jnp.all(jnp.isfinite(logits)))

    ref_full = _reference_full_logits(prev_tokens, enc_a, enc_b, pad_mask, params)
    np.testing.assert_allclose(np.asarray(logits), np.asarray(ref_full[:, -1, :]),
                               rtol=5e-2, atol=5e-2)

    # single-hypothesis path: full (1, T, V) logits with shared encoder keys
    full = jax.block_until_ready(
        model.decode(prev_tokens_index[:1], encoder_out, prev_tokens[:1]))
    assert full.shape == (1, T, V), full.shape
    assert bool(jnp.all(jnp.isfinite(full)))
    ref_one = _reference_full_logits(prev_tokens[:1], enc_a[:1], enc_b[:1],
                                     pad_mask[:1], params)
    np.testing.assert_allclose(np.asarray(full), np.asarray(ref_one),
                               rtol=5e-2, atol=5e-2)

    print("KERNEL_OK")
</pallas_src>

<mosaic_0001>
module attributes {stable_mosaic.version = 11 : i64} {
  func.func @_h2_beam_kernel(%arg0: i32, %arg1: memref<16x384xbf16, #tpu.memory_space<vmem>>, %arg2: memref<16x128x128xbf16, #tpu.memory_space<vmem>>, %arg3: memref<16x128x128xbf16, #tpu.memory_space<vmem>>, %arg4: memref<16x128xf32, #tpu.memory_space<vmem>>, %arg5: memref<384x256xbf16, #tpu.memory_space<vmem>>, %arg6: memref<1x256xf32, #tpu.memory_space<vmem>>, %arg7: memref<16x128xbf16, #tpu.memory_space<vmem>>) attributes {dimension_semantics = [#tpu.dimension_semantics<parallel>], iteration_bounds = array<i64: 1>, scalar_prefetch = 0 : i64, scratch_operands = 0 : i64, tpu.core_type = #tpu.core_type<tc>, window_params = [{transform_indices = @transform_0, window_bounds = array<i64: 16, 384>}, {transform_indices = @transform_1, window_bounds = array<i64: 16, 128, 128>}, {transform_indices = @transform_2, window_bounds = array<i64: 16, 128, 128>}, {transform_indices = @transform_3, window_bounds = array<i64: 16, 128>}, {pipeline_mode = #tpu.pipeline_mode<synchronous>, transform_indices = @transform_4, window_bounds = array<i64: 384, 256>}, {pipeline_mode = #tpu.pipeline_mode<synchronous>, transform_indices = @transform_5, window_bounds = array<i64: 1, 256>}, {transform_indices = @transform_6, window_bounds = array<i64: 16, 128>}]} {
    %c0 = arith.constant 0 : index
    %c0_0 = arith.constant 0 : index
    %0 = vector.load %arg1[%c0, %c0_0] : memref<16x384xbf16, #tpu.memory_space<vmem>>, vector<16x384xbf16>
    %1 = vector.extract_strided_slice %0 {offsets = [0, 256], sizes = [16, 128], strides = [1, 1]} : vector<16x384xbf16> to vector<16x128xbf16>
    %2 = arith.extf %1 : vector<16x128xbf16> to vector<16x128xf32>
    %c0_1 = arith.constant 0 : index
    %c0_2 = arith.constant 0 : index
    %3 = vector.load %arg5[%c0_1, %c0_2] : memref<384x256xbf16, #tpu.memory_space<vmem>>, vector<384x256xbf16>
    %cst = arith.constant dense<0.000000e+00> : vector<16x256xf32>
    %4 = tpu.matmul %0, %3, %cst {dimension_numbers = #tpu.dot_dimension_numbers<[1], [0], [0], [1], [0, 0, 1, 1], [], []>} : vector<16x384xbf16>, vector<384x256xbf16>, vector<16x256xf32> -> vector<16x256xf32>
    %c0_3 = arith.constant 0 : index
    %c0_4 = arith.constant 0 : index
    %5 = vector.load %arg6[%c0_3, %c0_4] : memref<1x256xf32, #tpu.memory_space<vmem>>, vector<1x256xf32>
    %6 = vector.broadcast %5 : vector<1x256xf32> to vector<16x256xf32>
    %7 = arith.addf %4, %6 : vector<16x256xf32>
    %8 = vector.extract_strided_slice %7 {offsets = [0, 0], sizes = [16, 128], strides = [1, 1]} : vector<16x256xf32> to vector<16x128xf32>
    %9 = vector.extract_strided_slice %7 {offsets = [0, 128], sizes = [16, 128], strides = [1, 1]} : vector<16x256xf32> to vector<16x128xf32>
    %cst_5 = arith.constant 0.000000e+00 : f32
    %10 = vector.broadcast %cst_5 : f32 to vector<16x128xf32>
    %11 = arith.subf %10, %9 : vector<16x128xf32>
    %12 = math.exp %11 : vector<16x128xf32>
    %cst_6 = arith.constant 1.000000e+00 : f32
    %13 = vector.broadcast %cst_6 : f32 to vector<16x128xf32>
    %14 = arith.addf %13, %12 : vector<16x128xf32>
    %cst_7 = arith.constant 1.000000e+00 : f32
    %15 = vector.broadcast %cst_7 : f32 to vector<16x128xf32>
    %16 = arith.divf %15, %14 : vector<16x128xf32>
    %17 = arith.mulf %8, %16 : vector<16x128xf32>
    %18 = arith.addf %17, %2 : vector<16x128xf32>
    %cst_8 = arith.constant 0.707106769 : f32
    %19 = vector.broadcast %cst_8 : f32 to vector<16x128xf32>
    %20 = arith.mulf %18, %19 : vector<16x128xf32>
    %21 = arith.truncf %20 : vector<16x128xf32> to vector<16x128xbf16>
    %22 = vector.shape_cast %21 : vector<16x128xbf16> to vector<16x1x128xbf16>
    %c0_9 = arith.constant 0 : index
    %c0_10 = arith.constant 0 : index
    %c0_11 = arith.constant 0 : index
    %23 = vector.load %arg2[%c0_9, %c0_10, %c0_11] : memref<16x128x128xbf16, #tpu.memory_space<vmem>>, vector<16x128x128xbf16>
    "tpu.trace_start"() <{level = 10 : i32, message = "btd,bsd->bts"}> : () -> ()
    %cst_12 = arith.constant dense<0.000000e+00> : vector<16x1x128xf32>
    %24 = tpu.matmul %22, %23, %cst_12 {dimension_numbers = #tpu.dot_dimension_numbers<[2], [2], [1], [1], [0, 0, 0, 1, 1, 1], [0], [0]>} : vector<16x1x128xbf16>, vector<16x128x128xbf16>, vector<16x1x128xf32> -> vector<16x1x128xf32>
    "tpu.trace_stop"() : () -> ()
    %25 = vector.shape_cast %24 : vector<16x1x128xf32> to vector<16x128xf32>
    %c0_13 = arith.constant 0 : index
    %c0_14 = arith.constant 0 : index
    %26 = vector.load %arg4[%c0_13, %c0_14] : memref<16x128xf32, #tpu.memory_space<vmem>>, vector<16x128xf32>
    %cst_15 = arith.constant 5.000000e-01 : f32
    %27 = vector.broadcast %cst_15 : f32 to vector<16x128xf32>
    %28 = arith.cmpf ogt, %26, %27 : vector<16x128xf32>
    %cst_16 = arith.constant -1.000000e+09 : f32
    %29 = vector.broadcast %cst_16 : f32 to vector<16x128xf32>
    %30 = arith.select %28, %29, %25 : vector<16x128xi1>, vector<16x128xf32>
    %cst_17 = arith.constant dense<0xFF800000> : vector<16xf32>
    %31 = vector.multi_reduction <maximumf>, %30, %cst_17 [1] : vector<16x128xf32> to vector<16xf32>
    %32 = vector.shape_cast %31 : vector<16xf32> to vector<16x1xf32>
    %33 = vector.broadcast %32 : vector<16x1xf32> to vector<16x128xf32>
    %34 = arith.subf %30, %33 : vector<16x128xf32>
    %35 = math.exp %34 : vector<16x128xf32>
    %cst_18 = arith.constant dense<0.000000e+00> : vector<16xf32>
    %36 = vector.multi_reduction <add>, %35, %cst_18 [1] : vector<16x128xf32> to vector<16xf32>
    %37 = vector.shape_cast %36 : vector<16xf32> to vector<16x1xf32>
    %38 = tpu.reciprocal %37 {approx = true} : vector<16x1xf32> -> vector<16x1xf32>
    %39 = vector.broadcast %38 : vector<16x1xf32> to vector<16x128xf32>
    %40 = arith.mulf %35, %39 : vector<16x128xf32>
    %41 = arith.truncf %40 : vector<16x128xf32> to vector<16x128xbf16>
    %42 = vector.shape_cast %41 : vector<16x128xbf16> to vector<16x1x128xbf16>
    %c0_19 = arith.constant 0 : index
    %c0_20 = arith.constant 0 : index
    %c0_21 = arith.constant 0 : index
    %43 = vector.load %arg3[%c0_19, %c0_20, %c0_21] : memref<16x128x128xbf16, #tpu.memory_space<vmem>>, vector<16x128x128xbf16>
    "tpu.trace_start"() <{level = 10 : i32, message = "bts,bsd->btd"}> : () -> ()
    %cst_22 = arith.constant dense<0.000000e+00> : vector<16x1x128xf32>
    %44 = tpu.matmul %42, %43, %cst_22 {dimension_numbers = #tpu.dot_dimension_numbers<[2], [1], [1], [2], [0, 0, 0, 1, 1, 2], [0], [0]>} : vector<16x1x128xbf16>, vector<16x128x128xbf16>, vector<16x1x128xf32> -> vector<16x1x128xf32>
    "tpu.trace_stop"() : () -> ()
    %45 = vector.shape_cast %44 : vector<16x1x128xf32> to vector<16x128xf32>
    %46 = arith.addf %20, %45 : vector<16x128xf32>
    %cst_23 = arith.constant 0.707106769 : f32
    %47 = vector.broadcast %cst_23 : f32 to vector<16x128xf32>
    %48 = arith.mulf %46, %47 : vector<16x128xf32>
    %49 = arith.truncf %48 : vector<16x128xf32> to vector<16x128xbf16>
    %c0_24 = arith.constant 0 : index
    %c0_25 = arith.constant 0 : index
    %50 = vector.load %arg7[%c0_24, %c0_25] : memref<16x128xbf16, #tpu.memory_space<vmem>>, vector<16x128xbf16>
    tpu.vector_store %arg7[%c0_24, %c0_25], %49 {strides = array<i32>} : memref<16x128xbf16, #tpu.memory_space<vmem>>, vector<16x128xbf16>,
    return
  }
  func.func @transform_0(%arg0: i32) -> (i32, i32) {
    %c0_i32 = arith.constant 0 : i32
    %c0_i32_0 = arith.constant 0 : i32
    return %arg0, %c0_i32 : i32, i32
  }
  func.func @transform_1(%arg0: i32) -> (i32, i32, i32) {
    %c0_i32 = arith.constant 0 : i32
    %c0_i32_0 = arith.constant 0 : i32
    %c0_i32_1 = arith.constant 0 : i32
    return %arg0, %c0_i32, %c0_i32_0 : i32, i32, i32
  }
  func.func @transform_2(%arg0: i32) -> (i32, i32, i32) {
    %c0_i32 = arith.constant 0 : i32
    %c0_i32_0 = arith.constant 0 : i32
    %c0_i32_1 = arith.constant 0 : i32
    return %arg0, %c0_i32, %c0_i32_0 : i32, i32, i32
  }
  func.func @transform_3(%arg0: i32) -> (i32, i32) {
    %c0_i32 = arith.constant 0 : i32
    %c0_i32_0 = arith.constant 0 : i32
    return %arg0, %c0_i32 : i32, i32
  }
  func.func @transform_4(%arg0: i32) -> (i32, i32) {
    %c0_i32 = arith.constant 0 : i32
    %c0_i32_0 = arith.constant 0 : i32
    %c0_i32_1 = arith.constant 0 : i32
    return %c0_i32, %c0_i32_0 : i32, i32
  }
  func.func @transform_5(%arg0: i32) -> (i32, i32) {
    %c0_i32 = arith.constant 0 : i32
    %c0_i32_0 = arith.constant 0 : i32
    %c0_i32_1 = arith.constant 0 : i32
    return %c0_i32, %c0_i32_0 : i32, i32
  }
  func.func @transform_6(%arg0: i32) -> (i32, i32) {
    %c0_i32 = arith.constant 0 : i32
    %c0_i32_0 = arith.constant 0 : i32
    return %arg0, %c0_i32 : i32, i32
  }
}

</mosaic_0001>

<llo_original>
// kernel: tpu_custom_call.1
$region0: #{tpu_custom_call.1}
  #allocation0 [shape = 'u32[]', space=smem, size = 0x4, offset = 0x4, fixed_abs, tag = 'smem constant byte address 0x4 - core index']
  #allocation1 [shape = 'u32[144,128]{1,0:T(1,128)}', space=vmem, size = 0x12000, scoped, tag = 'internal scratch']
  %s0 = inlined_call_operand.hbm [shape: bf16[16,384], index: 0, kind: input, shape index: {}]
  %s1 = inlined_call_operand.hbm [shape: bf16[16,128,128], index: 1, kind: input, shape index: {}]
  %s2 = inlined_call_operand.hbm [shape: bf16[16,128,128], index: 2, kind: input, shape index: {}]
  %s3 = inlined_call_operand.hbm [shape: f32[16,128], index: 3, kind: input, shape index: {}]
  %s4 = inlined_call_operand.hbm [shape: bf16[384,256], index: 4, kind: input, shape index: {}]
  %s5 = inlined_call_operand.vmem [shape: f32[1,256], index: 5, kind: input, shape index: {}]
  %s6 = inlined_call_operand.hbm [shape: bf16[16,128], index: 6, kind: output, shape index: {}]
  %s7 = sld [smem:[#allocation0]]
  $region54: #{tpu_custom_call.1} parent=0
    _
  %s9 = ssub.s32 1, %s7
  %s10 = scalar_select 0, %s9, %s7
  $region1: #{tpu_custom_call.1} parent=0
    #allocation2 [shape = 'u8[12288]{0}', space=vmem, size = 0x3000, scoped, tag = 'input window, operand 0, single buffered']
    #allocation3 [shape = 's32[1]{0}', space=sflag, size = 0x4, scoped, tag = 'scoped memory for tpu_custom_call.1']
    #allocation4 [shape = 's32[1]{0}', space=sflag, size = 0x4, scoped, tag = 'scoped memory for tpu_custom_call.1']
    #allocation5 [shape = 'u8[524288]{0}', space=vmem, size = 0x80000, scoped, tag = 'input window, operand 1, single buffered']
    #allocation6 [shape = 's32[1]{0}', space=sflag, size = 0x4, scoped, tag = 'scoped memory for tpu_custom_call.1']
    #allocation7 [shape = 'u8[524288]{0}', space=vmem, size = 0x80000, scoped, tag = 'input window, operand 2, single buffered']
    #allocation8 [shape = 'u8[8192]{0}', space=vmem, size = 0x2000, scoped, tag = 'input window, operand 3, single buffered']
    #allocation9 [shape = 's32[1]{0}', space=sflag, size = 0x4, scoped, tag = 'scoped memory for tpu_custom_call.1']
    #allocation10 [shape = 'u8[196608]{0}', space=vmem, size = 0x30000, scoped, tag = 'input window, operand 4, single buffered']
    #allocation11 [shape = 'u8[4096]{0}', space=vmem, size = 0x1000, scoped, tag = 'output window, operand 0, single buffered']
    %11 = vsyncpa [#allocation3], 0
    %12 = vsyncpa [#allocation6], 0
    %13 = vsyncpa [#allocation9], 0
    %14 = vsyncpa [#allocation4], 0
    // Predicated region
    $region2: #{tpu_custom_call.1} parent=1 // pred_check
      _
    $region3: #{tpu_custom_call.1} parent=1 // pred_check_branch
      %16 = sbr.rel (0) target = $region5
    $region4: #{tpu_custom_call.1} parent=1 // pred_region
      %s18 = ssub.s32 384, 384
      %19 = vsyncadd [#allocation3], %s18
      %s20 = sshll.u32 [#allocation2], 4
      %s21 = int_to_ptr.vmem [resolvable:$true] %s20
      %26 = dma.hbm_to_vmem [thread:$0]  %s0, 384, %s21, [#allocation3], 192, 192, 12
    $region5: #{tpu_custom_call.1} parent=1 // pred_fallthru
      _
    // Predicated region
    $region6: #{tpu_custom_call.1} parent=1 // pred_check
      _
    $region7: #{tpu_custom_call.1} parent=1 // pred_check_branch
      %28 = sbr.rel (0) target = $region9
    $region8: #{tpu_custom_call.1} parent=1 // pred_region
      %s30 = ssub.s32 16384, 16384
      %31 = vsyncadd [#allocation6], %s30
      %s32 = sshll.u32 [#allocation5], 4
      %s33 = int_to_ptr.vmem [resolvable:$true] %s32
      %38 = dma.hbm_to_vmem [thread:$0]  %s1, 16384, %s33, [#allocation6], 64, 64, 4
    $region9: #{tpu_custom_call.1} parent=1 // pred_fallthru
      _
    // Predicated region
    $region10: #{tpu_custom_call.1} parent=1 // pred_check
      _
    $region11: #{tpu_custom_call.1} parent=1 // pred_check_branch
      %40 = sbr.rel (0) target = $region13
    $region12: #{tpu_custom_call.1} parent=1 // pred_region
      %s42 = ssub.s32 16384, 16384
      %43 = vsyncadd [#allocation6], %s42
      %s44 = sshll.u32 [#allocation7], 4
      %s45 = int_to_ptr.vmem [resolvable:$true] %s44
      %50 = dma.hbm_to_vmem [thread:$0]  %s2, 16384, %s45, [#allocation6], 64, 64, 4
    $region13: #{tpu_custom_call.1} parent=1 // pred_fallthru
      _
    // Predicated region
    $region14: #{tpu_custom_call.1} parent=1 // pred_check
      _
    $region15: #{tpu_custom_call.1} parent=1 // pred_check_branch
      %52 = sbr.rel (0) target = $region17
    $region16: #{tpu_custom_call.1} parent=1 // pred_region
      %s54 = ssub.s32 256, 256
      %55 = vsyncadd [#allocation9], %s54
      %s56 = sshll.u32 [#allocation8], 4
      %s57 = int_to_ptr.vmem [resolvable:$true] %s56
      %62 = dma.hbm_to_vmem [thread:$0]  %s3, 256, %s57, [#allocation9], 128, 128, 8
    $region17: #{tpu_custom_call.1} parent=1 // pred_fallthru
      _
    // Predicated region
    $region18: #{tpu_custom_call.1} parent=1 // pred_check
      _
    $region19: #{tpu_custom_call.1} parent=1 // pred_check_branch
      %64 = sbr.rel (0) target = $region21
    $region20: #{tpu_custom_call.1} parent=1 // pred_region
      %s66 = ssub.s32 6144, 6144
      %67 = vsyncadd [#allocation9], %s66
      %s68 = sshll.u32 [#allocation10], 4
      %s69 = int_to_ptr.vmem [resolvable:$true] %s68
      %74 = dma.hbm_to_vmem [thread:$0]  %s4, 6144, %s69, [#allocation9], 128, 128, 8
    $region21: #{tpu_custom_call.1} parent=1 // pred_fallthru
      _
    // Predicated region
    $region22: #{tpu_custom_call.1} parent=1 // pred_check
      _
    $region23: #{tpu_custom_call.1} parent=1 // pred_check_branch
      %76 = sbr.rel (0) target = $region25
    $region24: #{tpu_custom_call.1} parent=1 // pred_region
      _
    $region25: #{tpu_custom_call.1} parent=1 // pred_fallthru
      _
    // Predicated region
    $region26: #{tpu_custom_call.1} parent=1 // pred_check
      _
    $region27: #{tpu_custom_call.1} parent=1 // pred_check_branch
      %78 = sbr.rel (0) target = $region29
    $region28: #{tpu_custom_call.1} parent=1 // pred_region
      %79 = dma.done [#allocation3], 384
    $region29: #{tpu_custom_call.1} parent=1 // pred_fallthru
      _
    // Predicated region
    $region30: #{tpu_custom_call.1} parent=1 // pred_check
      _
    $region31: #{tpu_custom_call.1} parent=1 // pred_check_branch
      %81 = sbr.rel (0) target = $region33
    $region32: #{tpu_custom_call.1} parent=1 // pred_region
      %82 = dma.done [#allocation6], 16384
    $region33: #{tpu_custom_call.1} parent=1 // pred_fallthru
      _
    // Predicated region
    $region34: #{tpu_custom_call.1} parent=1 // pred_check
      _
    $region35: #{tpu_custom_call.1} parent=1 // pred_check_branch
      %84 = sbr.rel (0) target = $region37
    $region36: #{tpu_custom_call.1} parent=1 // pred_region
      %85 = dma.done [#allocation6], 16384
    $region37: #{tpu_custom_call.1} parent=1 // pred_fallthru
      _
    // Predicated region
    $region38: #{tpu_custom_call.1} parent=1 // pred_check
      _
    $region39: #{tpu_custom_call.1} parent=1 // pred_check_branch
      %87 = sbr.rel (0) target = $region41
    $region40: #{tpu_custom_call.1} parent=1 // pred_region
      %88 = dma.done [#allocation9], 256
    $region41: #{tpu_custom_call.1} parent=1 // pred_fallthru
      _
    // Predicated region
    $region42: #{tpu_custom_call.1} parent=1 // pred_check
      _
    $region43: #{tpu_custom_call.1} parent=1 // pred_check_branch
      %90 = sbr.rel (0) target = $region45
    $region44: #{tpu_custom_call.1} parent=1 // pred_region
      %91 = dma.done [#allocation9], 6144
    $region45: #{tpu_custom_call.1} parent=1 // pred_fallthru
      _
    %v93 = vld [vmem:[#allocation2] sm:$0xff]
    %v94 = vld [vmem:[#allocation2 + $0x8] sm:$0xf]
    %v95 = vld [vmem:[#allocation2 + $0xc] sm:$0xff]
    %v96 = vld [vmem:[#allocation2 + $0x14] sm:$0xf]
    %v97 = vunpack.c.l.bf16 %v94
    %v98 = vunpack.c.l.bf16 %v96
    %v99 = vld [vmem:[#allocation10] sm:$0xff]
    %v100 = vld [vmem:[#allocation10 + $0x8] sm:$0xff]
    %v101 = vld [vmem:[#allocation10 + $0x10] sm:$0xff]
    %v102 = vld [vmem:[#allocation10 + $0x18] sm:$0xff]
    %v103 = vld [vmem:[#allocation10 + $0x20] sm:$0xff]
    %v104 = vld [vmem:[#allocation10 + $0x28] sm:$0xff]
    %v105 = vld [vmem:[#allocation10 + $0x30] sm:$0xff]
    %v106 = vld [vmem:[#allocation10 + $0x38] sm:$0xff]
    %v107 = vld [vmem:[#allocation10 + $0x40] sm:$0xff]
    %v108 = vld [vmem:[#allocation10 + $0x48] sm:$0xff]
    %v109 = vld [vmem:[#allocation10 + $0x50] sm:$0xff]
    %v110 = vld [vmem:[#allocation10 + $0x58] sm:$0xff]
    %v111 = vld [vmem:[#allocation10 + $0x60] sm:$0xff]
    %v112 = vld [vmem:[#allocation10 + $0x68] sm:$0xff]
    %v113 = vld [vmem:[#allocation10 + $0x70] sm:$0xff]
    %v114 = vld [vmem:[#allocation10 + $0x78] sm:$0xff]
    %v115 = vld [vmem:[#allocation10 + $0x80] sm:$0xff]
    %v116 = vld [vmem:[#allocation10 + $0x88] sm:$0xff]
    %v117 = vld [vmem:[#allocation10 + $0x90] sm:$0xff]
    %v118 = vld [vmem:[#allocation10 + $0x98] sm:$0xff]
    %v119 = vld [vmem:[#allocation10 + $0xa0] sm:$0xff]
    %v120 = vld [vmem:[#allocation10 + $0xa8] sm:$0xff]
    %v121 = vld [vmem:[#allocation10 + $0xb0] sm:$0xff]
    %v122 = vld [vmem:[#allocation10 + $0xb8] sm:$0xff]
    %v123 = vld [vmem:[#allocation10 + $0xc0] sm:$0xff]
    %v124 = vld [vmem:[#allocation10 + $0xc8] sm:$0xff]
    %v125 = vld [vmem:[#allocation10 + $0xd0] sm:$0xff]
    %v126 = vld [vmem:[#allocation10 + $0xd8] sm:$0xff]
    %v127 = vld [vmem:[#allocation10 + $0xe0] sm:$0xff]
    %v128 = vld [vmem:[#allocation10 + $0xe8] sm:$0xff]
    %v129 = vld [vmem:[#allocation10 + $0xf0] sm:$0xff]
    %v130 = vld [vmem:[#allocation10 + $0xf8] sm:$0xff]
    %v131 = vld [vmem:[#allocation10 + $0x100] sm:$0xff]
    %v132 = vld [vmem:[#allocation10 + $0x108] sm:$0xff]
    %v133 = vld [vmem:[#allocation10 + $0x110] sm:$0xff]
    %v134 = vld [vmem:[#allocation10 + $0x118] sm:$0xff]
    %v135 = vld [vmem:[#allocation10 + $0x120] sm:$0xff]
    %v136 = vld [vmem:[#allocation10 + $0x128] sm:$0xff]
    %v137 = vld [vmem:[#allocation10 + $0x130] sm:$0xff]
    %v138 = vld [vmem:[#allocation10 + $0x138] sm:$0xff]
    %v139 = vld [vmem:[#allocation10 + $0x140] sm:$0xff]
    %v140 = vld [vmem:[#allocation10 + $0x148] sm:$0xff]
    %v141 = vld [vmem:[#allocation10 + $0x150] sm:$0xff]
    %v142 = vld [vmem:[#allocation10 + $0x158] sm:$0xff]
    %v143 = vld [vmem:[#allocation10 + $0x160] sm:$0xff]
    %v144 = vld [vmem:[#allocation10 + $0x168] sm:$0xff]
    %v145 = vld [vmem:[#allocation10 + $0x170] sm:$0xff]
    %v146 = vld [vmem:[#allocation10 + $0x178] sm:$0xff]
    %v147 = vld [vmem:[%s5] sm:$0x3]
    %v149 = vlaneseq
    %v150 = vshrl.u32 %v149, 7
    %v151 = vsub.s32 0, %v150
    %v152 = vrot.slane %v147, %v151
    %v153 = vlaneseq
    %v154 = vshrl.u32 %v153, 7
    %v155 = vsub.s32 1, %v154
    %v156 = vrot.slane %v147, %v155
    %v163 = vunpack.c.l.b16 %v93
    %v164 = vunpack.c.h.b16 %v93
    %v165 = vunpack.c.l.b16 %v94
    %v166 = vunpack.c.l.b16 %v95
    %v167 = vunpack.c.h.b16 %v95
    %v168 = vunpack.c.l.b16 %v96
    %v169 = vpack.c.b16 %v166, %v163
    %v170 = vpack.c.b16 %v167, %v164
    %v171 = vpack.c.b16 %v168, %v165
    %v223 = vunpack.c.l.b16 %v99
    %v224 = vunpack.c.h.b16 %v99
    %v225 = vunpack.c.l.b16 %v100
    %v226 = vunpack.c.h.b16 %v100
    %v227 = vunpack.c.l.b16 %v101
    %v228 = vunpack.c.h.b16 %v101
    %v229 = vunpack.c.l.b16 %v102
    %v230 = vunpack.c.h.b16 %v102
    %v231 = vunpack.c.l.b16 %v103
    %v232 = vunpack.c.h.b16 %v103
    %v233 = vunpack.c.l.b16 %v104
    %v234 = vunpack.c.h.b16 %v104
    %v235 = vunpack.c.l.b16 %v105
    %v236 = vunpack.c.h.b16 %v105
    %v237 = vunpack.c.l.b16 %v106
    %v238 = vunpack.c.h.b16 %v106
    %v239 = vunpack.c.l.b16 %v107
    %v240 = vunpack.c.h.b16 %v107
    %v241 = vunpack.c.l.b16 %v108
    %v242 = vunpack.c.h.b16 %v108
    %v243 = vunpack.c.l.b16 %v109
    %v244 = vunpack.c.h.b16 %v109
    %v245 = vunpack.c.l.b16 %v110
    %v246 = vunpack.c.h.b16 %v110
    %v247 = vunpack.c.l.b16 %v111
    %v248 = vunpack.c.h.b16 %v111
    %v249 = vunpack.c.l.b16 %v112
    %v250 = vunpack.c.h.b16 %v112
    %v251 = vunpack.c.l.b16 %v113
    %v252 = vunpack.c.h.b16 %v113
    %v253 = vunpack.c.l.b16 %v114
    %v254 = vunpack.c.h.b16 %v114
    %v255 = vunpack.c.l.b16 %v115
    %v256 = vunpack.c.h.b16 %v115
    %v257 = vunpack.c.l.b16 %v116
    %v258 = vunpack.c.h.b16 %v116
    %v259 = vunpack.c.l.b16 %v117
    %v260 = vunpack.c.h.b16 %v117
    %v261 = vunpack.c.l.b16 %v118
    %v262 = vunpack.c.h.b16 %v118
    %v263 = vunpack.c.l.b16 %v119
    %v264 = vunpack.c.h.b16 %v119
    %v265 = vunpack.c.l.b16 %v120
    %v266 = vunpack.c.h.b16 %v120
    %v267 = vunpack.c.l.b16 %v121
    %v268 = vunpack.c.h.b16 %v121
    %v269 = vunpack.c.l.b16 %v122
    %v270 = vunpack.c.h.b16 %v122
    %v271 = vunpack.c.l.b16 %v123
    %v272 = vunpack.c.h.b16 %v123
    %v273 = vunpack.c.l.b16 %v124
    %v274 = vunpack.c.h.b16 %v124
    %v275 = vunpack.c.l.b16 %v125
    %v276 = vunpack.c.h.b16 %v125
    %v277 = vunpack.c.l.b16 %v126
    %v278 = vunpack.c.h.b16 %v126
    %v279 = vunpack.c.l.b16 %v127
    %v280 = vunpack.c.h.b16 %v127
    %v281 = vunpack.c.l.b16 %v128
    %v282 = vunpack.c.h.b16 %v128
    %v283 = vunpack.c.l.b16 %v129
    %v284 = vunpack.c.h.b16 %v129
    %v285 = vunpack.c.l.b16 %v130
    %v286 = vunpack.c.h.b16 %v130
    %v287 = vunpack.c.l.b16 %v131
    %v288 = vunpack.c.h.b16 %v131
    %v289 = vunpack.c.l.b16 %v132
    %v290 = vunpack.c.h.b16 %v132
    %v291 = vunpack.c.l.b16 %v133
    %v292 = vunpack.c.h.b16 %v133
    %v293 = vunpack.c.l.b16 %v134
    %v294 = vunpack.c.h.b16 %v134
    %v295 = vunpack.c.l.b16 %v135
    %v296 = vunpack.c.h.b16 %v135
    %v297 = vunpack.c.l.b16 %v136
    %v298 = vunpack.c.h.b16 %v136
    %v299 = vunpack.c.l.b16 %v137
    %v300 = vunpack.c.h.b16 %v137
    %v301 = vunpack.c.l.b16 %v138
    %v302 = vunpack.c.h.b16 %v138
    %v303 = vunpack.c.l.b16 %v139
    %v304 = vunpack.c.h.b16 %v139
    %v305 = vunpack.c.l.b16 %v140
    %v306 = vunpack.c.h.b16 %v140
    %v307 = vunpack.c.l.b16 %v141
    %v308 = vunpack.c.h.b16 %v141
    %v309 = vunpack.c.l.b16 %v142
    %v310 = vunpack.c.h.b16 %v142
    %v311 = vunpack.c.l.b16 %v143
    %v312 = vunpack.c.h.b16 %v143
    %v313 = vunpack.c.l.b16 %v144
    %v314 = vunpack.c.h.b16 %v144
    %v315 = vunpack.c.l.b16 %v145
    %v316 = vunpack.c.h.b16 %v145
    %v317 = vunpack.c.l.b16 %v146
    %v318 = vunpack.c.h.b16 %v146
    %v319 = vpack.c.b16 %v225, %v223
    %v320 = vpack.c.b16 %v226, %v224
    %v321 = vpack.c.b16 %v229, %v227
    %v322 = vpack.c.b16 %v230, %v228
    %v323 = vpack.c.b16 %v233, %v231
    %v324 = vpack.c.b16 %v234, %v232
    %v325 = vpack.c.b16 %v237, %v235
    %v326 = vpack.c.b16 %v238, %v236
    %v327 = vpack.c.b16 %v241, %v239
    %v328 = vpack.c.b16 %v242, %v240
    %v329 = vpack.c.b16 %v245, %v243
    %v330 = vpack.c.b16 %v246, %v244
    %v331 = vpack.c.b16 %v249, %v247
    %v332 = vpack.c.b16 %v250, %v248
    %v333 = vpack.c.b16 %v253, %v251
    %v334 = vpack.c.b16 %v254, %v252
    %v335 = vpack.c.b16 %v257, %v255
    %v336 = vpack.c.b16 %v258, %v256
    %v337 = vpack.c.b16 %v261, %v259
    %v338 = vpack.c.b16 %v262, %v260
    %v339 = vpack.c.b16 %v265, %v263
    %v340 = vpack.c.b16 %v266, %v264
    %v341 = vpack.c.b16 %v269, %v267
    %v342 = vpack.c.b16 %v270, %v268
    %v343 = vpack.c.b16 %v273, %v271
    %v344 = vpack.c.b16 %v274, %v272
    %v345 = vpack.c.b16 %v277, %v275
    %v346 = vpack.c.b16 %v278, %v276
    %v347 = vpack.c.b16 %v281, %v279
    %v348 = vpack.c.b16 %v282, %v280
    %v349 = vpack.c.b16 %v285, %v283
    %v350 = vpack.c.b16 %v286, %v284
    %v351 = vpack.c.b16 %v289, %v287
    %v352 = vpack.c.b16 %v290, %v288
    %v353 = vpack.c.b16 %v293, %v291
    %v354 = vpack.c.b16 %v294, %v292
    %v355 = vpack.c.b16 %v297, %v295
    %v356 = vpack.c.b16 %v298, %v296
    %v357 = vpack.c.b16 %v301, %v299
    %v358 = vpack.c.b16 %v302, %v300
    %v359 = vpack.c.b16 %v305, %v303
    %v360 = vpack.c.b16 %v306, %v304
    %v361 = vpack.c.b16 %v309, %v307
    %v362 = vpack.c.b16 %v310, %v308
    %v363 = vpack.c.b16 %v313, %v311
    %v364 = vpack.c.b16 %v314, %v312
    %v365 = vpack.c.b16 %v317, %v315
    %v366 = vpack.c.b16 %v318, %v316
    %415 = vmatprep.subr.bf16.mxu0 %v320
    %416 = vmatpush1.bf16.msra.mxu0 %v319
    %417 = vmatprep.subr.bf16.mxu0 %v322
    %418 = vmatpush1.bf16.msra.mxu0 %v321
    %419 = vmatprep.subr.bf16.mxu0 %v324
    %420 = vmatpush1.bf16.msra.mxu0 %v323
    %421 = vmatprep.subr.bf16.mxu0 %v326
    %422 = vmatpush1.bf16.msra.mxu0 %v325
    %423 = vmatprep.subr.bf16.mxu0 %v328
    %424 = vmatpush1.bf16.msra.mxu0 %v327
    %425 = vmatprep.subr.bf16.mxu0 %v330
    %426 = vmatpush1.bf16.msra.mxu0 %v329
    %427 = vmatprep.subr.bf16.mxu0 %v332
    %428 = vmatpush1.bf16.msra.mxu0 %v331
    %429 = vmatprep.subr.bf16.mxu0 %v334
    %430 = vmatpush1.bf16.msra.mxu0 %v333
    %431 = vmatprep.subr.bf16.mxu0 %v336
    %432 = vmatpush1.bf16.msra.mxu0 %v335
    %433 = vmatprep.subr.bf16.mxu0 %v338
    %434 = vmatpush1.bf16.msra.mxu0 %v337
    %435 = vmatprep.subr.bf16.mxu0 %v340
    %436 = vmatpush1.bf16.msra.mxu0 %v339
    %437 = vmatprep.subr.bf16.mxu0 %v342
    %438 = vmatpush1.bf16.msra.mxu0 %v341
    %439 = vmatprep.subr.bf16.mxu0 %v344
    %440 = vmatpush1.bf16.msra.mxu0 %v343
    %441 = vmatprep.subr.bf16.mxu0 %v346
    %442 = vmatpush1.bf16.msra.mxu0 %v345
    %443 = vmatprep.subr.bf16.mxu0 %v348
    %444 = vmatpush1.bf16.msra.mxu0 %v347
    %445 = vmatprep.subr.bf16.mxu0 %v350
    %446 = vmatpush1.bf16.msra.mxu0 %v349
    %447 = vmatprep.mubr.bf16.mxu0 %v170
    %448 = vmatmul.mubr.bf16.gmra.mrb[0].mxu0 %v169
    %v449 = vpop.f32.mrb[0].mxu0
    %v450 = vadd.f32 %v152, %v449
    %v451 = vpop.f32.mrb[0].mxu0
    %v452 = vadd.f32 %v156, %v451
    %v453 = vpop.f32.mrb[0].mxu0
    %v454 = vadd.f32 %v152, %v453
    %v455 = vpop.f32.mrb[0].mxu0
    %v456 = vadd.f32 %v156, %v455
    %457 = vdwg.mxu0
    %458 = vmatprep.subr.bf16.mxu0 %v352
    %459 = vmatpush1.bf16.msra.mxu0 %v351
    %460 = vmatprep.subr.bf16.mxu0 %v354
    %461 = vmatpush1.bf16.msra.mxu0 %v353
    %462 = vmatprep.subr.bf16.mxu0 %v356
    %463 = vmatpush1.bf16.msra.mxu0 %v355
    %464 = vmatprep.subr.bf16.mxu0 %v358
    %465 = vmatpush1.bf16.msra.mxu0 %v357
    %466 = vmatprep.subr.bf16.mxu0 %v360
    %467 = vmatpush1.bf16.msra.mxu0 %v359
    %468 = vmatprep.subr.bf16.mxu0 %v362
    %469 = vmatpush1.bf16.msra.mxu0 %v361
    %470 = vmatprep.subr.bf16.mxu0 %v364
    %471 = vmatpush1.bf16.msra.mxu0 %v363
    %472 = vmatprep.subr.bf16.mxu0 %v366
    %473 = vmatpush1.bf16.msra.mxu0 %v365
    %474 = vmatprep.subr.bf16.mxu0 0
    %475 = vmatpush1.bf16.msra.mxu0 0
    %476 = vmatprep.subr.bf16.mxu0 0
    %477 = vmatpush1.bf16.msra.mxu0 0
    %478 = vmatprep.subr.bf16.mxu0 0
    %479 = vmatpush1.bf16.msra.mxu0 0
    %480 = vmatprep.subr.bf16.mxu0 0
    %481 = vmatpush1.bf16.msra.mxu0 0
    %482 = vmatprep.subr.bf16.mxu0 0
    %483 = vmatpush1.bf16.msra.mxu0 0
    %484 = vmatprep.subr.bf16.mxu0 0
    %485 = vmatpush1.bf16.msra.mxu0 0
    %486 = vmatprep.subr.bf16.mxu0 0
    %487 = vmatpush1.bf16.msra.mxu0 0
    %488 = vmatprep.subr.bf16.mxu0 0
    %489 = vmatpush1.bf16.msra.mxu0 0
    %490 = vmatprep.mubr.bf16.mxu0 0
    %491 = vmatmul.mubr.bf16.gmra.mrb[0].mxu0 %v171
    %v492 = vpop.f32.mrb[0].mxu0
    %v493 = vadd.f32 %v450, %v492
    %v494 = vpop.f32.mrb[0].mxu0
    %v495 = vadd.f32 %v452, %v494
    %v496 = vpop.f32.mrb[0].mxu0
    %v497 = vadd.f32 %v454, %v496
    %v498 = vpop.f32.mrb[0].mxu0
    %v499 = vadd.f32 %v456, %v498
    %500 = vdwg.mxu0
    %v501 = vsub.f32 0.0, %v495
    %v502 = vsub.f32 0.0, %v499
    %v503 = vmul.f32 %v501, 1.442695
    %v504 = vpow.pop %v503
    %v505 = vmul.f32 %v502, 1.442695
    %v506 = vpow.pop %v505
    %v507 = vadd.f32 %v504, 1.0
    %v508 = vadd.f32 %v506, 1.0
    %v509 = vrcp.pop %v507
    %v510 = vmul.f32 1.0, %v509
    %v511 = vrcp.pop %v508
    %v512 = vmul.f32 1.0, %v511
    %v513 = vmul.f32 %v493, %v510
    %v514 = vmul.f32 %v497, %v512
    %v515 = vadd.f32 %v513, %v97
    %v516 = vadd.f32 %v514, %v98
    %v517 = vmul.f32 %v515, 0.70710677
    %v518 = vmul.f32 %v516, 0.70710677
    %v519 = vpack.c.bf16 %v518, %v517
    %v521 = vcombine.high %v519, %v519
    %v523 = vunpack.c.l.s4 1966171168
    %v524 = vunpack.c.0.s8 %v523
    %v525 = vlaneseq
    %v526 = vshrl.u32 %v525, 7
    %v527 = vsub.s32 %v524, %v526
    %v528 = vrot.slane %v519, %v527
    %v530 = vunpack.c.l.s4 1966171168
    %v531 = vunpack.c.0.s8 %v530
    %v532 = vlaneseq
    %v533 = vshrl.u32 %v532, 7
    %v534 = vsub.s32 %v531, %v533
    %v535 = vrot.slane %v521, %v534
    %v536 = vcombine.high %v528, %v528
    %v537 = vcombine.high %v535, %v535
    %v539 = vunpack.c.l.s4 1966171168
    %v540 = vunpack.c.0.s8 %v539
    %v541 = vlaneseq
    %v542 = vshrl.u32 %v541, 7
    %v543 = vsub.s32 %v540, %v542
    %v544 = vrot.slane %v528, %v543
    %v546 = vunpack.c.l.s4 1966171168
    %v547 = vunpack.c.0.s8 %v546
    %v548 = vlaneseq
    %v549 = vshrl.u32 %v548, 7
    %v550 = vsub.s32 %v547, %v549
    %v551 = vrot.slane %v535, %v550
    %v553 = vunpack.c.l.s4 1966171168
    %v554 = vunpack.c.0.s8 %v553
    %v555 = vlaneseq
    %v556 = vshrl.u32 %v555, 7
    %v557 = vsub.s32 %v554, %v556
    %v558 = vrot.slane %v536, %v557
    %v560 = vunpack.c.l.s4 1966171168
    %v561 = vunpack.c.0.s8 %v560
    %v562 = vlaneseq
    %v563 = vshrl.u32 %v562, 7
    %v564 = vsub.s32 %v561, %v563
    %v565 = vrot.slane %v537, %v564
    %v566 = vcombine.high %v544, %v544
    %v567 = vcombine.high %v551, %v551
    %v568 = vcombine.high %v558, %v558
    %v569 = vcombine.high %v565, %v565
    %v570 = vunpack.i.l.s16 %v544
    %v571 = vunpack.i.h.s16 %v544
    %v572 = vunpack.i.l.s16 %v558
    %v573 = vunpack.i.h.s16 %v558
    %v574 = vunpack.i.l.s16 %v566
    %v575 = vunpack.i.h.s16 %v566
    %v576 = vunpack.i.l.s16 %v568
    %v577 = vunpack.i.h.s16 %v568
    %v578 = vunpack.i.l.s16 %v551
    %v579 = vunpack.i.h.s16 %v551
    %v580 = vunpack.i.l.s16 %v565
    %v581 = vunpack.i.h.s16 %v565
    %v582 = vunpack.i.l.s16 %v567
    %v583 = vunpack.i.h.s16 %v567
    %v584 = vunpack.i.l.s16 %v569
    %v585 = vunpack.i.h.s16 %v569
    %v586 = vld [vmem:[#allocation5] sm:$0xf]
    %v587 = vld [vmem:[#allocation5 + $0x4] sm:$0xf]
    %v588 = vld [vmem:[#allocation5 + $0x8] sm:$0xf]
    %v589 = vld [vmem:[#allocation5 + $0xc] sm:$0xf]
    %v590 = vld [vmem:[#allocation5 + $0x10] sm:$0xf]
    %v591 = vld [vmem:[#allocation5 + $0x14] sm:$0xf]
    %v592 = vld [vmem:[#allocation5 + $0x18] sm:$0xf]
    %v593 = vld [vmem:[#allocation5 + $0x1c] sm:$0xf]
    %v594 = vld [vmem:[#allocation5 + $0x20] sm:$0xf]
    %v595 = vld [vmem:[#allocation5 + $0x24] sm:$0xf]
    %v596 = vld [vmem:[#allocation5 + $0x28] sm:$0xf]
    %v597 = vld [vmem:[#allocation5 + $0x2c] sm:$0xf]
    %v598 = vld [vmem:[#allocation5 + $0x30] sm:$0xf]
    %v599 = vld [vmem:[#allocation5 + $0x34] sm:$0xf]
    %v600 = vld [vmem:[#allocation5 + $0x38] sm:$0xf]
    %v601 = vld [vmem:[#allocation5 + $0x3c] sm:$0xf]
    %v602 = vld [vmem:[#allocation5 + $0x40] sm:$0xf]
    %v603 = vld [vmem:[#allocation5 + $0x44] sm:$0xf]
    %v604 = vld [vmem:[#allocation5 + $0x48] sm:$0xf]
    %v605 = vld [vmem:[#allocation5 + $0x4c] sm:$0xf]
    %v606 = vld [vmem:[#allocation5 + $0x50] sm:$0xf]
    %v607 = vld [vmem:[#allocation5 + $0x54] sm:$0xf]
    %v608 = vld [vmem:[#allocation5 + $0x58] sm:$0xf]
    %v609 = vld [vmem:[#allocation5 + $0x5c] sm:$0xf]
    %v610 = vld [vmem:[#allocation5 + $0x60] sm:$0xf]
    %v611 = vld [vmem:[#allocation5 + $0x64] sm:$0xf]
    %v612 = vld [vmem:[#allocation5 + $0x68] sm:$0xf]
    %v613 = vld [vmem:[#allocation5 + $0x6c] sm:$0xf]
    %v614 = vld [vmem:[#allocation5 + $0x70] sm:$0xf]
    %v615 = vld [vmem:[#allocation5 + $0x74] sm:$0xf]
    %v616 = vld [vmem:[#allocation5 + $0x78] sm:$0xf]
    %v617 = vld [vmem:[#allocation5 + $0x7c] sm:$0xf]
    %v618 = vld [vmem:[#allocation5 + $0x80] sm:$0xf]
    %v619 = vld [vmem:[#allocation5 + $0x84] sm:$0xf]
    %v620 = vld [vmem:[#allocation5 + $0x88] sm:$0xf]
    %v621 = vld [vmem:[#allocation5 + $0x8c] sm:$0xf]
    %v622 = vld [vmem:[#allocation5 + $0x90] sm:$0xf]
    %v623 = vld [vmem:[#allocation5 + $0x94] sm:$0xf]
    %v624 = vld [vmem:[#allocation5 + $0x98] sm:$0xf]
    %v625 = vld [vmem:[#allocation5 + $0x9c] sm:$0xf]
    %v626 = vld [vmem:[#allocation5 + $0xa0] sm:$0xf]
    %v627 = vld [vmem:[#allocation5 + $0xa4] sm:$0xf]
    %v628 = vld [vmem:[#allocation5 + $0xa8] sm:$0xf]
    %v629 = vld [vmem:[#allocation5 + $0xac] sm:$0xf]
    %v630 = vld [vmem:[#allocation5 + $0xb0] sm:$0xf]
    %v631 = vld [vmem:[#allocation5 + $0xb4] sm:$0xf]
    %v632 = vld [vmem:[#allocation5 + $0xb8] sm:$0xf]
    %v633 = vld [vmem:[#allocation5 + $0xbc] sm:$0xf]
    %v634 = vld [vmem:[#allocation5 + $0xc0] sm:$0xf]
    %v635 = vld [vmem:[#allocation5 + $0xc4] sm:$0xf]
    %v636 = vld [vmem:[#allocation5 + $0xc8] sm:$0xf]
    %v637 = vld [vmem:[#allocation5 + $0xcc] sm:$0xf]
    %v638 = vld [vmem:[#allocation5 + $0xd0] sm:$0xf]
    %v639 = vld [vmem:[#allocation5 + $0xd4] sm:$0xf]
    %v640 = vld [vmem:[#allocation5 + $0xd8] sm:$0xf]
    %v641 = vld [vmem:[#allocation5 + $0xdc] sm:$0xf]
    %v642 = vld [vmem:[#allocation5 + $0xe0] sm:$0xf]
    %v643 = vld [vmem:[#allocation5 + $0xe4] sm:$0xf]
    %v644 = vld [vmem:[#allocation5 + $0xe8] sm:$0xf]
    %v645 = vld [vmem:[#allocation5 + $0xec] sm:$0xf]
    %v646 = vld [vmem:[#allocation5 + $0xf0] sm:$0xf]
    %v647 = vld [vmem:[#allocation5 + $0xf4] sm:$0xf]
    %v648 = vld [vmem:[#allocation5 + $0xf8] sm:$0xf]
    %v649 = vld [vmem:[#allocation5 + $0xfc] sm:$0xf]
    %v650 = vld [vmem:[#allocation5 + $0x100] sm:$0xf]
    %v651 = vld [vmem:[#allocation5 + $0x104] sm:$0xf]
    %v652 = vld [vmem:[#allocation5 + $0x108] sm:$0xf]
    %v653 = vld [vmem:[#allocation5 + $0x10c] sm:$0xf]
    %v654 = vld [vmem:[#allocation5 + $0x110] sm:$0xf]
    %v655 = vld [vmem:[#allocation5 + $0x114] sm:$0xf]
    %v656 = vld [vmem:[#allocation5 + $0x118] sm:$0xf]
    %v657 = vld [vmem:[#allocation5 + $0x11c] sm:$0xf]
    %v658 = vld [vmem:[#allocation5 + $0x120] sm:$0xf]
    %v659 = vld [vmem:[#allocation5 + $0x124] sm:$0xf]
    %v660 = vld [vmem:[#allocation5 + $0x128] sm:$0xf]
    %v661 = vld [vmem:[#allocation5 + $0x12c] sm:$0xf]
    %v662 = vld [vmem:[#allocation5 + $0x130] sm:$0xf]
    %v663 = vld [vmem:[#allocation5 + $0x134] sm:$0xf]
    %v664 = vld [vmem:[#allocation5 + $0x138] sm:$0xf]
    %v665 = vld [vmem:[#allocation5 + $0x13c] sm:$0xf]
    %v666 = vld [vmem:[#allocation5 + $0x140] sm:$0xf]
    %v667 = vld [vmem:[#allocation5 + $0x144] sm:$0xf]
    %v668 = vld [vmem:[#allocation5 + $0x148] sm:$0xf]
    %v669 = vld [vmem:[#allocation5 + $0x14c] sm:$0xf]
    %v670 = vld [vmem:[#allocation5 + $0x150] sm:$0xf]
    %v671 = vld [vmem:[#allocation5 + $0x154] sm:$0xf]
    %v672 = vld [vmem:[#allocation5 + $0x158] sm:$0xf]
    %v673 = vld [vmem:[#allocation5 + $0x15c] sm:$0xf]
    %v674 = vld [vmem:[#allocation5 + $0x160] sm:$0xf]
    %v675 = vld [vmem:[#allocation5 + $0x164] sm:$0xf]
    %v676 = vld [vmem:[#allocation5 + $0x168] sm:$0xf]
    %v677 = vld [vmem:[#allocation5 + $0x16c] sm:$0xf]
    %v678 = vld [vmem:[#allocation5 + $0x170] sm:$0xf]
    %v679 = vld [vmem:[#allocation5 + $0x174] sm:$0xf]
    %v680 = vld [vmem:[#allocation5 + $0x178] sm:$0xf]
    %v681 = vld [vmem:[#allocation5 + $0x17c] sm:$0xf]
    %v682 = vld [vmem:[#allocation5 + $0x180] sm:$0xf]
    %v683 = vld [vmem:[#allocation5 + $0x184] sm:$0xf]
    %v684 = vld [vmem:[#allocation5 + $0x188] sm:$0xf]
    %v685 = vld [vmem:[#allocation5 + $0x18c] sm:$0xf]
    %v686 = vld [vmem:[#allocation5 + $0x190] sm:$0xf]
    %v687 = vld [vmem:[#allocation5 + $0x194] sm:$0xf]
    %v688 = vld [vmem:[#allocation5 + $0x198] sm:$0xf]
    %v689 = vld [vmem:[#allocation5 + $0x19c] sm:$0xf]
    %v690 = vld [vmem:[#allocation5 + $0x1a0] sm:$0xf]
    %v691 = vld [vmem:[#allocation5 + $0x1a4] sm:$0xf]
    %v692 = vld [vmem:[#allocation5 + $0x1a8] sm:$0xf]
    %v693 = vld [vmem:[#allocation5 + $0x1ac] sm:$0xf]
    %v694 = vld [vmem:[#allocation5 + $0x1b0] sm:$0xf]
    %v695 = vld [vmem:[#allocation5 + $0x1b4] sm:$0xf]
    %v696 = vld [vmem:[#allocation5 + $0x1b8] sm:$0xf]
    %v697 = vld [vmem:[#allocation5 + $0x1bc] sm:$0xf]
    %v698 = vld [vmem:[#allocation5 + $0x1c0] sm:$0xf]
    %v699 = vld [vmem:[#allocation5 + $0x1c4] sm:$0xf]
    %v700 = vld [vmem:[#allocation5 + $0x1c8] sm:$0xf]
    %v701 = vld [vmem:[#allocation5 + $0x1cc] sm:$0xf]
    %v702 = vld [vmem:[#allocation5 + $0x1d0] sm:$0xf]
    %v703 = vld [vmem:[#allocation5 + $0x1d4] sm:$0xf]
    %v704 = vld [vmem:[#allocation5 + $0x1d8] sm:$0xf]
    %v705 = vld [vmem:[#allocation5 + $0x1dc] sm:$0xf]
    %v706 = vld [vmem:[#allocation5 + $0x1e0] sm:$0xf]
    %v707 = vld [vmem:[#allocation5 + $0x1e4] sm:$0xf]
    %v708 = vld [vmem:[#allocation5 + $0x1e8] sm:$0xf]
    %v709 = vld [vmem:[#allocation5 + $0x1ec] sm:$0xf]
    %v710 = vld [vmem:[#allocation5 + $0x1f0] sm:$0xf]
    %v711 = vld [vmem:[#allocation5 + $0x1f4] sm:$0xf]
    %v712 = vld [vmem:[#allocation5 + $0x1f8] sm:$0xf]
    %v713 = vld [vmem:[#allocation5 + $0x1fc] sm:$0xf]
    %v714 = vld [vmem:[#allocation5 + $0x200] sm:$0xf]
    %v715 = vld [vmem:[#allocation5 + $0x204] sm:$0xf]
    %v716 = vld [vmem:[#allocation5 + $0x208] sm:$0xf]
    %v717 = vld [vmem:[#allocation5 + $0x20c] sm:$0xf]
    %v718 = vld [vmem:[#allocation5 + $0x210] sm:$0xf]
    %v719 = vld [vmem:[#allocation5 + $0x214] sm:$0xf]
    %v720 = vld [vmem:[#allocation5 + $0x218] sm:$0xf]
    %v721 = vld [vmem:[#allocation5 + $0x21c] sm:$0xf]
    %v722 = vld [vmem:[#allocation5 + $0x220] sm:$0xf]
    %v723 = vld [vmem:[#allocation5 + $0x224] sm:$0xf]
    %v724 = vld [vmem:[#allocation5 + $0x228] sm:$0xf]
    %v725 = vld [vmem:[#allocation5 + $0x22c] sm:$0xf]
    %v726 = vld [vmem:[#allocation5 + $0x230] sm:$0xf]
    %v727 = vld [vmem:[#allocation5 + $0x234] sm:$0xf]
    %v728 = vld [vmem:[#allocation5 + $0x238] sm:$0xf]
    %v729 = vld [vmem:[#allocation5 + $0x23c] sm:$0xf]
    %v730 = vld [vmem:[#allocation5 + $0x240] sm:$0xf]
    %v731 = vld [vmem:[#allocation5 + $0x244] sm:$0xf]
    %v732 = vld [vmem:[#allocation5 + $0x248] sm:$0xf]
    %v733 = vld [vmem:[#allocation5 + $0x24c] sm:$0xf]
    %v734 = vld [vmem:[#allocation5 + $0x250] sm:$0xf]
    %v735 = vld [vmem:[#allocation5 + $0x254] sm:$0xf]
    %v736 = vld [vmem:[#allocation5 + $0x258] sm:$0xf]
    %v737 = vld [vmem:[#allocation5 + $0x25c] sm:$0xf]
    %v738 = vld [vmem:[#allocation5 + $0x260] sm:$0xf]
    %v739 = vld [vmem:[#allocation5 + $0x264] sm:$0xf]
    %v740 = vld [vmem:[#allocation5 + $0x268] sm:$0xf]
    %v741 = vld [vmem:[#allocation5 + $0x26c] sm:$0xf]
    %v742 = vld [vmem:[#allocation5 + $0x270] sm:$0xf]
    %v743 = vld [vmem:[#allocation5 + $0x274] sm:$0xf]
    %v744 = vld [vmem:[#allocation5 + $0x278] sm:$0xf]
    %v745 = vld [vmem:[#allocation5 + $0x27c] sm:$0xf]
    %v746 = vld [vmem:[#allocation5 + $0x280] sm:$0xf]
    %v747 = vld [vmem:[#allocation5 + $0x284] sm:$0xf]
    %v748 = vld [vmem:[#allocation5 + $0x288] sm:$0xf]
    %v749 = vld [vmem:[#allocation5 + $0x28c] sm:$0xf]
    %v750 = vld [vmem:[#allocation5 + $0x290] sm:$0xf]
    %v751 = vld [vmem:[#allocation5 + $0x294] sm:$0xf]
    %v752 = vld [vmem:[#allocation5 + $0x298] sm:$0xf]
    %v753 = vld [vmem:[#allocation5 + $0x29c] sm:$0xf]
    %v754 = vld [vmem:[#allocation5 + $0x2a0] sm:$0xf]
    %v755 = vld [vmem:[#allocation5 + $0x2a4] sm:$0xf]
    %v756 = vld [vmem:[#allocation5 + $0x2a8] sm:$0xf]
    %v757 = vld [vmem:[#allocation5 + $0x2ac] sm:$0xf]
    %v758 = vld [vmem:[#allocation5 + $0x2b0] sm:$0xf]
    %v759 = vld [vmem:[#allocation5 + $0x2b4] sm:$0xf]
    %v760 = vld [vmem:[#allocation5 + $0x2b8] sm:$0xf]
    %v761 = vld [vmem:[#allocation5 + $0x2bc] sm:$0xf]
    %v762 = vld [vmem:[#allocation5 + $0x2c0] sm:$0xf]
    %v763 = vld [vmem:[#allocation5 + $0x2c4] sm:$0xf]
    %v764 = vld [vmem:[#allocation5 + $0x2c8] sm:$0xf]
    %v765 = vld [vmem:[#allocation5 + $0x2cc] sm:$0xf]
    %v766 = vld [vmem:[#allocation5 + $0x2d0] sm:$0xf]
    %v767 = vld [vmem:[#allocation5 + $0x2d4] sm:$0xf]
    %v768 = vld [vmem:[#allocation5 + $0x2d8] sm:$0xf]
    %v769 = vld [vmem:[#allocation5 + $0x2dc] sm:$0xf]
    %v770 = vld [vmem:[#allocation5 + $0x2e0] sm:$0xf]
    %v771 = vld [vmem:[#allocation5 + $0x2e4] sm:$0xf]
    %v772 = vld [vmem:[#allocation5 + $0x2e8] sm:$0xf]
    %v773 = vld [vmem:[#allocation5 + $0x2ec] sm:$0xf]
    %v774 = vld [vmem:[#allocation5 + $0x2f0] sm:$0xf]
    %v775 = vld [vmem:[#allocation5 + $0x2f4] sm:$0xf]
    %v776 = vld [vmem:[#allocation5 + $0x2f8] sm:$0xf]
    %v777 = vld [vmem:[#allocation5 + $0x2fc] sm:$0xf]
    %v778 = vld [vmem:[#allocation5 + $0x300] sm:$0xf]
    %v779 = vld [vmem:[#allocation5 + $0x304] sm:$0xf]
    %v780 = vld [vmem:[#allocation5 + $0x308] sm:$0xf]
    %v781 = vld [vmem:[#allocation5 + $0x30c] sm:$0xf]
    %v782 = vld [vmem:[#allocation5 + $0x310] sm:$0xf]
    %v783 = vld [vmem:[#allocation5 + $0x314] sm:$0xf]
    %v784 = vld [vmem:[#allocation5 + $0x318] sm:$0xf]
    %v785 = vld [vmem:[#allocation5 + $0x31c] sm:$0xf]
    %v786 = vld [vmem:[#allocation5 + $0x320] sm:$0xf]
    %v787 = vld [vmem:[#allocation5 + $0x324] sm:$0xf]
    %v788 = vld [vmem:[#allocation5 + $0x328] sm:$0xf]
    %v789 = vld [vmem:[#allocation5 + $0x32c] sm:$0xf]
    %v790 = vld [vmem:[#allocation5 + $0x330] sm:$0xf]
    %v791 = vld [vmem:[#allocation5 + $0x334] sm:$0xf]
    %v792 = vld [vmem:[#allocation5 + $0x338] sm:$0xf]
    %v793 = vld [vmem:[#allocation5 + $0x33c] sm:$0xf]
    %v794 = vld [vmem:[#allocation5 + $0x340] sm:$0xf]
    %v795 = vld [vmem:[#allocation5 + $0x344] sm:$0xf]
    %v796 = vld [vmem:[#allocation5 + $0x348] sm:$0xf]
    %v797 = vld [vmem:[#allocation5 + $0x34c] sm:$0xf]
    %v798 = vld [vmem:[#allocation5 + $0x350] sm:$0xf]
    %v799 = vld [vmem:[#allocation5 + $0x354] sm:$0xf]
    %v800 = vld [vmem:[#allocation5 + $0x358] sm:$0xf]
    %v801 = vld [vmem:[#allocation5 + $0x35c] sm:$0xf]
    %v802 = vld [vmem:[#allocation5 + $0x360] sm:$0xf]
    %v803 = vld [vmem:[#allocation5 + $0x364] sm:$0xf]
    %v804 = vld [vmem:[#allocation5 + $0x368] sm:$0xf]
    %v805 = vld [vmem:[#allocation5 + $0x36c] sm:$0xf]
    %v806 = vld [vmem:[#allocation5 + $0x370] sm:$0xf]
    %v807 = vld [vmem:[#allocation5 + $0x374] sm:$0xf]
    %v808 = vld [vmem:[#allocation5 + $0x378] sm:$0xf]
    %v809 = vld [vmem:[#allocation5 + $0x37c] sm:$0xf]
    %v810 = vld [vmem:[#allocation5 + $0x380] sm:$0xf]
    %v811 = vld [vmem:[#allocation5 + $0x384] sm:$0xf]
    %v812 = vld [vmem:[#allocation5 + $0x388] sm:$0xf]
    %v813 = vld [vmem:[#allocation5 + $0x38c] sm:$0xf]
    %v814 = vld [vmem:[#allocation5 + $0x390] sm:$0xf]
    %v815 = vld [vmem:[#allocation5 + $0x394] sm:$0xf]
    %v816 = vld [vmem:[#allocation5 + $0x398] sm:$0xf]
    %v817 = vld [vmem:[#allocation5 + $0x39c] sm:$0xf]
    %v818 = vld [vmem:[#allocation5 + $0x3a0] sm:$0xf]
    %v819 = vld [vmem:[#allocation5 + $0x3a4] sm:$0xf]
    %v820 = vld [vmem:[#allocation5 + $0x3a8] sm:$0xf]
    %v821 = vld [vmem:[#allocation5 + $0x3ac] sm:$0xf]
    %v822 = vld [vmem:[#allocation5 + $0x3b0] sm:$0xf]
    %v823 = vld [vmem:[#allocation5 + $0x3b4] sm:$0xf]
    %v824 = vld [vmem:[#allocation5 + $0x3b8] sm:$0xf]
    %v825 = vld [vmem:[#allocation5 + $0x3bc] sm:$0xf]
    %v826 = vld [vmem:[#allocation5 + $0x3c0] sm:$0xf]
    %v827 = vld [vmem:[#allocation5 + $0x3c4] sm:$0xf]
    %v828 = vld [vmem:[#allocation5 + $0x3c8] sm:$0xf]
    %v829 = vld [vmem:[#allocation5 + $0x3cc] sm:$0xf]
    %v830 = vld [vmem:[#allocation5 + $0x3d0] sm:$0xf]
    %v831 = vld [vmem:[#allocation5 + $0x3d4] sm:$0xf]
    %v832 = vld [vmem:[#allocation5 + $0x3d8] sm:$0xf]
    %v833 = vld [vmem:[#allocation5 + $0x3dc] sm:$0xf]
    %v834 = vld [vmem:[#allocation5 + $0x3e0] sm:$0xf]
    %v835 = vld [vmem:[#allocation5 + $0x3e4] sm:$0xf]
    %v836 = vld [vmem:[#allocation5 + $0x3e8] sm:$0xf]
    %v837 = vld [vmem:[#allocation5 + $0x3ec] sm:$0xf]
    %v838 = vld [vmem:[#allocation5 + $0x3f0] sm:$0xf]
    %v839 = vld [vmem:[#allocation5 + $0x3f4] sm:$0xf]
    %v840 = vld [vmem:[#allocation5 + $0x3f8] sm:$0xf]
    %v841 = vld [vmem:[#allocation5 + $0x3fc] sm:$0xf]
    %v842 = vpack.i.b16 %v570, %v570
    %v843 = vlaneseq
    %v844 = vshrl.u32 %v843, 7
    %v845 = vsub.s32 0, %v844
    %v846 = vrot.slane %v842, %v845
    %v864 = vunpack.c.l.b16 %v586
    %v865 = vunpack.c.l.b16 %v587
    %v866 = vunpack.c.l.b16 %v588
    %v867 = vunpack.c.l.b16 %v589
    %v868 = vunpack.c.l.b16 %v590
    %v869 = vunpack.c.l.b16 %v591
    %v870 = vunpack.c.l.b16 %v592
    %v871 = vunpack.c.l.b16 %v593
    %v872 = vunpack.c.l.b16 %v594
    %v873 = vunpack.c.l.b16 %v595
    %v874 = vunpack.c.l.b16 %v596
    %v875 = vunpack.c.l.b16 %v597
    %v876 = vunpack.c.l.b16 %v598
    %v877 = vunpack.c.l.b16 %v599
    %v878 = vunpack.c.l.b16 %v600
    %v879 = vunpack.c.l.b16 %v601
    %v880 = vpack.c.b16 %v865, %v864
    %v881 = vpack.c.b16 %v867, %v866
    %v882 = vpack.c.b16 %v869, %v868
    %v883 = vpack.c.b16 %v871, %v870
    %v884 = vpack.c.b16 %v873, %v872
    %v885 = vpack.c.b16 %v875, %v874
    %v886 = vpack.c.b16 %v877, %v876
    %v887 = vpack.c.b16 %v879, %v878
    %896 = vmatprep.subr.bf16.mxu0 0
    %897 = vmatpush1.bf16.xpose.msra.mxu0 %v880
    %898 = vmatprep.subr.bf16.mxu0 0
    %899 = vmatpush1.bf16.xpose.msra.mxu0 %v881
    %900 = vmatprep.subr.bf16.mxu0 0
    %901 = vmatpush1.bf16.xpose.msra.mxu0 %v882
    %902 = vmatprep.subr.bf16.mxu0 0
    %903 = vmatpush1.bf16.xpose.msra.mxu0 %v883
    %904 = vmatprep.subr.bf16.mxu0 0
    %905 = vmatpush1.bf16.xpose.msra.mxu0 %v884
    %906 = vmatprep.subr.bf16.mxu0 0
    %907 = vmatpush1.bf16.xpose.msra.mxu0 %v885
    %908 = vmatprep.subr.bf16.mxu0 0
    %909 = vmatpush1.bf16.xpose.msra.mxu0 %v886
    %910 = vmatprep.subr.bf16.mxu0 0
    %911 = vmatpush1.bf16.xpose.msra.mxu0 %v887
    %912 = vmatprep.subr.bf16.mxu0 0
    %913 = vmatpush1.bf16.xpose.msra.mxu0 0
    %914 = vmatprep.subr.bf16.mxu0 0
    %915 = vmatpush1.bf16.xpose.msra.mxu0 0
    %916 = vmatprep.subr.bf16.mxu0 0
    %917 = vmatpush1.bf16.xpose.msra.mxu0 0
    %918 = vmatprep.subr.bf16.mxu0 0
    %919 = vmatpush1.bf16.xpose.msra.mxu0 0
    %920 = vmatprep.subr.bf16.mxu0 0
    %921 = vmatpush1.bf16.xpose.msra.mxu0 0
    %922 = vmatprep.subr.bf16.mxu0 0
    %923 = vmatpush1.bf16.xpose.msra.mxu0 0
    %924 = vmatprep.subr.bf16.mxu0 0
    %925 = vmatpush1.bf16.xpose.msra.mxu0 0
    %926 = vmatprep.subr.bf16.mxu0 0
    %927 = vmatpush1.bf16.xpose.msra.mxu0 0
    %928 = vmatprep.mubr.bf16.mxu0 0
    %929 = vmatmul.mubr.bf16.gmra.mrb[0].mxu0 %v846
    %v930 = vpop.f32.mrb[0].mxu0
    %v931 = vadd.f32 0.0, %v930
    %v932 = vpop.f32.mrb[0].mxu0
    %v933 = vpop.f32.mrb[0].mxu0
    %v934 = vpop.f32.mrb[0].mxu0
    %935 = vdwg.mxu0
    %v936 = vpack.i.b16 %v571, %v571
    %v937 = vlaneseq
    %v938 = vshrl.u32 %v937, 7
    %v939 = vsub.s32 0, %v938
    %v940 = vrot.slane %v936, %v939
    %v958 = vunpack.c.l.b16 %v602
    %v959 = vunpack.c.l.b16 %v603
    %v960 = vunpack.c.l.b16 %v604
    %v961 = vunpack.c.l.b16 %v605
    %v962 = vunpack.c.l.b16 %v606
    %v963 = vunpack.c.l.b16 %v607
    %v964 = vunpack.c.l.b16 %v608
    %v965 = vunpack.c.l.b16 %v609
    %v966 = vunpack.c.l.b16 %v610
    %v967 = vunpack.c.l.b16 %v611
    %v968 = vunpack.c.l.b16 %v612
    %v969 = vunpack.c.l.b16 %v613
    %v970 = vunpack.c.l.b16 %v614
    %v971 = vunpack.c.l.b16 %v615
    %v972 = vunpack.c.l.b16 %v616
    %v973 = vunpack.c.l.b16 %v617
    %v974 = vpack.c.b16 %v959, %v958
    %v975 = vpack.c.b16 %v961, %v960
    %v976 = vpack.c.b16 %v963, %v962
    %v977 = vpack.c.b16 %v965, %v964
    %v978 = vpack.c.b16 %v967, %v966
    %v979 = vpack.c.b16 %v969, %v968
    %v980 = vpack.c.b16 %v971, %v970
    %v981 = vpack.c.b16 %v973, %v972
    %990 = vmatprep.subr.bf16.mxu0 0
    %991 = vmatpush1.bf16.xpose.msra.mxu0 %v974
    %992 = vmatprep.subr.bf16.mxu0 0
    %993 = vmatpush1.bf16.xpose.msra.mxu0 %v975
    %994 = vmatprep.subr.bf16.mxu0 0
    %995 = vmatpush1.bf16.xpose.msra.mxu0 %v976
    %996 = vmatprep.subr.bf16.mxu0 0
    %997 = vmatpush1.bf16.xpose.msra.mxu0 %v977
    %998 = vmatprep.subr.bf16.mxu0 0
    %999 = vmatpush1.bf16.xpose.msra.mxu0 %v978
    %1000 = vmatprep.subr.bf16.mxu0 0
    %1001 = vmatpush1.bf16.xpose.msra.mxu0 %v979
    %1002 = vmatprep.subr.bf16.mxu0 0
    %1003 = vmatpush1.bf16.xpose.msra.mxu0 %v980
    %1004 = vmatprep.subr.bf16.mxu0 0
    %1005 = vmatpush1.bf16.xpose.msra.mxu0 %v981
    %1006 = vmatprep.subr.bf16.mxu0 0
    %1007 = vmatpush1.bf16.xpose.msra.mxu0 0
    %1008 = vmatprep.subr.bf16.mxu0 0
    %1009 = vmatpush1.bf16.xpose.msra.mxu0 0
    %1010 = vmatprep.subr.bf16.mxu0 0
    %1011 = vmatpush1.bf16.xpose.msra.mxu0 0
    %1012 = vmatprep.subr.bf16.mxu0 0
    %1013 = vmatpush1.bf16.xpose.msra.mxu0 0
    %1014 = vmatprep.subr.bf16.mxu0 0
    %1015 = vmatpush1.bf16.xpose.msra.mxu0 0
    %1016 = vmatprep.subr.bf16.mxu0 0
    %1017 = vmatpush1.bf16.xpose.msra.mxu0 0
    %1018 = vmatprep.subr.bf16.mxu0 0
    %1019 = vmatpush1.bf16.xpose.msra.mxu0 0
    %1020 = vmatprep.subr.bf16.mxu0 0
    %1021 = vmatpush1.bf16.xpose.msra.mxu0 0
    %1022 = vmatprep.mubr.bf16.mxu0 0
    %1023 = vmatmul.mubr.bf16.gmra.mrb[0].mxu0 %v940
    %v1024 = vpop.f32.mrb[0].mxu0
    %v1025 = vadd.f32 0.0, %v1024
    %v1026 = vpop.f32.mrb[0].mxu0
    %v1027 = vpop.f32.mrb[0].mxu0
    %v1028 = vpop.f32.mrb[0].mxu0
    %1029 = vdwg.mxu0
    %v1030 = vpack.i.b16 %v572, %v572
    %v1031 = vlaneseq
    %v1032 = vshrl.u32 %v1031, 7
    %v1033 = vsub.s32 0, %v1032
    %v1034 = vrot.slane %v1030, %v1033
    %v1052 = vunpack.c.l.b16 %v618
    %v1053 = vunpack.c.l.b16 %v619
    %v1054 = vunpack.c.l.b16 %v620
    %v1055 = vunpack.c.l.b16 %v621
    %v1056 = vunpack.c.l.b16 %v622
    %v1057 = vunpack.c.l.b16 %v623
    %v1058 = vunpack.c.l.b16 %v624
    %v1059 = vunpack.c.l.b16 %v625
    %v1060 = vunpack.c.l.b16 %v626
    %v1061 = vunpack.c.l.b16 %v627
    %v1062 = vunpack.c.l.b16 %v628
    %v1063 = vunpack.c.l.b16 %v629
    %v1064 = vunpack.c.l.b16 %v630
    %v1065 = vunpack.c.l.b16 %v631
    %v1066 = vunpack.c.l.b16 %v632
    %v1067 = vunpack.c.l.b16 %v633
    %v1068 = vpack.c.b16 %v1053, %v1052
    %v1069 = vpack.c.b16 %v1055, %v1054
    %v1070 = vpack.c.b16 %v1057, %v1056
    %v1071 = vpack.c.b16 %v1059, %v1058
    %v1072 = vpack.c.b16 %v1061, %v1060
    %v1073 = vpack.c.b16 %v1063, %v1062
    %v1074 = vpack.c.b16 %v1065, %v1064
    %v1075 = vpack.c.b16 %v1067, %v1066
    %1084 = vmatprep.subr.bf16.mxu0 0
    %1085 = vmatpush1.bf16.xpose.msra.mxu0 %v1068
    %1086 = vmatprep.subr.bf16.mxu0 0
    %1087 = vmatpush1.bf16.xpose.msra.mxu0 %v1069
    %1088 = vmatprep.subr.bf16.mxu0 0
    %1089 = vmatpush1.bf16.xpose.msra.mxu0 %v1070
    %1090 = vmatprep.subr.bf16.mxu0 0
    %1091 = vmatpush1.bf16.xpose.msra.mxu0 %v1071
    %1092 = vmatprep.subr.bf16.mxu0 0
    %1093 = vmatpush1.bf16.xpose.msra.mxu0 %v1072
    %1094 = vmatprep.subr.bf16.mxu0 0
    %1095 = vmatpush1.bf16.xpose.msra.mxu0 %v1073
    %1096 = vmatprep.subr.bf16.mxu0 0
    %1097 = vmatpush1.bf16.xpose.msra.mxu0 %v1074
    %1098 = vmatprep.subr.bf16.mxu0 0
    %1099 = vmatpush1.bf16.xpose.msra.mxu0 %v1075
    %1100 = vmatprep.subr.bf16.mxu0 0
    %1101 = vmatpush1.bf16.xpose.msra.mxu0 0
    %1102 = vmatprep.subr.bf16.mxu0 0
    %1103 = vmatpush1.bf16.xpose.msra.mxu0 0
    %1104 = vmatprep.subr.bf16.mxu0 0
    %1105 = vmatpush1.bf16.xpose.msra.mxu0 0
    %1106 = vmatprep.subr.bf16.mxu0 0
    %1107 = vmatpush1.bf16.xpose.msra.mxu0 0
    %1108 = vmatprep.subr.bf16.mxu0 0
    %1109 = vmatpush1.bf16.xpose.msra.mxu0 0
    %1110 = vmatprep.subr.bf16.mxu0 0
    %1111 = vmatpush1.bf16.xpose.msra.mxu0 0
    %1112 = vmatprep.subr.bf16.mxu0 0
    %1113 = vmatpush1.bf16.xpose.msra.mxu0 0
    %1114 = vmatprep.subr.bf16.mxu0 0
    %1115 = vmatpush1.bf16.xpose.msra.mxu0 0
    %1116 = vmatprep.mubr.bf16.mxu0 0
    %1117 = vmatmul.mubr.bf16.gmra.mrb[0].mxu0 %v1034
    %v1118 = vpop.f32.mrb[0].mxu0
    %v1119 = vadd.f32 0.0, %v1118
    %v1120 = vpop.f32.mrb[0].mxu0
    %v1121 = vpop.f32.mrb[0].mxu0
    %v1122 = vpop.f32.mrb[0].mxu0
    %1123 = vdwg.mxu0
    %v1124 = vpack.i.b16 %v573, %v573
    %v1125 = vlaneseq
    %v1126 = vshrl.u32 %v1125, 7
    %v1127 = vsub.s32 0, %v1126
    %v1128 = vrot.slane %v1124, %v1127
    %v1146 = vunpack.c.l.b16 %v634
    %v1147 = vunpack.c.l.b16 %v635
    %v1148 = vunpack.c.l.b16 %v636
    %v1149 = vunpack.c.l.b16 %v637
    %v1150 = vunpack.c.l.b16 %v638
    %v1151 = vunpack.c.l.b16 %v639
    %v1152 = vunpack.c.l.b16 %v640
    %v1153 = vunpack.c.l.b16 %v641
    %v1154 = vunpack.c.l.b16 %v642
    %v1155 = vunpack.c.l.b16 %v643
    %v1156 = vunpack.c.l.b16 %v644
    %v1157 = vunpack.c.l.b16 %v645
    %v1158 = vunpack.c.l.b16 %v646
    %v1159 = vunpack.c.l.b16 %v647
    %v1160 = vunpack.c.l.b16 %v648
    %v1161 = vunpack.c.l.b16 %v649
    %v1162 = vpack.c.b16 %v1147, %v1146
    %v1163 = vpack.c.b16 %v1149, %v1148
    %v1164 = vpack.c.b16 %v1151, %v1150
    %v1165 = vpack.c.b16 %v1153, %v1152
    %v1166 = vpack.c.b16 %v1155, %v1154
    %v1167 = vpack.c.b16 %v1157, %v1156
    %v1168 = vpack.c.b16 %v1159, %v1158
    %v1169 = vpack.c.b16 %v1161, %v1160
    %1178 = vmatprep.subr.bf16.mxu0 0
    %1179 = vmatpush1.bf16.xpose.msra.mxu0 %v1162
    %1180 = vmatprep.subr.bf16.mxu0 0
    %1181 = vmatpush1.bf16.xpose.msra.mxu0 %v1163
    %1182 = vmatprep.subr.bf16.mxu0 0
    %1183 = vmatpush1.bf16.xpose.msra.mxu0 %v1164
    %1184 = vmatprep.subr.bf16.mxu0 0
    %1185 = vmatpush1.bf16.xpose.msra.mxu0 %v1165
    %1186 = vmatprep.subr.bf16.mxu0 0
    %1187 = vmatpush1.bf16.xpose.msra.mxu0 %v1166
    %1188 = vmatprep.subr.bf16.mxu0 0
    %1189 = vmatpush1.bf16.xpose.msra.mxu0 %v1167
    %1190 = vmatprep.subr.bf16.mxu0 0
    %1191 = vmatpush1.bf16.xpose.msra.mxu0 %v1168
    %1192 = vmatprep.subr.bf16.mxu0 0
    %1193 = vmatpush1.bf16.xpose.msra.mxu0 %v1169
    %1194 = vmatprep.subr.bf16.mxu0 0
    %1195 = vmatpush1.bf16.xpose.msra.mxu0 0
    %1196 = vmatprep.subr.bf16.mxu0 0
    %1197 = vmatpush1.bf16.xpose.msra.mxu0 0
    %1198 = vmatprep.subr.bf16.mxu0 0
    %1199 = vmatpush1.bf16.xpose.msra.mxu0 0
    %1200 = vmatprep.subr.bf16.mxu0 0
    %1201 = vmatpush1.bf16.xpose.msra.mxu0 0
    %1202 = vmatprep.subr.bf16.mxu0 0
    %1203 = vmatpush1.bf16.xpose.msra.mxu0 0
    %1204 = vmatprep.subr.bf16.mxu0 0
    %1205 = vmatpush1.bf16.xpose.msra.mxu0 0
    %1206 = vmatprep.subr.bf16.mxu0 0
    %1207 = vmatpush1.bf16.xpose.msra.mxu0 0
    %1208 = vmatprep.subr.bf16.mxu0 0
    %1209 = vmatpush1.bf16.xpose.msra.mxu0 0
    %1210 = vmatprep.mubr.bf16.mxu0 0
    %1211 = vmatmul.mubr.bf16.gmra.mrb[0].mxu0 %v1128
    %v1212 = vpop.f32.mrb[0].mxu0
    %v1213 = vadd.f32 0.0, %v1212
    %v1214 = vpop.f32.mrb[0].mxu0
    %v1215 = vpop.f32.mrb[0].mxu0
    %v1216 = vpop.f32.mrb[0].mxu0
    %1217 = vdwg.mxu0
    %v1218 = vpack.i.b16 %v574, %v574
    %v1219 = vlaneseq
    %v1220 = vshrl.u32 %v1219, 7
    %v1221 = vsub.s32 0, %v1220
    %v1222 = vrot.slane %v1218, %v1221
    %v1240 = vunpack.c.l.b16 %v650
    %v1241 = vunpack.c.l.b16 %v651
    %v1242 = vunpack.c.l.b16 %v652
    %v1243 = vunpack.c.l.b16 %v653
    %v1244 = vunpack.c.l.b16 %v654
    %v1245 = vunpack.c.l.b16 %v655
    %v1246 = vunpack.c.l.b16 %v656
    %v1247 = vunpack.c.l.b16 %v657
    %v1248 = vunpack.c.l.b16 %v658
    %v1249 = vunpack.c.l.b16 %v659
    %v1250 = vunpack.c.l.b16 %v660
    %v1251 = vunpack.c.l.b16 %v661
    %v1252 = vunpack.c.l.b16 %v662
    %v1253 = vunpack.c.l.b16 %v663
    %v1254 = vunpack.c.l.b16 %v664
    %v1255 = vunpack.c.l.b16 %v665
    %v1256 = vpack.c.b16 %v1241, %v1240
    %v1257 = vpack.c.b16 %v1243, %v1242
    %v1258 = vpack.c.b16 %v1245, %v1244
    %v1259 = vpack.c.b16 %v1247, %v1246
    %v1260 = vpack.c.b16 %v1249, %v1248
    %v1261 = vpack.c.b16 %v1251, %v1250
    %v1262 = vpack.c.b16 %v1253, %v1252
    %v1263 = vpack.c.b16 %v1255, %v1254
    %1272 = vmatprep.subr.bf16.mxu0 0
    %1273 = vmatpush1.bf16.xpose.msra.mxu0 %v1256
    %1274 = vmatprep.subr.bf16.mxu0 0
    %1275 = vmatpush1.bf16.xpose.msra.mxu0 %v1257
    %1276 = vmatprep.subr.bf16.mxu0 0
    %1277 = vmatpush1.bf16.xpose.msra.mxu0 %v1258
    %1278 = vmatprep.subr.bf16.mxu0 0
    %1279 = vmatpush1.bf16.xpose.msra.mxu0 %v1259
    %1280 = vmatprep.subr.bf16.mxu0 0
    %1281 = vmatpush1.bf16.xpose.msra.mxu0 %v1260
    %1282 = vmatprep.subr.bf16.mxu0 0
    %1283 = vmatpush1.bf16.xpose.msra.mxu0 %v1261
    %1284 = vmatprep.subr.bf16.mxu0 0
    %1285 = vmatpush1.bf16.xpose.msra.mxu0 %v1262
    %1286 = vmatprep.subr.bf16.mxu0 0
    %1287 = vmatpush1.bf16.xpose.msra.mxu0 %v1263
    %1288 = vmatprep.subr.bf16.mxu0 0
    %1289 = vmatpush1.bf16.xpose.msra.mxu0 0
    %1290 = vmatprep.subr.bf16.mxu0 0
    %1291 = vmatpush1.bf16.xpose.msra.mxu0 0
    %1292 = vmatprep.subr.bf16.mxu0 0
    %1293 = vmatpush1.bf16.xpose.msra.mxu0 0
    %1294 = vmatprep.subr.bf16.mxu0 0
    %1295 = vmatpush1.bf16.xpose.msra.mxu0 0
    %1296 = vmatprep.subr.bf16.mxu0 0
    %1297 = vmatpush1.bf16.xpose.msra.mxu0 0
    %1298 = vmatprep.subr.bf16.mxu0 0
    %1299 = vmatpush1.bf16.xpose.msra.mxu0 0
    %1300 = vmatprep.subr.bf16.mxu0 0
    %1301 = vmatpush1.bf16.xpose.msra.mxu0 0
    %1302 = vmatprep.subr.bf16.mxu0 0
    %1303 = vmatpush1.bf16.xpose.msra.mxu0 0
    %1304 = vmatprep.mubr.bf16.mxu0 0
    %1305 = vmatmul.mubr.bf16.gmra.mrb[0].mxu0 %v1222
    %v1306 = vpop.f32.mrb[0].mxu0
    %v1307 = vadd.f32 0.0, %v1306
    %v1308 = vpop.f32.mrb[0].mxu0
    %v1309 = vpop.f32.mrb[0].mxu0
    %v1310 = vpop.f32.mrb[0].mxu0
    %1311 = vdwg.mxu0
    %v1312 = vpack.i.b16 %v575, %v575
    %v1313 = vlaneseq
    %v1314 = vshrl.u32 %v1313, 7
    %v1315 = vsub.s32 0, %v1314
    %v1316 = vrot.slane %v1312, %v1315
    %v1334 = vunpack.c.l.b16 %v666
    %v1335 = vunpack.c.l.b16 %v667
    %v1336 = vunpack.c.l.b16 %v668
    %v1337 = vunpack.c.l.b16 %v669
    %v1338 = vunpack.c.l.b16 %v670
    %v1339 = vunpack.c.l.b16 %v671
    %v1340 = vunpack.c.l.b16 %v672
    %v1341 = vunpack.c.l.b16 %v673
    %v1342 = vunpack.c.l.b16 %v674
    %v1343 = vunpack.c.l.b16 %v675
    %v1344 = vunpack.c.l.b16 %v676
    %v1345 = vunpack.c.l.b16 %v677
    %v1346 = vunpack.c.l.b16 %v678
    %v1347 = vunpack.c.l.b16 %v679
    %v1348 = vunpack.c.l.b16 %v680
    %v1349 = vunpack.c.l.b16 %v681
    %v1350 = vpack.c.b16 %v1335, %v1334
    %v1351 = vpack.c.b16 %v1337, %v1336
    %v1352 = vpack.c.b16 %v1339, %v1338
    %v1353 = vpack.c.b16 %v1341, %v1340
    %v1354 = vpack.c.b16 %v1343, %v1342
    %v1355 = vpack.c.b16 %v1345, %v1344
    %v1356 = vpack.c.b16 %v1347, %v1346
    %v1357 = vpack.c.b16 %v1349, %v1348
    %1366 = vmatprep.subr.bf16.mxu0 0
    %1367 = vmatpush1.bf16.xpose.msra.mxu0 %v1350
    %1368 = vmatprep.subr.bf16.mxu0 0
    %1369 = vmatpush1.bf16.xpose.msra.mxu0 %v1351
    %1370 = vmatprep.subr.bf16.mxu0 0
    %1371 = vmatpush1.bf16.xpose.msra.mxu0 %v1352
    %1372 = vmatprep.subr.bf16.mxu0 0
    %1373 = vmatpush1.bf16.xpose.msra.mxu0 %v1353
    %1374 = vmatprep.subr.bf16.mxu0 0
    %1375 = vmatpush1.bf16.xpose.msra.mxu0 %v1354
    %1376 = vmatprep.subr.bf16.mxu0 0
    %1377 = vmatpush1.bf16.xpose.msra.mxu0 %v1355
    %1378 = vmatprep.subr.bf16.mxu0 0
    %1379 = vmatpush1.bf16.xpose.msra.mxu0 %v1356
    %1380 = vmatprep.subr.bf16.mxu0 0
    %1381 = vmatpush1.bf16.xpose.msra.mxu0 %v1357
    %1382 = vmatprep.subr.bf16.mxu0 0
    %1383 = vmatpush1.bf16.xpose.msra.mxu0 0
    %1384 = vmatprep.subr.bf16.mxu0 0
    %1385 = vmatpush1.bf16.xpose.msra.mxu0 0
    %1386 = vmatprep.subr.bf16.mxu0 0
    %1387 = vmatpush1.bf16.xpose.msra.mxu0 0
    %1388 = vmatprep.subr.bf16.mxu0 0
    %1389 = vmatpush1.bf16.xpose.msra.mxu0 0
    %1390 = vmatprep.subr.bf16.mxu0 0
    %1391 = vmatpush1.bf16.xpose.msra.mxu0 0
    %1392 = vmatprep.subr.bf16.mxu0 0
    %1393 = vmatpush1.bf16.xpose.msra.mxu0 0
    %1394 = vmatprep.subr.bf16.mxu0 0
    %1395 = vmatpush1.bf16.xpose.msra.mxu0 0
    %1396 = vmatprep.subr.bf16.mxu0 0
    %1397 = vmatpush1.bf16.xpose.msra.mxu0 0
    %1398 = vmatprep.mubr.bf16.mxu0 0
    %1399 = vmatmul.mubr.bf16.gmra.mrb[0].mxu0 %v1316
    %v1400 = vpop.f32.mrb[0].mxu0
    %v1401 = vadd.f32 0.0, %v1400
    %v1402 = vpop.f32.mrb[0].mxu0
    %v1403 = vpop.f32.mrb[0].mxu0
    %v1404 = vpop.f32.mrb[0].mxu0
    %1405 = vdwg.mxu0
    %v1406 = vpack.i.b16 %v576, %v576
    %v1407 = vlaneseq
    %v1408 = vshrl.u32 %v1407, 7
    %v1409 = vsub.s32 0, %v1408
    %v1410 = vrot.slane %v1406, %v1409
    %v1428 = vunpack.c.l.b16 %v682
    %v1429 = vunpack.c.l.b16 %v683
    %v1430 = vunpack.c.l.b16 %v684
    %v1431 = vunpack.c.l.b16 %v685
    %v1432 = vunpack.c.l.b16 %v686
    %v1433 = vunpack.c.l.b16 %v687
    %v1434 = vunpack.c.l.b16 %v688
    %v1435 = vunpack.c.l.b16 %v689
    %v1436 = vunpack.c.l.b16 %v690
    %v1437 = vunpack.c.l.b16 %v691
    %v1438 = vunpack.c.l.b16 %v692
    %v1439 = vunpack.c.l.b16 %v693
    %v1440 = vunpack.c.l.b16 %v694
    %v1441 = vunpack.c.l.b16 %v695
    %v1442 = vunpack.c.l.b16 %v696
    %v1443 = vunpack.c.l.b16 %v697
    %v1444 = vpack.c.b16 %v1429, %v1428
    %v1445 = vpack.c.b16 %v1431, %v1430
    %v1446 = vpack.c.b16 %v1433, %v1432
    %v1447 = vpack.c.b16 %v1435, %v1434
    %v1448 = vpack.c.b16 %v1437, %v1436
    %v1449 = vpack.c.b16 %v1439, %v1438
    %v1450 = vpack.c.b16 %v1441, %v1440
    %v1451 = vpack.c.b16 %v1443, %v1442
    %1460 = vmatprep.subr.bf16.mxu0 0
    %1461 = vmatpush1.bf16.xpose.msra.mxu0 %v1444
    %1462 = vmatprep.subr.bf16.mxu0 0
    %1463 = vmatpush1.bf16.xpose.msra.mxu0 %v1445
    %1464 = vmatprep.subr.bf16.mxu0 0
    %1465 = vmatpush1.bf16.xpose.msra.mxu0 %v1446
    %1466 = vmatprep.subr.bf16.mxu0 0
    %1467 = vmatpush1.bf16.xpose.msra.mxu0 %v1447
    %1468 = vmatprep.subr.bf16.mxu0 0
    %1469 = vmatpush1.bf16.xpose.msra.mxu0 %v1448
    %1470 = vmatprep.subr.bf16.mxu0 0
    %1471 = vmatpush1.bf16.xpose.msra.mxu0 %v1449
    %1472 = vmatprep.subr.bf16.mxu0 0
    %1473 = vmatpush1.bf16.xpose.msra.mxu0 %v1450
    %1474 = vmatprep.subr.bf16.mxu0 0
    %1475 = vmatpush1.bf16.xpose.msra.mxu0 %v1451
    %1476 = vmatprep.subr.bf16.mxu0 0
    %1477 = vmatpush1.bf16.xpose.msra.mxu0 0
    %1478 = vmatprep.subr.bf16.mxu0 0
    %1479 = vmatpush1.bf16.xpose.msra.mxu0 0
    %1480 = vmatprep.subr.bf16.mxu0 0
    %1481 = vmatpush1.bf16.xpose.msra.mxu0 0
    %1482 = vmatprep.subr.bf16.mxu0 0
    %1483 = vmatpush1.bf16.xpose.msra.mxu0 0
    %1484 = vmatprep.subr.bf16.mxu0 0
    %1485 = vmatpush1.bf16.xpose.msra.mxu0 0
    %1486 = vmatprep.subr.bf16.mxu0 0
    %1487 = vmatpush1.bf16.xpose.msra.mxu0 0
    %1488 = vmatprep.subr.bf16.mxu0 0
    %1489 = vmatpush1.bf16.xpose.msra.mxu0 0
    %1490 = vmatprep.subr.bf16.mxu0 0
    %1491 = vmatpush1.bf16.xpose.msra.mxu0 0
    %1492 = vmatprep.mubr.bf16.mxu0 0
    %1493 = vmatmul.mubr.bf16.gmra.mrb[0].mxu0 %v1410
    %v1494 = vpop.f32.mrb[0].mxu0
    %v1495 = vadd.f32 0.0, %v1494
    %v1496 = vpop.f32.mrb[0].mxu0
    %v1497 = vpop.f32.mrb[0].mxu0
    %v1498 = vpop.f32.mrb[0].mxu0
    %1499 = vdwg.mxu0
    %v1500 = vpack.i.b16 %v577, %v577
    %v1501 = vlaneseq
    %v1502 = vshrl.u32 %v1501, 7
    %v1503 = vsub.s32 0, %v1502
    %v1504 = vrot.slane %v1500, %v1503
    %v1522 = vunpack.c.l.b16 %v698
    %v1523 = vunpack.c.l.b16 %v699
    %v1524 = vunpack.c.l.b16 %v700
    %v1525 = vunpack.c.l.b16 %v701
    %v1526 = vunpack.c.l.b16 %v702
    %v1527 = vunpack.c.l.b16 %v703
    %v1528 = vunpack.c.l.b16 %v704
    %v1529 = vunpack.c.l.b16 %v705
    %v1530 = vunpack.c.l.b16 %v706
    %v1531 = vunpack.c.l.b16 %v707
    %v1532 = vunpack.c.l.b16 %v708
    %v1533 = vunpack.c.l.b16 %v709
    %v1534 = vunpack.c.l.b16 %v710
    %v1535 = vunpack.c.l.b16 %v711
    %v1536 = vunpack.c.l.b16 %v712
    %v1537 = vunpack.c.l.b16 %v713
    %v1538 = vpack.c.b16 %v1523, %v1522
    %v1539 = vpack.c.b16 %v1525, %v1524
    %v1540 = vpack.c.b16 %v1527, %v1526
    %v1541 = vpack.c.b16 %v1529, %v1528
    %v1542 = vpack.c.b16 %v1531, %v1530
    %v1543 = vpack.c.b16 %v1533, %v1532
    %v1544 = vpack.c.b16 %v1535, %v1534
    %v1545 = vpack.c.b16 %v1537, %v1536
    %1554 = vmatprep.subr.bf16.mxu0 0
    %1555 = vmatpush1.bf16.xpose.msra.mxu0 %v1538
    %1556 = vmatprep.subr.bf16.mxu0 0
    %1557 = vmatpush1.bf16.xpose.msra.mxu0 %v1539
    %1558 = vmatprep.subr.bf16.mxu0 0
    %1559 = vmatpush1.bf16.xpose.msra.mxu0 %v1540
    %1560 = vmatprep.subr.bf16.mxu0 0
    %1561 = vmatpush1.bf16.xpose.msra.mxu0 %v1541
    %1562 = vmatprep.subr.bf16.mxu0 0
    %1563 = vmatpush1.bf16.xpose.msra.mxu0 %v1542
    %1564 = vmatprep.subr.bf16.mxu0 0
    %1565 = vmatpush1.bf16.xpose.msra.mxu0 %v1543
    %1566 = vmatprep.subr.bf16.mxu0 0
    %1567 = vmatpush1.bf16.xpose.msra.mxu0 %v1544
    %1568 = vmatprep.subr.bf16.mxu0 0
    %1569 = vmatpush1.bf16.xpose.msra.mxu0 %v1545
    %1570 = vmatprep.subr.bf16.mxu0 0
    %1571 = vmatpush1.bf16.xpose.msra.mxu0 0
    %1572 = vmatprep.subr.bf16.mxu0 0
    %1573 = vmatpush1.bf16.xpose.msra.mxu0 0
    %1574 = vmatprep.subr.bf16.mxu0 0
    %1575 = vmatpush1.bf16.xpose.msra.mxu0 0
    %1576 = vmatprep.subr.bf16.mxu0 0
    %1577 = vmatpush1.bf16.xpose.msra.mxu0 0
    %1578 = vmatprep.subr.bf16.mxu0 0
    %1579 = vmatpush1.bf16.xpose.msra.mxu0 0
    %1580 = vmatprep.subr.bf16.mxu0 0
    %1581 = vmatpush1.bf16.xpose.msra.mxu0 0
    %1582 = vmatprep.subr.bf16.mxu0 0
    %1583 = vmatpush1.bf16.xpose.msra.mxu0 0
    %1584 = vmatprep.subr.bf16.mxu0 0
    %1585 = vmatpush1.bf16.xpose.msra.mxu0 0
    %1586 = vmatprep.mubr.bf16.mxu0 0
    %1587 = vmatmul.mubr.bf16.gmra.mrb[0].mxu0 %v1504
    %v1588 = vpop.f32.mrb[0].mxu0
    %v1589 = vadd.f32 0.0, %v1588
    %v1590 = vpop.f32.mrb[0].mxu0
    %v1591 = vpop.f32.mrb[0].mxu0
    %v1592 = vpop.f32.mrb[0].mxu0
    %1593 = vdwg.mxu0
    %v1594 = vpack.i.b16 %v578, %v578
    %v1595 = vlaneseq
    %v1596 = vshrl.u32 %v1595, 7
    %v1597 = vsub.s32 0, %v1596
    %v1598 = vrot.slane %v1594, %v1597
    %v1616 = vunpack.c.l.b16 %v714
    %v1617 = vunpack.c.l.b16 %v715
    %v1618 = vunpack.c.l.b16 %v716
    %v1619 = vunpack.c.l.b16 %v717
    %v1620 = vunpack.c.l.b16 %v718
    %v1621 = vunpack.c.l.b16 %v719
    %v1622 = vunpack.c.l.b16 %v720
    %v1623 = vunpack.c.l.b16 %v721
    %v1624 = vunpack.c.l.b16 %v722
    %v1625 = vunpack.c.l.b16 %v723
    %v1626 = vunpack.c.l.b16 %v724
    %v1627 = vunpack.c.l.b16 %v725
    %v1628 = vunpack.c.l.b16 %v726
    %v1629 = vunpack.c.l.b16 %v727
    %v1630 = vunpack.c.l.b16 %v728
    %v1631 = vunpack.c.l.b16 %v729
    %v1632 = vpack.c.b16 %v1617, %v1616
    %v1633 = vpack.c.b16 %v1619, %v1618
    %v1634 = vpack.c.b16 %v1621, %v1620
    %v1635 = vpack.c.b16 %v1623, %v1622
    %v1636 = vpack.c.b16 %v1625, %v1624
    %v1637 = vpack.c.b16 %v1627, %v1626
    %v1638 = vpack.c.b16 %v1629, %v1628
    %v1639 = vpack.c.b16 %v1631, %v1630
    %1648 = vmatprep.subr.bf16.mxu0 0
    %1649 = vmatpush1.bf16.xpose.msra.mxu0 %v1632
    %1650 = vmatprep.subr.bf16.mxu0 0
    %1651 = vmatpush1.bf16.xpose.msra.mxu0 %v1633
    %1652 = vmatprep.subr.bf16.mxu0 0
    %1653 = vmatpush1.bf16.xpose.msra.mxu0 %v1634
    %1654 = vmatprep.subr.bf16.mxu0 0
    %1655 = vmatpush1.bf16.xpose.msra.mxu0 %v1635
    %1656 = vmatprep.subr.bf16.mxu0 0
    %1657 = vmatpush1.bf16.xpose.msra.mxu0 %v1636
    %1658 = vmatprep.subr.bf16.mxu0 0
    %1659 = vmatpush1.bf16.xpose.msra.mxu0 %v1637
    %1660 = vmatprep.subr.bf16.mxu0 0
    %1661 = vmatpush1.bf16.xpose.msra.mxu0 %v1638
    %1662 = vmatprep.subr.bf16.mxu0 0
    %1663 = vmatpush1.bf16.xpose.msra.mxu0 %v1639
    %1664 = vmatprep.subr.bf16.mxu0 0
    %1665 = vmatpush1.bf16.xpose.msra.mxu0 0
    %1666 = vmatprep.subr.bf16.mxu0 0
    %1667 = vmatpush1.bf16.xpose.msra.mxu0 0
    %1668 = vmatprep.subr.bf16.mxu0 0
    %1669 = vmatpush1.bf16.xpose.msra.mxu0 0
    %1670 = vmatprep.subr.bf16.mxu0 0
    %1671 = vmatpush1.bf16.xpose.msra.mxu0 0
    %1672 = vmatprep.subr.bf16.mxu0 0
    %1673 = vmatpush1.bf16.xpose.msra.mxu0 0
    %1674 = vmatprep.subr.bf16.mxu0 0
    %1675 = vmatpush1.bf16.xpose.msra.mxu0 0
    %1676 = vmatprep.subr.bf16.mxu0 0
    %1677 = vmatpush1.bf16.xpose.msra.mxu0 0
    %1678 = vmatprep.subr.bf16.mxu0 0
    %1679 = vmatpush1.bf16.xpose.msra.mxu0 0
    %1680 = vmatprep.mubr.bf16.mxu0 0
    %1681 = vmatmul.mubr.bf16.gmra.mrb[0].mxu0 %v1598
    %v1682 = vpop.f32.mrb[0].mxu0
    %v1683 = vadd.f32 0.0, %v1682
    %v1684 = vpop.f32.mrb[0].mxu0
    %v1685 = vpop.f32.mrb[0].mxu0
    %v1686 = vpop.f32.mrb[0].mxu0
    %1687 = vdwg.mxu0
    %v1688 = vpack.i.b16 %v579, %v579
    %v1689 = vlaneseq
    %v1690 = vshrl.u32 %v1689, 7
    %v1691 = vsub.s32 0, %v1690
    %v1692 = vrot.slane %v1688, %v1691
    %v1710 = vunpack.c.l.b16 %v730
    %v1711 = vunpack.c.l.b16 %v731
    %v1712 = vunpack.c.l.b16 %v732
    %v1713 = vunpack.c.l.b16 %v733
    %v1714 = vunpack.c.l.b16 %v734
    %v1715 = vunpack.c.l.b16 %v735
    %v1716 = vunpack.c.l.b16 %v736
    %v1717 = vunpack.c.l.b16 %v737
    %v1718 = vunpack.c.l.b16 %v738
    %v1719 = vunpack.c.l.b16 %v739
    %v1720 = vunpack.c.l.b16 %v740
    %v1721 = vunpack.c.l.b16 %v741
    %v1722 = vunpack.c.l.b16 %v742
    %v1723 = vunpack.c.l.b16 %v743
    %v1724 = vunpack.c.l.b16 %v744
    %v1725 = vunpack.c.l.b16 %v745
    %v1726 = vpack.c.b16 %v1711, %v1710
    %v1727 = vpack.c.b16 %v1713, %v1712
    %v1728 = vpack.c.b16 %v1715, %v1714
    %v1729 = vpack.c.b16 %v1717, %v1716
    %v1730 = vpack.c.b16 %v1719, %v1718
    %v1731 = vpack.c.b16 %v1721, %v1720
    %v1732 = vpack.c.b16 %v1723, %v1722
    %v1733 = vpack.c.b16 %v1725, %v1724
    %1742 = vmatprep.subr.bf16.mxu0 0
    %1743 = vmatpush1.bf16.xpose.msra.mxu0 %v1726
    %1744 = vmatprep.subr.bf16.mxu0 0
    %1745 = vmatpush1.bf16.xpose.msra.mxu0 %v1727
    %1746 = vmatprep.subr.bf16.mxu0 0
    %1747 = vmatpush1.bf16.xpose.msra.mxu0 %v1728
    %1748 = vmatprep.subr.bf16.mxu0 0
    %1749 = vmatpush1.bf16.xpose.msra.mxu0 %v1729
    %1750 = vmatprep.subr.bf16.mxu0 0
    %1751 = vmatpush1.bf16.xpose.msra.mxu0 %v1730
    %1752 = vmatprep.subr.bf16.mxu0 0
    %1753 = vmatpush1.bf16.xpose.msra.mxu0 %v1731
    %1754 = vmatprep.subr.bf16.mxu0 0
    %1755 = vmatpush1.bf16.xpose.msra.mxu0 %v1732
    %1756 = vmatprep.subr.bf16.mxu0 0
    %1757 = vmatpush1.bf16.xpose.msra.mxu0 %v1733
    %1758 = vmatprep.subr.bf16.mxu0 0
    %1759 = vmatpush1.bf16.xpose.msra.mxu0 0
    %1760 = vmatprep.subr.bf16.mxu0 0
    %1761 = vmatpush1.bf16.xpose.msra.mxu0 0
    %1762 = vmatprep.subr.bf16.mxu0 0
    %1763 = vmatpush1.bf16.xpose.msra.mxu0 0
    %1764 = vmatprep.subr.bf16.mxu0 0
    %1765 = vmatpush1.bf16.xpose.msra.mxu0 0
    %1766 = vmatprep.subr.bf16.mxu0 0
    %1767 = vmatpush1.bf16.xpose.msra.mxu0 0
    %1768 = vmatprep.subr.bf16.mxu0 0
    %1769 = vmatpush1.bf16.xpose.msra.mxu0 0
    %1770 = vmatprep.subr.bf16.mxu0 0
    %1771 = vmatpush1.bf16.xpose.msra.mxu0 0
    %1772 = vmatprep.subr.bf16.mxu0 0
    %1773 = vmatpush1.bf16.xpose.msra.mxu0 0
    %1774 = vmatprep.mubr.bf16.mxu0 0
    %1775 = vmatmul.mubr.bf16.gmra.mrb[0].mxu0 %v1692
    %v1776 = vpop.f32.mrb[0].mxu0
    %v1777 = vadd.f32 0.0, %v1776
    %v1778 = vpop.f32.mrb[0].mxu0
    %v1779 = vpop.f32.mrb[0].mxu0
    %v1780 = vpop.f32.mrb[0].mxu0
    %1781 = vdwg.mxu0
    %v1782 = vpack.i.b16 %v580, %v580
    %v1783 = vlaneseq
    %v1784 = vshrl.u32 %v1783, 7
    %v1785 = vsub.s32 0, %v1784
    %v1786 = vrot.slane %v1782, %v1785
    %v1804 = vunpack.c.l.b16 %v746
    %v1805 = vunpack.c.l.b16 %v747
    %v1806 = vunpack.c.l.b16 %v748
    %v1807 = vunpack.c.l.b16 %v749
    %v1808 = vunpack.c.l.b16 %v750
    %v1809 = vunpack.c.l.b16 %v751
    %v1810 = vunpack.c.l.b16 %v752
    %v1811 = vunpack.c.l.b16 %v753
    %v1812 = vunpack.c.l.b16 %v754
    %v1813 = vunpack.c.l.b16 %v755
    %v1814 = vunpack.c.l.b16 %v756
    %v1815 = vunpack.c.l.b16 %v757
    %v1816 = vunpack.c.l.b16 %v758
    %v1817 = vunpack.c.l.b16 %v759
    %v1818 = vunpack.c.l.b16 %v760
    %v1819 = vunpack.c.l.b16 %v761
    %v1820 = vpack.c.b16 %v1805, %v1804
    %v1821 = vpack.c.b16 %v1807, %v1806
    %v1822 = vpack.c.b16 %v1809, %v1808
    %v1823 = vpack.c.b16 %v1811, %v1810
    %v1824 = vpack.c.b16 %v1813, %v1812
    %v1825 = vpack.c.b16 %v1815, %v1814
    %v1826 = vpack.c.b16 %v1817, %v1816
    %v1827 = vpack.c.b16 %v1819, %v1818
    %1836 = vmatprep.subr.bf16.mxu0 0
    %1837 = vmatpush1.bf16.xpose.msra.mxu0 %v1820
    %1838 = vmatprep.subr.bf16.mxu0 0
    %1839 = vmatpush1.bf16.xpose.msra.mxu0 %v1821
    %1840 = vmatprep.subr.bf16.mxu0 0
    %1841 = vmatpush1.bf16.xpose.msra.mxu0 %v1822
    %1842 = vmatprep.subr.bf16.mxu0 0
    %1843 = vmatpush1.bf16.xpose.msra.mxu0 %v1823
    %1844 = vmatprep.subr.bf16.mxu0 0
    %1845 = vmatpush1.bf16.xpose.msra.mxu0 %v1824
    %1846 = vmatprep.subr.bf16.mxu0 0
    %1847 = vmatpush1.bf16.xpose.msra.mxu0 %v1825
    %1848 = vmatprep.subr.bf16.mxu0 0
    %1849 = vmatpush1.bf16.xpose.msra.mxu0 %v1826
    %1850 = vmatprep.subr.bf16.mxu0 0
    %1851 = vmatpush1.bf16.xpose.msra.mxu0 %v1827
    %1852 = vmatprep.subr.bf16.mxu0 0
    %1853 = vmatpush1.bf16.xpose.msra.mxu0 0
    %1854 = vmatprep.subr.bf16.mxu0 0
    %1855 = vmatpush1.bf16.xpose.msra.mxu0 0
    %1856 = vmatprep.subr.bf16.mxu0 0
    %1857 = vmatpush1.bf16.xpose.msra.mxu0 0
    %1858 = vmatprep.subr.bf16.mxu0 0
    %1859 = vmatpush1.bf16.xpose.msra.mxu0 0
    %1860 = vmatprep.subr.bf16.mxu0 0
    %1861 = vmatpush1.bf16.xpose.msra.mxu0 0
    %1862 = vmatprep.subr.bf16.mxu0 0
    %1863 = vmatpush1.bf16.xpose.msra.mxu0 0
    %1864 = vmatprep.subr.bf16.mxu0 0
    %1865 = vmatpush1.bf16.xpose.msra.mxu0 0
    %1866 = vmatprep.subr.bf16.mxu0 0
    %1867 = vmatpush1.bf16.xpose.msra.mxu0 0
    %1868 = vmatprep.mubr.bf16.mxu0 0
    %1869 = vmatmul.mubr.bf16.gmra.mrb[0].mxu0 %v1786
    %v1870 = vpop.f32.mrb[0].mxu0
    %v1871 = vadd.f32 0.0, %v1870
    %v1872 = vpop.f32.mrb[0].mxu0
    %v1873 = vpop.f32.mrb[0].mxu0
    %v1874 = vpop.f32.mrb[0].mxu0
    %1875 = vdwg.mxu0
    %v1876 = vpack.i.b16 %v581, %v581
    %v1877 = vlaneseq
    %v1878 = vshrl.u32 %v1877, 7
    %v1879 = vsub.s32 0, %v1878
    %v1880 = vrot.slane %v1876, %v1879
    %v1898 = vunpack.c.l.b16 %v762
    %v1899 = vunpack.c.l.b16 %v763
    %v1900 = vunpack.c.l.b16 %v764
    %v1901 = vunpack.c.l.b16 %v765
    %v1902 = vunpack.c.l.b16 %v766
    %v1903 = vunpack.c.l.b16 %v767
    %v1904 = vunpack.c.l.b16 %v768
    %v1905 = vunpack.c.l.b16 %v769
    %v1906 = vunpack.c.l.b16 %v770
    %v1907 = vunpack.c.l.b16 %v771
    %v1908 = vunpack.c.l.b16 %v772
    %v1909 = vunpack.c.l.b16 %v773
    %v1910 = vunpack.c.l.b16 %v774
    %v1911 = vunpack.c.l.b16 %v775
    %v1912 = vunpack.c.l.b16 %v776
    %v1913 = vunpack.c.l.b16 %v777
    %v1914 = vpack.c.b16 %v1899, %v1898
    %v1915 = vpack.c.b16 %v1901, %v1900
    %v1916 = vpack.c.b16 %v1903, %v1902
    %v1917 = vpack.c.b16 %v1905, %v1904
    %v1918 = vpack.c.b16 %v1907, %v1906
    %v1919 = vpack.c.b16 %v1909, %v1908
    %v1920 = vpack.c.b16 %v1911, %v1910
    %v1921 = vpack.c.b16 %v1913, %v1912
    %1930 = vmatprep.subr.bf16.mxu0 0
    %1931 = vmatpush1.bf16.xpose.msra.mxu0 %v1914
    %1932 = vmatprep.subr.bf16.mxu0 0
    %1933 = vmatpush1.bf16.xpose.msra.mxu0 %v1915
    %1934 = vmatprep.subr.bf16.mxu0 0
    %1935 = vmatpush1.bf16.xpose.msra.mxu0 %v1916
    %1936 = vmatprep.subr.bf16.mxu0 0
    %1937 = vmatpush1.bf16.xpose.msra.mxu0 %v1917
    %1938 = vmatprep.subr.bf16.mxu0 0
    %1939 = vmatpush1.bf16.xpose.msra.mxu0 %v1918
    %1940 = vmatprep.subr.bf16.mxu0 0
    %1941 = vmatpush1.bf16.xpose.msra.mxu0 %v1919
    %1942 = vmatprep.subr.bf16.mxu0 0
    %1943 = vmatpush1.bf16.xpose.msra.mxu0 %v1920
    %1944 = vmatprep.subr.bf16.mxu0 0
    %1945 = vmatpush1.bf16.xpose.msra.mxu0 %v1921
    %1946 = vmatprep.subr.bf16.mxu0 0
    %1947 = vmatpush1.bf16.xpose.msra.mxu0 0
    %1948 = vmatprep.subr.bf16.mxu0 0
    %1949 = vmatpush1.bf16.xpose.msra.mxu0 0
    %1950 = vmatprep.subr.bf16.mxu0 0
    %1951 = vmatpush1.bf16.xpose.msra.mxu0 0
    %1952 = vmatprep.subr.bf16.mxu0 0
    %1953 = vmatpush1.bf16.xpose.msra.mxu0 0
    %1954 = vmatprep.subr.bf16.mxu0 0
    %1955 = vmatpush1.bf16.xpose.msra.mxu0 0
    %1956 = vmatprep.subr.bf16.mxu0 0
    %1957 = vmatpush1.bf16.xpose.msra.mxu0 0
    %1958 = vmatprep.subr.bf16.mxu0 0
    %1959 = vmatpush1.bf16.xpose.msra.mxu0 0
    %1960 = vmatprep.subr.bf16.mxu0 0
    %1961 = vmatpush1.bf16.xpose.msra.mxu0 0
    %1962 = vmatprep.mubr.bf16.mxu0 0
    %1963 = vmatmul.mubr.bf16.gmra.mrb[0].mxu0 %v1880
    %v1964 = vpop.f32.mrb[0].mxu0
    %v1965 = vadd.f32 0.0, %v1964
    %v1966 = vpop.f32.mrb[0].mxu0
    %v1967 = vpop.f32.mrb[0].mxu0
    %v1968 = vpop.f32.mrb[0].mxu0
    %1969 = vdwg.mxu0
    %v1970 = vpack.i.b16 %v582, %v582
    %v1971 = vlaneseq
    %v1972 = vshrl.u32 %v1971, 7
    %v1973 = vsub.s32 0, %v1972
    %v1974 = vrot.slane %v1970, %v1973
    %v1992 = vunpack.c.l.b16 %v778
    %v1993 = vunpack.c.l.b16 %v779
    %v1994 = vunpack.c.l.b16 %v780
    %v1995 = vunpack.c.l.b16 %v781
    %v1996 = vunpack.c.l.b16 %v782
    %v1997 = vunpack.c.l.b16 %v783
    %v1998 = vunpack.c.l.b16 %v784
    %v1999 = vunpack.c.l.b16 %v785
    %v2000 = vunpack.c.l.b16 %v786
    %v2001 = vunpack.c.l.b16 %v787
    %v2002 = vunpack.c.l.b16 %v788
    %v2003 = vunpack.c.l.b16 %v789
    %v2004 = vunpack.c.l.b16 %v790
    %v2005 = vunpack.c.l.b16 %v791
    %v2006 = vunpack.c.l.b16 %v792
    %v2007 = vunpack.c.l.b16 %v793
    %v2008 = vpack.c.b16 %v1993, %v1992
    %v2009 = vpack.c.b16 %v1995, %v1994
    %v2010 = vpack.c.b16 %v1997, %v1996
    %v2011 = vpack.c.b16 %v1999, %v1998
    %v2012 = vpack.c.b16 %v2001, %v2000
    %v2013 = vpack.c.b16 %v2003, %v2002
    %v2014 = vpack.c.b16 %v2005, %v2004
    %v2015 = vpack.c.b16 %v2007, %v2006
    %2024 = vmatprep.subr.bf16.mxu0 0
    %2025 = vmatpush1.bf16.xpose.msra.mxu0 %v2008
    %2026 = vmatprep.subr.bf16.mxu0 0
    %2027 = vmatpush1.bf16.xpose.msra.mxu0 %v2009
    %2028 = vmatprep.subr.bf16.mxu0 0
    %2029 = vmatpush1.bf16.xpose.msra.mxu0 %v2010
    %2030 = vmatprep.subr.bf16.mxu0 0
    %2031 = vmatpush1.bf16.xpose.msra.mxu0 %v2011
    %2032 = vmatprep.subr.bf16.mxu0 0
    %2033 = vmatpush1.bf16.xpose.msra.mxu0 %v2012
    %2034 = vmatprep.subr.bf16.mxu0 0
    %2035 = vmatpush1.bf16.xpose.msra.mxu0 %v2013
    %2036 = vmatprep.subr.bf16.mxu0 0
    %2037 = vmatpush1.bf16.xpose.msra.mxu0 %v2014
    %2038 = vmatprep.subr.bf16.mxu0 0
    %2039 = vmatpush1.bf16.xpose.msra.mxu0 %v2015
    %2040 = vmatprep.subr.bf16.mxu0 0
    %2041 = vmatpush1.bf16.xpose.msra.mxu0 0
    %2042 = vmatprep.subr.bf16.mxu0 0
    %2043 = vmatpush1.bf16.xpose.msra.mxu0 0
    %2044 = vmatprep.subr.bf16.mxu0 0
    %2045 = vmatpush1.bf16.xpose.msra.mxu0 0
    %2046 = vmatprep.subr.bf16.mxu0 0
    %2047 = vmatpush1.bf16.xpose.msra.mxu0 0
    %2048 = vmatprep.subr.bf16.mxu0 0
    %2049 = vmatpush1.bf16.xpose.msra.mxu0 0
    %2050 = vmatprep.subr.bf16.mxu0 0
    %2051 = vmatpush1.bf16.xpose.msra.mxu0 0
    %2052 = vmatprep.subr.bf16.mxu0 0
    %2053 = vmatpush1.bf16.xpose.msra.mxu0 0
    %2054 = vmatprep.subr.bf16.mxu0 0
    %2055 = vmatpush1.bf16.xpose.msra.mxu0 0
    %2056 = vmatprep.mubr.bf16.mxu0 0
    %2057 = vmatmul.mubr.bf16.gmra.mrb[0].mxu0 %v1974
    %v2058 = vpop.f32.mrb[0].mxu0
    %v2059 = vadd.f32 0.0, %v2058
    %v2060 = vpop.f32.mrb[0].mxu0
    %v2061 = vpop.f32.mrb[0].mxu0
    %v2062 = vpop.f32.mrb[0].mxu0
    %2063 = vdwg.mxu0
    %v2064 = vpack.i.b16 %v583, %v583
    %v2065 = vlaneseq
    %v2066 = vshrl.u32 %v2065, 7
    %v2067 = vsub.s32 0, %v2066
    %v2068 = vrot.slane %v2064, %v2067
    %v2086 = vunpack.c.l.b16 %v794
    %v2087 = vunpack.c.l.b16 %v795
    %v2088 = vunpack.c.l.b16 %v796
    %v2089 = vunpack.c.l.b16 %v797
    %v2090 = vunpack.c.l.b16 %v798
    %v2091 = vunpack.c.l.b16 %v799
    %v2092 = vunpack.c.l.b16 %v800
    %v2093 = vunpack.c.l.b16 %v801
    %v2094 = vunpack.c.l.b16 %v802
    %v2095 = vunpack.c.l.b16 %v803
    %v2096 = vunpack.c.l.b16 %v804
    %v2097 = vunpack.c.l.b16 %v805
    %v2098 = vunpack.c.l.b16 %v806
    %v2099 = vunpack.c.l.b16 %v807
    %v2100 = vunpack.c.l.b16 %v808
    %v2101 = vunpack.c.l.b16 %v809
    %v2102 = vpack.c.b16 %v2087, %v2086
    %v2103 = vpack.c.b16 %v2089, %v2088
    %v2104 = vpack.c.b16 %v2091, %v2090
    %v2105 = vpack.c.b16 %v2093, %v2092
    %v2106 = vpack.c.b16 %v2095, %v2094
    %v2107 = vpack.c.b16 %v2097, %v2096
    %v2108 = vpack.c.b16 %v2099, %v2098
    %v2109 = vpack.c.b16 %v2101, %v2100
    %2118 = vmatprep.subr.bf16.mxu0 0
    %2119 = vmatpush1.bf16.xpose.msra.mxu0 %v2102
    %2120 = vmatprep.subr.bf16.mxu0 0
    %2121 = vmatpush1.bf16.xpose.msra.mxu0 %v2103
    %2122 = vmatprep.subr.bf16.mxu0 0
    %2123 = vmatpush1.bf16.xpose.msra.mxu0 %v2104
    %2124 = vmatprep.subr.bf16.mxu0 0
    %2125 = vmatpush1.bf16.xpose.msra.mxu0 %v2105
    %2126 = vmatprep.subr.bf16.mxu0 0
    %2127 = vmatpush1.bf16.xpose.msra.mxu0 %v2106
    %2128 = vmatprep.subr.bf16.mxu0 0
    %2129 = vmatpush1.bf16.xpose.msra.mxu0 %v2107
    %2130 = vmatprep.subr.bf16.mxu0 0
    %2131 = vmatpush1.bf16.xpose.msra.mxu0 %v2108
    %2132 = vmatprep.subr.bf16.mxu0 0
    %2133 = vmatpush1.bf16.xpose.msra.mxu0 %v2109
    %2134 = vmatprep.subr.bf16.mxu0 0
    %2135 = vmatpush1.bf16.xpose.msra.mxu0 0
    %2136 = vmatprep.subr.bf16.mxu0 0
    %2137 = vmatpush1.bf16.xpose.msra.mxu0 0
    %2138 = vmatprep.subr.bf16.mxu0 0
    %2139 = vmatpush1.bf16.xpose.msra.mxu0 0
    %2140 = vmatprep.subr.bf16.mxu0 0
    %2141 = vmatpush1.bf16.xpose.msra.mxu0 0
    %2142 = vmatprep.subr.bf16.mxu0 0
    %2143 = vmatpush1.bf16.xpose.msra.mxu0 0
    %2144 = vmatprep.subr.bf16.mxu0 0
    %2145 = vmatpush1.bf16.xpose.msra.mxu0 0
    %2146 = vmatprep.subr.bf16.mxu0 0
    %2147 = vmatpush1.bf16.xpose.msra.mxu0 0
    %2148 = vmatprep.subr.bf16.mxu0 0
    %2149 = vmatpush1.bf16.xpose.msra.mxu0 0
    %2150 = vmatprep.mubr.bf16.mxu0 0
    %2151 = vmatmul.mubr.bf16.gmra.mrb[0].mxu0 %v2068
    %v2152 = vpop.f32.mrb[0].mxu0
    %v2153 = vadd.f32 0.0, %v2152
    %v2154 = vpop.f32.mrb[0].mxu0
    %v2155 = vpop.f32.mrb[0].mxu0
    %v2156 = vpop.f32.mrb[0].mxu0
    %2157 = vdwg.mxu0
    %v2158 = vpack.i.b16 %v584, %v584
    %v2159 = vlaneseq
    %v2160 = vshrl.u32 %v2159, 7
    %v2161 = vsub.s32 0, %v2160
    %v2162 = vrot.slane %v2158, %v2161
    %v2180 = vunpack.c.l.b16 %v810
    %v2181 = vunpack.c.l.b16 %v811
    %v2182 = vunpack.c.l.b16 %v812
    %v2183 = vunpack.c.l.b16 %v813
    %v2184 = vunpack.c.l.b16 %v814
    %v2185 = vunpack.c.l.b16 %v815
    %v2186 = vunpack.c.l.b16 %v816
    %v2187 = vunpack.c.l.b16 %v817
    %v2188 = vunpack.c.l.b16 %v818
    %v2189 = vunpack.c.l.b16 %v819
    %v2190 = vunpack.c.l.b16 %v820
    %v2191 = vunpack.c.l.b16 %v821
    %v2192 = vunpack.c.l.b16 %v822
    %v2193 = vunpack.c.l.b16 %v823
    %v2194 = vunpack.c.l.b16 %v824
    %v2195 = vunpack.c.l.b16 %v825
    %v2196 = vpack.c.b16 %v2181, %v2180
    %v2197 = vpack.c.b16 %v2183, %v2182
    %v2198 = vpack.c.b16 %v2185, %v2184
    %v2199 = vpack.c.b16 %v2187, %v2186
    %v2200 = vpack.c.b16 %v2189, %v2188
    %v2201 = vpack.c.b16 %v2191, %v2190
    %v2202 = vpack.c.b16 %v2193, %v2192
    %v2203 = vpack.c.b16 %v2195, %v2194
    %2212 = vmatprep.subr.bf16.mxu0 0
    %2213 = vmatpush1.bf16.xpose.msra.mxu0 %v2196
    %2214 = vmatprep.subr.bf16.mxu0 0
    %2215 = vmatpush1.bf16.xpose.msra.mxu0 %v2197
    %2216 = vmatprep.subr.bf16.mxu0 0
    %2217 = vmatpush1.bf16.xpose.msra.mxu0 %v2198
    %2218 = vmatprep.subr.bf16.mxu0 0
    %2219 = vmatpush1.bf16.xpose.msra.mxu0 %v2199
    %2220 = vmatprep.subr.bf16.mxu0 0
    %2221 = vmatpush1.bf16.xpose.msra.mxu0 %v2200
    %2222 = vmatprep.subr.bf16.mxu0 0
    %2223 = vmatpush1.bf16.xpose.msra.mxu0 %v2201
    %2224 = vmatprep.subr.bf16.mxu0 0
    %2225 = vmatpush1.bf16.xpose.msra.mxu0 %v2202
    %2226 = vmatprep.subr.bf16.mxu0 0
    %2227 = vmatpush1.bf16.xpose.msra.mxu0 %v2203
    %2228 = vmatprep.subr.bf16.mxu0 0
    %2229 = vmatpush1.bf16.xpose.msra.mxu0 0
    %2230 = vmatprep.subr.bf16.mxu0 0
    %2231 = vmatpush1.bf16.xpose.msra.mxu0 0
    %2232 = vmatprep.subr.bf16.mxu0 0
    %2233 = vmatpush1.bf16.xpose.msra.mxu0 0
    %2234 = vmatprep.subr.bf16.mxu0 0
    %2235 = vmatpush1.bf16.xpose.msra.mxu0 0
    %2236 = vmatprep.subr.bf16.mxu0 0
    %2237 = vmatpush1.bf16.xpose.msra.mxu0 0
    %2238 = vmatprep.subr.bf16.mxu0 0
    %2239 = vmatpush1.bf16.xpose.msra.mxu0 0
    %2240 = vmatprep.subr.bf16.mxu0 0
    %2241 = vmatpush1.bf16.xpose.msra.mxu0 0
    %2242 = vmatprep.subr.bf16.mxu0 0
    %2243 = vmatpush1.bf16.xpose.msra.mxu0 0
    %2244 = vmatprep.mubr.bf16.mxu0 0
    %2245 = vmatmul.mubr.bf16.gmra.mrb[0].mxu0 %v2162
    %v2246 = vpop.f32.mrb[0].mxu0
    %v2247 = vadd.f32 0.0, %v2246
    %v2248 = vpop.f32.mrb[0].mxu0
    %v2249 = vpop.f32.mrb[0].mxu0
    %v2250 = vpop.f32.mrb[0].mxu0
    %2251 = vdwg.mxu0
    %v2252 = vpack.i.b16 %v585, %v585
    %v2253 = vlaneseq
    %v2254 = vshrl.u32 %v2253, 7
    %v2255 = vsub.s32 0, %v2254
    %v2256 = vrot.slane %v2252, %v2255
    %v2274 = vunpack.c.l.b16 %v826
    %v2275 = vunpack.c.l.b16 %v827
    %v2276 = vunpack.c.l.b16 %v828
    %v2277 = vunpack.c.l.b16 %v829
    %v2278 = vunpack.c.l.b16 %v830
    %v2279 = vunpack.c.l.b16 %v831
    %v2280 = vunpack.c.l.b16 %v832
    %v2281 = vunpack.c.l.b16 %v833
    %v2282 = vunpack.c.l.b16 %v834
    %v2283 = vunpack.c.l.b16 %v835
    %v2284 = vunpack.c.l.b16 %v836
    %v2285 = vunpack.c.l.b16 %v837
    %v2286 = vunpack.c.l.b16 %v838
    %v2287 = vunpack.c.l.b16 %v839
    %v2288 = vunpack.c.l.b16 %v840
    %v2289 = vunpack.c.l.b16 %v841
    %v2290 = vpack.c.b16 %v2275, %v2274
    %v2291 = vpack.c.b16 %v2277, %v2276
    %v2292 = vpack.c.b16 %v2279, %v2278
    %v2293 = vpack.c.b16 %v2281, %v2280
    %v2294 = vpack.c.b16 %v2283, %v2282
    %v2295 = vpack.c.b16 %v2285, %v2284
    %v2296 = vpack.c.b16 %v2287, %v2286
    %v2297 = vpack.c.b16 %v2289, %v2288
    %2306 = vmatprep.subr.bf16.mxu0 0
    %2307 = vmatpush1.bf16.xpose.msra.mxu0 %v2290
    %2308 = vmatprep.subr.bf16.mxu0 0
    %2309 = vmatpush1.bf16.xpose.msra.mxu0 %v2291
    %2310 = vmatprep.subr.bf16.mxu0 0
    %2311 = vmatpush1.bf16.xpose.msra.mxu0 %v2292
    %2312 = vmatprep.subr.bf16.mxu0 0
    %2313 = vmatpush1.bf16.xpose.msra.mxu0 %v2293
    %2314 = vmatprep.subr.bf16.mxu0 0
    %2315 = vmatpush1.bf16.xpose.msra.mxu0 %v2294
    %2316 = vmatprep.subr.bf16.mxu0 0
    %2317 = vmatpush1.bf16.xpose.msra.mxu0 %v2295
    %2318 = vmatprep.subr.bf16.mxu0 0
    %2319 = vmatpush1.bf16.xpose.msra.mxu0 %v2296
    %2320 = vmatprep.subr.bf16.mxu0 0
    %2321 = vmatpush1.bf16.xpose.msra.mxu0 %v2297
    %2322 = vmatprep.subr.bf16.mxu0 0
    %2323 = vmatpush1.bf16.xpose.msra.mxu0 0
    %2324 = vmatprep.subr.bf16.mxu0 0
    %2325 = vmatpush1.bf16.xpose.msra.mxu0 0
    %2326 = vmatprep.subr.bf16.mxu0 0
    %2327 = vmatpush1.bf16.xpose.msra.mxu0 0
    %2328 = vmatprep.subr.bf16.mxu0 0
    %2329 = vmatpush1.bf16.xpose.msra.mxu0 0
    %2330 = vmatprep.subr.bf16.mxu0 0
    %2331 = vmatpush1.bf16.xpose.msra.mxu0 0
    %2332 = vmatprep.subr.bf16.mxu0 0
    %2333 = vmatpush1.bf16.xpose.msra.mxu0 0
    %2334 = vmatprep.subr.bf16.mxu0 0
    %2335 = vmatpush1.bf16.xpose.msra.mxu0 0
    %2336 = vmatprep.subr.bf16.mxu0 0
    %2337 = vmatpush1.bf16.xpose.msra.mxu0 0
    %2338 = vmatprep.mubr.bf16.mxu0 0
    %2339 = vmatmul.mubr.bf16.gmra.mrb[0].mxu0 %v2256
    %v2340 = vpop.f32.mrb[0].mxu0
    %v2341 = vadd.f32 0.0, %v2340
    %v2342 = vpop.f32.mrb[0].mxu0
    %v2343 = vpop.f32.mrb[0].mxu0
    %v2344 = vpop.f32.mrb[0].mxu0
    %2345 = vdwg.mxu0
    %v2346 = vld [vmem:[#allocation8] sm:$0xff]
    %v2347 = vld [vmem:[#allocation8 + $0x8] sm:$0xff]
    %vm2348 = vcmp.gt.f32.partialorder %v2346, 0.5
    %vm2349 = vcmp.gt.f32.partialorder %v2347, 0.5
    %v2366 = vrot.slane %v1025, 7
    %vm2367 = vcmask 1041409
    %v2368 = vsel %vm2367, %v2366, %v931
    %v2369 = vrot.slane %v1119, 6
    %vm2370 = vcmask 1042434
    %v2371 = vsel %vm2370, %v2369, %v2368
    %v2372 = vrot.slane %v1213, 5
    %vm2373 = vcmask 1043459
    %v2374 = vsel %vm2373, %v2372, %v2371
    %v2375 = vrot.slane %v1307, 4
    %vm2376 = vcmask 1044484
    %v2377 = vsel %vm2376, %v2375, %v2374
    %v2378 = vrot.slane %v1401, 3
    %vm2379 = vcmask 1045509
    %v2380 = vsel %vm2379, %v2378, %v2377
    %v2381 = vrot.slane %v1495, 2
    %vm2382 = vcmask 1046534
    %v2383 = vsel %vm2382, %v2381, %v2380
    %v2384 = vrot.slane %v1589, 1
    %vm2385 = vcmask 1047559
    %v2386 = vsel %vm2385, %v2384, %v2383
    %v2387 = vrot.slane %v1777, 7
    %v2388 = vsel %vm2367, %v2387, %v1683
    %v2389 = vrot.slane %v1871, 6
    %v2390 = vsel %vm2370, %v2389, %v2388
    %v2391 = vrot.slane %v1965, 5
    %v2392 = vsel %vm2373, %v2391, %v2390
    %v2393 = vrot.slane %v2059, 4
    %v2394 = vsel %vm2376, %v2393, %v2392
    %v2395 = vrot.slane %v2153, 3
    %v2396 = vsel %vm2379, %v2395, %v2394
    %v2397 = vrot.slane %v2247, 2
    %v2398 = vsel %vm2382, %v2397, %v2396
    %v2399 = vrot.slane %v2341, 1
    %v2400 = vsel %vm2385, %v2399, %v2398
    %v2403 = vsel %vm2348, -1e+09, %v2386
    %v2404 = vsel %vm2349, -1e+09, %v2400
    %2405 = vmax.xlane.f32.xlu0 %v2403
    %v2406 = vpop.xlane.xlu0 %2405
    %2407 = vmax.xlane.f32.xlu0 %v2404
    %v2408 = vpop.xlane.xlu0 %2407
    %v2409 = vsub.f32 %v2403, %v2406
    %v2410 = vsub.f32 %v2404, %v2408
    %v2411 = vmul.f32 %v2409, 1.442695
    %v2412 = vpow.pop %v2411
    %v2413 = vmul.f32 %v2410, 1.442695
    %v2414 = vpow.pop %v2413
    %2415 = vadd.xlane.f32.xlu0 %v2412
    %v2416 = vpop.xlane.xlu0 %2415
    %2417 = vadd.xlane.f32.xlu0 %v2414
    %v2418 = vpop.xlane.xlu0 %2417
    %v2419 = vrcp.pop %v2416
    %v2420 = vrcp.pop %v2418
    %v2421 = vmul.f32 %v2412, %v2419
    %v2422 = vmul.f32 %v2414, %v2420
    %v2423 = vpack.c.bf16 %v2422, %v2421
    %v2425 = vcombine.high %v2423, %v2423
    %v2427 = vunpack.c.l.s4 1966171168
    %v2428 = vunpack.c.0.s8 %v2427
    %v2429 = vlaneseq
    %v2430 = vshrl.u32 %v2429, 7
    %v2431 = vsub.s32 %v2428, %v2430
    %v2432 = vrot.slane %v2423, %v2431
    %v2434 = vunpack.c.l.s4 1966171168
    %v2435 = vunpack.c.0.s8 %v2434
    %v2436 = vlaneseq
    %v2437 = vshrl.u32 %v2436, 7
    %v2438 = vsub.s32 %v2435, %v2437
    %v2439 = vrot.slane %v2425, %v2438
    %v2440 = vcombine.high %v2432, %v2432
    %v2441 = vcombine.high %v2439, %v2439
    %v2443 = vunpack.c.l.s4 1966171168
    %v2444 = vunpack.c.0.s8 %v2443
    %v2445 = vlaneseq
    %v2446 = vshrl.u32 %v2445, 7
    %v2447 = vsub.s32 %v2444, %v2446
    %v2448 = vrot.slane %v2432, %v2447
    %v2450 = vunpack.c.l.s4 1966171168
    %v2451 = vunpack.c.0.s8 %v2450
    %v2452 = vlaneseq
    %v2453 = vshrl.u32 %v2452, 7
    %v2454 = vsub.s32 %v2451, %v2453
    %v2455 = vrot.slane %v2439, %v2454
    %v2457 = vunpack.c.l.s4 1966171168
    %v2458 = vunpack.c.0.s8 %v2457
    %v2459 = vlaneseq
    %v2460 = vshrl.u32 %v2459, 7
    %v2461 = vsub.s32 %v2458, %v2460
    %v2462 = vrot.slane %v2440, %v2461
    %v2464 = vunpack.c.l.s4 1966171168
    %v2465 = vunpack.c.0.s8 %v2464
    %v2466 = vlaneseq
    %v2467 = vshrl.u32 %v2466, 7
    %v2468 = vsub.s32 %v2465, %v2467
    %v2469 = vrot.slane %v2441, %v2468
    %v2470 = vcombine.high %v2448, %v2448
    %v2471 = vcombine.high %v2455, %v2455
    %v2472 = vcombine.high %v2462, %v2462
    %v2473 = vcombine.high %v2469, %v2469
    %v2474 = vunpack.i.l.s16 %v2448
    %v2475 = vunpack.i.h.s16 %v2448
    %v2476 = vunpack.i.l.s16 %v2462
    %v2477 = vunpack.i.h.s16 %v2462
    %v2478 = vunpack.i.l.s16 %v2470
    %v2479 = vunpack.i.h.s16 %v2470
    %v2480 = vunpack.i.l.s16 %v2472
    %v2481 = vunpack.i.h.s16 %v2472
    %v2482 = vunpack.i.l.s16 %v2455
    %v2483 = vunpack.i.h.s16 %v2455
    %v2484 = vunpack.i.l.s16 %v2469
    %v2485 = vunpack.i.h.s16 %v2469
    %v2486 = vunpack.i.l.s16 %v2471
    %v2487 = vunpack.i.h.s16 %v2471
    %v2488 = vunpack.i.l.s16 %v2473
    %v2489 = vunpack.i.h.s16 %v2473
    %v2490 = vld [vmem:[#allocation7] sm:$0xf]
    %v2491 = vld [vmem:[#allocation7 + $0x4] sm:$0xf]
    %v2492 = vld [vmem:[#allocation7 + $0x8] sm:$0xf]
    %v2493 = vld [vmem:[#allocation7 + $0xc] sm:$0xf]
    %v2494 = vld [vmem:[#allocation7 + $0x10] sm:$0xf]
    %v2495 = vld [vmem:[#allocation7 + $0x14] sm:$0xf]
    %v2496 = vld [vmem:[#allocation7 + $0x18] sm:$0xf]
    %v2497 = vld [vmem:[#allocation7 + $0x1c] sm:$0xf]
    %v2498 = vld [vmem:[#allocation7 + $0x20] sm:$0xf]
    %v2499 = vld [vmem:[#allocation7 + $0x24] sm:$0xf]
    %v2500 = vld [vmem:[#allocation7 + $0x28] sm:$0xf]
    %v2501 = vld [vmem:[#allocation7 + $0x2c] sm:$0xf]
    %v2502 = vld [vmem:[#allocation7 + $0x30] sm:$0xf]
    %v2503 = vld [vmem:[#allocation7 + $0x34] sm:$0xf]
    %v2504 = vld [vmem:[#allocation7 + $0x38] sm:$0xf]
    %v2505 = vld [vmem:[#allocation7 + $0x3c] sm:$0xf]
    %v2506 = vld [vmem:[#allocation7 + $0x40] sm:$0xf]
    %v2507 = vld [vmem:[#allocation7 + $0x44] sm:$0xf]
    %v2508 = vld [vmem:[#allocation7 + $0x48] sm:$0xf]
    %v2509 = vld [vmem:[#allocation7 + $0x4c] sm:$0xf]
    %v2510 = vld [vmem:[#allocation7 + $0x50] sm:$0xf]
    %v2511 = vld [vmem:[#allocation7 + $0x54] sm:$0xf]
    %v2512 = vld [vmem:[#allocation7 + $0x58] sm:$0xf]
    %v2513 = vld [vmem:[#allocation7 + $0x5c] sm:$0xf]
    %v2514 = vld [vmem:[#allocation7 + $0x60] sm:$0xf]
    %v2515 = vld [vmem:[#allocation7 + $0x64] sm:$0xf]
    %v2516 = vld [vmem:[#allocation7 + $0x68] sm:$0xf]
    %v2517 = vld [vmem:[#allocation7 + $0x6c] sm:$0xf]
    %v2518 = vld [vmem:[#allocation7 + $0x70] sm:$0xf]
    %v2519 = vld [vmem:[#allocation7 + $0x74] sm:$0xf]
    %v2520 = vld [vmem:[#allocation7 + $0x78] sm:$0xf]
    %v2521 = vld [vmem:[#allocation7 + $0x7c] sm:$0xf]
    %v2522 = vld [vmem:[#allocation7 + $0x80] sm:$0xf]
    %v2523 = vld [vmem:[#allocation7 + $0x84] sm:$0xf]
    %v2524 = vld [vmem:[#allocation7 + $0x88] sm:$0xf]
    %v2525 = vld [vmem:[#allocation7 + $0x8c] sm:$0xf]
    %v2526 = vld [vmem:[#allocation7 + $0x90] sm:$0xf]
    %v2527 = vld [vmem:[#allocation7 + $0x94] sm:$0xf]
    %v2528 = vld [vmem:[#allocation7 + $0x98] sm:$0xf]
    %v2529 = vld [vmem:[#allocation7 + $0x9c] sm:$0xf]
    %v2530 = vld [vmem:[#allocation7 + $0xa0] sm:$0xf]
    %v2531 = vld [vmem:[#allocation7 + $0xa4] sm:$0xf]
    %v2532 = vld [vmem:[#allocation7 + $0xa8] sm:$0xf]
    %v2533 = vld [vmem:[#allocation7 + $0xac] sm:$0xf]
    %v2534 = vld [vmem:[#allocation7 + $0xb0] sm:$0xf]
    %v2535 = vld [vmem:[#allocation7 + $0xb4] sm:$0xf]
    %v2536 = vld [vmem:[#allocation7 + $0xb8] sm:$0xf]
    %v2537 = vld [vmem:[#allocation7 + $0xbc] sm:$0xf]
    %v2538 = vld [vmem:[#allocation7 + $0xc0] sm:$0xf]
    %v2539 = vld [vmem:[#allocation7 + $0xc4] sm:$0xf]
    %v2540 = vld [vmem:[#allocation7 + $0xc8] sm:$0xf]
    %v2541 = vld [vmem:[#allocation7 + $0xcc] sm:$0xf]
    %v2542 = vld [vmem:[#allocation7 + $0xd0] sm:$0xf]
    %v2543 = vld [vmem:[#allocation7 + $0xd4] sm:$0xf]
    %v2544 = vld [vmem:[#allocation7 + $0xd8] sm:$0xf]
    %v2545 = vld [vmem:[#allocation7 + $0xdc] sm:$0xf]
    %v2546 = vld [vmem:[#allocation7 + $0xe0] sm:$0xf]
    %v2547 = vld [vmem:[#allocation7 + $0xe4] sm:$0xf]
    %v2548 = vld [vmem:[#allocation7 + $0xe8] sm:$0xf]
    %v2549 = vld [vmem:[#allocation7 + $0xec] sm:$0xf]
    %v2550 = vld [vmem:[#allocation7 + $0xf0] sm:$0xf]
    %v2551 = vld [vmem:[#allocation7 + $0xf4] sm:$0xf]
    %v2552 = vld [vmem:[#allocation7 + $0xf8] sm:$0xf]
    %v2553 = vld [vmem:[#allocation7 + $0xfc] sm:$0xf]
    %v2554 = vld [vmem:[#allocation7 + $0x100] sm:$0xf]
    %v2555 = vld [vmem:[#allocation7 + $0x104] sm:$0xf]
    %v2556 = vld [vmem:[#allocation7 + $0x108] sm:$0xf]
    %v2557 = vld [vmem:[#allocation7 + $0x10c] sm:$0xf]
    %v2558 = vld [vmem:[#allocation7 + $0x110] sm:$0xf]
    %v2559 = vld [vmem:[#allocation7 + $0x114] sm:$0xf]
    %v2560 = vld [vmem:[#allocation7 + $0x118] sm:$0xf]
    %v2561 = vld [vmem:[#allocation7 + $0x11c] sm:$0xf]
    %v2562 = vld [vmem:[#allocation7 + $0x120] sm:$0xf]
    %v2563 = vld [vmem:[#allocation7 + $0x124] sm:$0xf]
    %v2564 = vld [vmem:[#allocation7 + $0x128] sm:$0xf]
    %v2565 = vld [vmem:[#allocation7 + $0x12c] sm:$0xf]
    %v2566 = vld [vmem:[#allocation7 + $0x130] sm:$0xf]
    %v2567 = vld [vmem:[#allocation7 + $0x134] sm:$0xf]
    %v2568 = vld [vmem:[#allocation7 + $0x138] sm:$0xf]
    %v2569 = vld [vmem:[#allocation7 + $0x13c] sm:$0xf]
    %v2570 = vld [vmem:[#allocation7 + $0x140] sm:$0xf]
    %v2571 = vld [vmem:[#allocation7 + $0x144] sm:$0xf]
    %v2572 = vld [vmem:[#allocation7 + $0x148] sm:$0xf]
    %v2573 = vld [vmem:[#allocation7 + $0x14c] sm:$0xf]
    %v2574 = vld [vmem:[#allocation7 + $0x150] sm:$0xf]
    %v2575 = vld [vmem:[#allocation7 + $0x154] sm:$0xf]
    %v2576 = vld [vmem:[#allocation7 + $0x158] sm:$0xf]
    %v2577 = vld [vmem:[#allocation7 + $0x15c] sm:$0xf]
    %v2578 = vld [vmem:[#allocation7 + $0x160] sm:$0xf]
    %v2579 = vld [vmem:[#allocation7 + $0x164] sm:$0xf]
    %v2580 = vld [vmem:[#allocation7 + $0x168] sm:$0xf]
    %v2581 = vld [vmem:[#allocation7 + $0x16c] sm:$0xf]
    %v2582 = vld [vmem:[#allocation7 + $0x170] sm:$0xf]
    %v2583 = vld [vmem:[#allocation7 + $0x174] sm:$0xf]
    %v2584 = vld [vmem:[#allocation7 + $0x178] sm:$0xf]
    %v2585 = vld [vmem:[#allocation7 + $0x17c] sm:$0xf]
    %v2586 = vld [vmem:[#allocation7 + $0x180] sm:$0xf]
    %v2587 = vld [vmem:[#allocation7 + $0x184] sm:$0xf]
    %v2588 = vld [vmem:[#allocation7 + $0x188] sm:$0xf]
    %v2589 = vld [vmem:[#allocation7 + $0x18c] sm:$0xf]
    %v2590 = vld [vmem:[#allocation7 + $0x190] sm:$0xf]
    %v2591 = vld [vmem:[#allocation7 + $0x194] sm:$0xf]
    %v2592 = vld [vmem:[#allocation7 + $0x198] sm:$0xf]
    %v2593 = vld [vmem:[#allocation7 + $0x19c] sm:$0xf]
    %v2594 = vld [vmem:[#allocation7 + $0x1a0] sm:$0xf]
    %v2595 = vld [vmem:[#allocation7 + $0x1a4] sm:$0xf]
    %v2596 = vld [vmem:[#allocation7 + $0x1a8] sm:$0xf]
    %v2597 = vld [vmem:[#allocation7 + $0x1ac] sm:$0xf]
    %v2598 = vld [vmem:[#allocation7 + $0x1b0] sm:$0xf]
    %v2599 = vld [vmem:[#allocation7 + $0x1b4] sm:$0xf]
    %v2600 = vld [vmem:[#allocation7 + $0x1b8] sm:$0xf]
    %v2601 = vld [vmem:[#allocation7 + $0x1bc] sm:$0xf]
    %v2602 = vld [vmem:[#allocation7 + $0x1c0] sm:$0xf]
    %v2603 = vld [vmem:[#allocation7 + $0x1c4] sm:$0xf]
    %v2604 = vld [vmem:[#allocation7 + $0x1c8] sm:$0xf]
    %v2605 = vld [vmem:[#allocation7 + $0x1cc] sm:$0xf]
    %v2606 = vld [vmem:[#allocation7 + $0x1d0] sm:$0xf]
    %v2607 = vld [vmem:[#allocation7 + $0x1d4] sm:$0xf]
    %v2608 = vld [vmem:[#allocation7 + $0x1d8] sm:$0xf]
    %v2609 = vld [vmem:[#allocation7 + $0x1dc] sm:$0xf]
    %v2610 = vld [vmem:[#allocation7 + $0x1e0] sm:$0xf]
    %v2611 = vld [vmem:[#allocation7 + $0x1e4] sm:$0xf]
    %v2612 = vld [vmem:[#allocation7 + $0x1e8] sm:$0xf]
    %v2613 = vld [vmem:[#allocation7 + $0x1ec] sm:$0xf]
    %v2614 = vld [vmem:[#allocation7 + $0x1f0] sm:$0xf]
    %v2615 = vld [vmem:[#allocation7 + $0x1f4] sm:$0xf]
    %v2616 = vld [vmem:[#allocation7 + $0x1f8] sm:$0xf]
    %v2617 = vld [vmem:[#allocation7 + $0x1fc] sm:$0xf]
    %v2618 = vld [vmem:[#allocation7 + $0x200] sm:$0xf]
    %v2619 = vld [vmem:[#allocation7 + $0x204] sm:$0xf]
    %v2620 = vld [vmem:[#allocation7 + $0x208] sm:$0xf]
    %v2621 = vld [vmem:[#allocation7 + $0x20c] sm:$0xf]
    %v2622 = vld [vmem:[#allocation7 + $0x210] sm:$0xf]
    %v2623 = vld [vmem:[#allocation7 + $0x214] sm:$0xf]
    %v2624 = vld [vmem:[#allocation7 + $0x218] sm:$0xf]
    %v2625 = vld [vmem:[#allocation7 + $0x21c] sm:$0xf]
    %v2626 = vld [vmem:[#allocation7 + $0x220] sm:$0xf]
    %v2627 = vld [vmem:[#allocation7 + $0x224] sm:$0xf]
    %v2628 = vld [vmem:[#allocation7 + $0x228] sm:$0xf]
    %v2629 = vld [vmem:[#allocation7 + $0x22c] sm:$0xf]
    %v2630 = vld [vmem:[#allocation7 + $0x230] sm:$0xf]
    %v2631 = vld [vmem:[#allocation7 + $0x234] sm:$0xf]
    %v2632 = vld [vmem:[#allocation7 + $0x238] sm:$0xf]
    %v2633 = vld [vmem:[#allocation7 + $0x23c] sm:$0xf]
    %v2634 = vld [vmem:[#allocation7 + $0x240] sm:$0xf]
    %v2635 = vld [vmem:[#allocation7 + $0x244] sm:$0xf]
    %v2636 = vld [vmem:[#allocation7 + $0x248] sm:$0xf]
    %v2637 = vld [vmem:[#allocation7 + $0x24c] sm:$0xf]
    %v2638 = vld [vmem:[#allocation7 + $0x250] sm:$0xf]
    %v2639 = vld [vmem:[#allocation7 + $0x254] sm:$0xf]
    %v2640 = vld [vmem:[#allocation7 + $0x258] sm:$0xf]
    %v2641 = vld [vmem:[#allocation7 + $0x25c] sm:$0xf]
    %v2642 = vld [vmem:[#allocation7 + $0x260] sm:$0xf]
    %v2643 = vld [vmem:[#allocation7 + $0x264] sm:$0xf]
    %v2644 = vld [vmem:[#allocation7 + $0x268] sm:$0xf]
    %v2645 = vld [vmem:[#allocation7 + $0x26c] sm:$0xf]
    %v2646 = vld [vmem:[#allocation7 + $0x270] sm:$0xf]
    %v2647 = vld [vmem:[#allocation7 + $0x274] sm:$0xf]
    %v2648 = vld [vmem:[#allocation7 + $0x278] sm:$0xf]
    %v2649 = vld [vmem:[#allocation7 + $0x27c] sm:$0xf]
    %v2650 = vld [vmem:[#allocation7 + $0x280] sm:$0xf]
    %v2651 = vld [vmem:[#allocation7 + $0x284] sm:$0xf]
    %v2652 = vld [vmem:[#allocation7 + $0x288] sm:$0xf]
    %v2653 = vld [vmem:[#allocation7 + $0x28c] sm:$0xf]
    %v2654 = vld [vmem:[#allocation7 + $0x290] sm:$0xf]
    %v2655 = vld [vmem:[#allocation7 + $0x294] sm:$0xf]
    %v2656 = vld [vmem:[#allocation7 + $0x298] sm:$0xf]
    %v2657 = vld [vmem:[#allocation7 + $0x29c] sm:$0xf]
    %v2658 = vld [vmem:[#allocation7 + $0x2a0] sm:$0xf]
    %v2659 = vld [vmem:[#allocation7 + $0x2a4] sm:$0xf]
    %v2660 = vld [vmem:[#allocation7 + $0x2a8] sm:$0xf]
    %v2661 = vld [vmem:[#allocation7 + $0x2ac] sm:$0xf]
    %v2662 = vld [vmem:[#allocation7 + $0x2b0] sm:$0xf]
    %v2663 = vld [vmem:[#allocation7 + $0x2b4] sm:$0xf]
    %v2664 = vld [vmem:[#allocation7 + $0x2b8] sm:$0xf]
    %v2665 = vld [vmem:[#allocation7 + $0x2bc] sm:$0xf]
    %v2666 = vld [vmem:[#allocation7 + $0x2c0] sm:$0xf]
    %v2667 = vld [vmem:[#allocation7 + $0x2c4] sm:$0xf]
    %v2668 = vld [vmem:[#allocation7 + $0x2c8] sm:$0xf]
    %v2669 = vld [vmem:[#allocation7 + $0x2cc] sm:$0xf]
    %v2670 = vld [vmem:[#allocation7 + $0x2d0] sm:$0xf]
    %v2671 = vld [vmem:[#allocation7 + $0x2d4] sm:$0xf]
    %v2672 = vld [vmem:[#allocation7 + $0x2d8] sm:$0xf]
    %v2673 = vld [vmem:[#allocation7 + $0x2dc] sm:$0xf]
    %v2674 = vld [vmem:[#allocation7 + $0x2e0] sm:$0xf]
    %v2675 = vld [vmem:[#allocation7 + $0x2e4] sm:$0xf]
    %v2676 = vld [vmem:[#allocation7 + $0x2e8] sm:$0xf]
    %v2677 = vld [vmem:[#allocation7 + $0x2ec] sm:$0xf]
    %v2678 = vld [vmem:[#allocation7 + $0x2f0] sm:$0xf]
    %v2679 = vld [vmem:[#allocation7 + $0x2f4] sm:$0xf]
    %v2680 = vld [vmem:[#allocation7 + $0x2f8] sm:$0xf]
    %v2681 = vld [vmem:[#allocation7 + $0x2fc] sm:$0xf]
    %v2682 = vld [vmem:[#allocation7 + $0x300] sm:$0xf]
    %v2683 = vld [vmem:[#allocation7 + $0x304] sm:$0xf]
    %v2684 = vld [vmem:[#allocation7 + $0x308] sm:$0xf]
    %v2685 = vld [vmem:[#allocation7 + $0x30c] sm:$0xf]
    %v2686 = vld [vmem:[#allocation7 + $0x310] sm:$0xf]
    %v2687 = vld [vmem:[#allocation7 + $0x314] sm:$0xf]
    %v2688 = vld [vmem:[#allocation7 + $0x318] sm:$0xf]
    %v2689 = vld [vmem:[#allocation7 + $0x31c] sm:$0xf]
    %v2690 = vld [vmem:[#allocation7 + $0x320] sm:$0xf]
    %v2691 = vld [vmem:[#allocation7 + $0x324] sm:$0xf]
    %v2692 = vld [vmem:[#allocation7 + $0x328] sm:$0xf]
    %v2693 = vld [vmem:[#allocation7 + $0x32c] sm:$0xf]
    %v2694 = vld [vmem:[#allocation7 + $0x330] sm:$0xf]
    %v2695 = vld [vmem:[#allocation7 + $0x334] sm:$0xf]
    %v2696 = vld [vmem:[#allocation7 + $0x338] sm:$0xf]
    %v2697 = vld [vmem:[#allocation7 + $0x33c] sm:$0xf]
    %v2698 = vld [vmem:[#allocation7 + $0x340] sm:$0xf]
    %v2699 = vld [vmem:[#allocation7 + $0x344] sm:$0xf]
    %v2700 = vld [vmem:[#allocation7 + $0x348] sm:$0xf]
    %v2701 = vld [vmem:[#allocation7 + $0x34c] sm:$0xf]
    %v2702 = vld [vmem:[#allocation7 + $0x350] sm:$0xf]
    %v2703 = vld [vmem:[#allocation7 + $0x354] sm:$0xf]
    %v2704 = vld [vmem:[#allocation7 + $0x358] sm:$0xf]
    %v2705 = vld [vmem:[#allocation7 + $0x35c] sm:$0xf]
    %v2706 = vld [vmem:[#allocation7 + $0x360] sm:$0xf]
    %v2707 = vld [vmem:[#allocation7 + $0x364] sm:$0xf]
    %v2708 = vld [vmem:[#allocation7 + $0x368] sm:$0xf]
    %v2709 = vld [vmem:[#allocation7 + $0x36c] sm:$0xf]
    %v2710 = vld [vmem:[#allocation7 + $0x370] sm:$0xf]
    %v2711 = vld [vmem:[#allocation7 + $0x374] sm:$0xf]
    %v2712 = vld [vmem:[#allocation7 + $0x378] sm:$0xf]
    %v2713 = vld [vmem:[#allocation7 + $0x37c] sm:$0xf]
    %v2714 = vld [vmem:[#allocation7 + $0x380] sm:$0xf]
    %v2715 = vld [vmem:[#allocation7 + $0x384] sm:$0xf]
    %v2716 = vld [vmem:[#allocation7 + $0x388] sm:$0xf]
    %v2717 = vld [vmem:[#allocation7 + $0x38c] sm:$0xf]
    %v2718 = vld [vmem:[#allocation7 + $0x390] sm:$0xf]
    %v2719 = vld [vmem:[#allocation7 + $0x394] sm:$0xf]
    %v2720 = vld [vmem:[#allocation7 + $0x398] sm:$0xf]
    %v2721 = vld [vmem:[#allocation7 + $0x39c] sm:$0xf]
    %v2722 = vld [vmem:[#allocation7 + $0x3a0] sm:$0xf]
    %v2723 = vld [vmem:[#allocation7 + $0x3a4] sm:$0xf]
    %v2724 = vld [vmem:[#allocation7 + $0x3a8] sm:$0xf]
    %v2725 = vld [vmem:[#allocation7 + $0x3ac] sm:$0xf]
    %v2726 = vld [vmem:[#allocation7 + $0x3b0] sm:$0xf]
    %v2727 = vld [vmem:[#allocation7 + $0x3b4] sm:$0xf]
    %v2728 = vld [vmem:[#allocation7 + $0x3b8] sm:$0xf]
    %v2729 = vld [vmem:[#allocation7 + $0x3bc] sm:$0xf]
    %v2730 = vld [vmem:[#allocation7 + $0x3c0] sm:$0xf]
    %v2731 = vld [vmem:[#allocation7 + $0x3c4] sm:$0xf]
    %v2732 = vld [vmem:[#allocation7 + $0x3c8] sm:$0xf]
    %v2733 = vld [vmem:[#allocation7 + $0x3cc] sm:$0xf]
    %v2734 = vld [vmem:[#allocation7 + $0x3d0] sm:$0xf]
    %v2735 = vld [vmem:[#allocation7 + $0x3d4] sm:$0xf]
    %v2736 = vld [vmem:[#allocation7 + $0x3d8] sm:$0xf]
    %v2737 = vld [vmem:[#allocation7 + $0x3dc] sm:$0xf]
    %v2738 = vld [vmem:[#allocation7 + $0x3e0] sm:$0xf]
    %v2739 = vld [vmem:[#allocation7 + $0x3e4] sm:$0xf]
    %v2740 = vld [vmem:[#allocation7 + $0x3e8] sm:$0xf]
    %v2741 = vld [vmem:[#allocation7 + $0x3ec] sm:$0xf]
    %v2742 = vld [vmem:[#allocation7 + $0x3f0] sm:$0xf]
    %v2743 = vld [vmem:[#allocation7 + $0x3f4] sm:$0xf]
    %v2744 = vld [vmem:[#allocation7 + $0x3f8] sm:$0xf]
    %v2745 = vld [vmem:[#allocation7 + $0x3fc] sm:$0xf]
    %v2746 = vpack.i.b16 %v2474, %v2474
    %v2747 = vlaneseq
    %v2748 = vshrl.u32 %v2747, 7
    %v2749 = vsub.s32 0, %v2748
    %v2750 = vrot.slane %v2746, %v2749
    %v2768 = vunpack.c.l.b16 %v2490
    %v2769 = vunpack.c.l.b16 %v2491
    %v2770 = vunpack.c.l.b16 %v2492
    %v2771 = vunpack.c.l.b16 %v2493
    %v2772 = vunpack.c.l.b16 %v2494
    %v2773 = vunpack.c.l.b16 %v2495
    %v2774 = vunpack.c.l.b16 %v2496
    %v2775 = vunpack.c.l.b16 %v2497
    %v2776 = vunpack.c.l.b16 %v2498
    %v2777 = vunpack.c.l.b16 %v2499
    %v2778 = vunpack.c.l.b16 %v2500
    %v2779 = vunpack.c.l.b16 %v2501
    %v2780 = vunpack.c.l.b16 %v2502
    %v2781 = vunpack.c.l.b16 %v2503
    %v2782 = vunpack.c.l.b16 %v2504
    %v2783 = vunpack.c.l.b16 %v2505
    %v2784 = vpack.c.b16 %v2769, %v2768
    %v2785 = vpack.c.b16 %v2771, %v2770
    %v2786 = vpack.c.b16 %v2773, %v2772
    %v2787 = vpack.c.b16 %v2775, %v2774
    %v2788 = vpack.c.b16 %v2777, %v2776
    %v2789 = vpack.c.b16 %v2779, %v2778
    %v2790 = vpack.c.b16 %v2781, %v2780
    %v2791 = vpack.c.b16 %v2783, %v2782
    %2800 = vmatprep.subr.bf16.mxu0 0
    %2801 = vmatpush1.bf16.msra.mxu0 %v2784
    %2802 = vmatprep.subr.bf16.mxu0 0
    %2803 = vmatpush1.bf16.msra.mxu0 %v2785
    %2804 = vmatprep.subr.bf16.mxu0 0
    %2805 = vmatpush1.bf16.msra.mxu0 %v2786
    %2806 = vmatprep.subr.bf16.mxu0 0
    %2807 = vmatpush1.bf16.msra.mxu0 %v2787
    %2808 = vmatprep.subr.bf16.mxu0 0
    %2809 = vmatpush1.bf16.msra.mxu0 %v2788
    %2810 = vmatprep.subr.bf16.mxu0 0
    %2811 = vmatpush1.bf16.msra.mxu0 %v2789
    %2812 = vmatprep.subr.bf16.mxu0 0
    %2813 = vmatpush1.bf16.msra.mxu0 %v2790
    %2814 = vmatprep.subr.bf16.mxu0 0
    %2815 = vmatpush1.bf16.msra.mxu0 %v2791
    %2816 = vmatprep.subr.bf16.mxu0 0
    %2817 = vmatpush1.bf16.msra.mxu0 0
    %2818 = vmatprep.subr.bf16.mxu0 0
    %2819 = vmatpush1.bf16.msra.mxu0 0
    %2820 = vmatprep.subr.bf16.mxu0 0
    %2821 = vmatpush1.bf16.msra.mxu0 0
    %2822 = vmatprep.subr.bf16.mxu0 0
    %2823 = vmatpush1.bf16.msra.mxu0 0
    %2824 = vmatprep.subr.bf16.mxu0 0
    %2825 = vmatpush1.bf16.msra.mxu0 0
    %2826 = vmatprep.subr.bf16.mxu0 0
    %2827 = vmatpush1.bf16.msra.mxu0 0
    %2828 = vmatprep.subr.bf16.mxu0 0
    %2829 = vmatpush1.bf16.msra.mxu0 0
    %2830 = vmatprep.subr.bf16.mxu0 0
    %2831 = vmatpush1.bf16.msra.mxu0 0
    %2832 = vmatprep.mubr.bf16.mxu0 0
    %2833 = vmatmul.mubr.bf16.gmra.mrb[0].mxu0 %v2750
    %v2834 = vpop.f32.mrb[0].mxu0
    %v2835 = vadd.f32 0.0, %v2834
    %v2836 = vpop.f32.mrb[0].mxu0
    %v2837 = vpop.f32.mrb[0].mxu0
    %v2838 = vpop.f32.mrb[0].mxu0
    %2839 = vdwg.mxu0
    %v2840 = vpack.i.b16 %v2475, %v2475
    %v2841 = vlaneseq
    %v2842 = vshrl.u32 %v2841, 7
    %v2843 = vsub.s32 0, %v2842
    %v2844 = vrot.slane %v2840, %v2843
    %v2862 = vunpack.c.l.b16 %v2506
    %v2863 = vunpack.c.l.b16 %v2507
    %v2864 = vunpack.c.l.b16 %v2508
    %v2865 = vunpack.c.l.b16 %v2509
    %v2866 = vunpack.c.l.b16 %v2510
    %v2867 = vunpack.c.l.b16 %v2511
    %v2868 = vunpack.c.l.b16 %v2512
    %v2869 = vunpack.c.l.b16 %v2513
    %v2870 = vunpack.c.l.b16 %v2514
    %v2871 = vunpack.c.l.b16 %v2515
    %v2872 = vunpack.c.l.b16 %v2516
    %v2873 = vunpack.c.l.b16 %v2517
    %v2874 = vunpack.c.l.b16 %v2518
    %v2875 = vunpack.c.l.b16 %v2519
    %v2876 = vunpack.c.l.b16 %v2520
    %v2877 = vunpack.c.l.b16 %v2521
    %v2878 = vpack.c.b16 %v2863, %v2862
    %v2879 = vpack.c.b16 %v2865, %v2864
    %v2880 = vpack.c.b16 %v2867, %v2866
    %v2881 = vpack.c.b16 %v2869, %v2868
    %v2882 = vpack.c.b16 %v2871, %v2870
    %v2883 = vpack.c.b16 %v2873, %v2872
    %v2884 = vpack.c.b16 %v2875, %v2874
    %v2885 = vpack.c.b16 %v2877, %v2876
    %2894 = vmatprep.subr.bf16.mxu0 0
    %2895 = vmatpush1.bf16.msra.mxu0 %v2878
    %2896 = vmatprep.subr.bf16.mxu0 0
    %2897 = vmatpush1.bf16.msra.mxu0 %v2879
    %2898 = vmatprep.subr.bf16.mxu0 0
    %2899 = vmatpush1.bf16.msra.mxu0 %v2880
    %2900 = vmatprep.subr.bf16.mxu0 0
    %2901 = vmatpush1.bf16.msra.mxu0 %v2881
    %2902 = vmatprep.subr.bf16.mxu0 0
    %2903 = vmatpush1.bf16.msra.mxu0 %v2882
    %2904 = vmatprep.subr.bf16.mxu0 0
    %2905 = vmatpush1.bf16.msra.mxu0 %v2883
    %2906 = vmatprep.subr.bf16.mxu0 0
    %2907 = vmatpush1.bf16.msra.mxu0 %v2884
    %2908 = vmatprep.subr.bf16.mxu0 0
    %2909 = vmatpush1.bf16.msra.mxu0 %v2885
    %2910 = vmatprep.subr.bf16.mxu0 0
    %2911 = vmatpush1.bf16.msra.mxu0 0
    %2912 = vmatprep.subr.bf16.mxu0 0
    %2913 = vmatpush1.bf16.msra.mxu0 0
    %2914 = vmatprep.subr.bf16.mxu0 0
    %2915 = vmatpush1.bf16.msra.mxu0 0
    %2916 = vmatprep.subr.bf16.mxu0 0
    %2917 = vmatpush1.bf16.msra.mxu0 0
    %2918 = vmatprep.subr.bf16.mxu0 0
    %2919 = vmatpush1.bf16.msra.mxu0 0
    %2920 = vmatprep.subr.bf16.mxu0 0
    %2921 = vmatpush1.bf16.msra.mxu0 0
    %2922 = vmatprep.subr.bf16.mxu0 0
    %2923 = vmatpush1.bf16.msra.mxu0 0
    %2924 = vmatprep.subr.bf16.mxu0 0
    %2925 = vmatpush1.bf16.msra.mxu0 0
    %2926 = vmatprep.mubr.bf16.mxu0 0
    %2927 = vmatmul.mubr.bf16.gmra.mrb[0].mxu0 %v2844
    %v2928 = vpop.f32.mrb[0].mxu0
    %v2929 = vadd.f32 0.0, %v2928
    %v2930 = vpop.f32.mrb[0].mxu0
    %v2931 = vpop.f32.mrb[0].mxu0
    %v2932 = vpop.f32.mrb[0].mxu0
    %2933 = vdwg.mxu0
    %v2934 = vpack.i.b16 %v2476, %v2476
    %v2935 = vlaneseq
    %v2936 = vshrl.u32 %v2935, 7
    %v2937 = vsub.s32 0, %v2936
    %v2938 = vrot.slane %v2934, %v2937
    %v2956 = vunpack.c.l.b16 %v2522
    %v2957 = vunpack.c.l.b16 %v2523
    %v2958 = vunpack.c.l.b16 %v2524
    %v2959 = vunpack.c.l.b16 %v2525
    %v2960 = vunpack.c.l.b16 %v2526
    %v2961 = vunpack.c.l.b16 %v2527
    %v2962 = vunpack.c.l.b16 %v2528
    %v2963 = vunpack.c.l.b16 %v2529
    %v2964 = vunpack.c.l.b16 %v2530
    %v2965 = vunpack.c.l.b16 %v2531
    %v2966 = vunpack.c.l.b16 %v2532
    %v2967 = vunpack.c.l.b16 %v2533
    %v2968 = vunpack.c.l.b16 %v2534
    %v2969 = vunpack.c.l.b16 %v2535
    %v2970 = vunpack.c.l.b16 %v2536
    %v2971 = vunpack.c.l.b16 %v2537
    %v2972 = vpack.c.b16 %v2957, %v2956
    %v2973 = vpack.c.b16 %v2959, %v2958
    %v2974 = vpack.c.b16 %v2961, %v2960
    %v2975 = vpack.c.b16 %v2963, %v2962
    %v2976 = vpack.c.b16 %v2965, %v2964
    %v2977 = vpack.c.b16 %v2967, %v2966
    %v2978 = vpack.c.b16 %v2969, %v2968
    %v2979 = vpack.c.b16 %v2971, %v2970
    %2988 = vmatprep.subr.bf16.mxu0 0
    %2989 = vmatpush1.bf16.msra.mxu0 %v2972
    %2990 = vmatprep.subr.bf16.mxu0 0
    %2991 = vmatpush1.bf16.msra.mxu0 %v2973
    %2992 = vmatprep.subr.bf16.mxu0 0
    %2993 = vmatpush1.bf16.msra.mxu0 %v2974
    %2994 = vmatprep.subr.bf16.mxu0 0
    %2995 = vmatpush1.bf16.msra.mxu0 %v2975
    %2996 = vmatprep.subr.bf16.mxu0 0
    %2997 = vmatpush1.bf16.msra.mxu0 %v2976
    %2998 = vmatprep.subr.bf16.mxu0 0
    %2999 = vmatpush1.bf16.msra.mxu0 %v2977
    %3000 = vmatprep.subr.bf16.mxu0 0
    %3001 = vmatpush1.bf16.msra.mxu0 %v2978
    %3002 = vmatprep.subr.bf16.mxu0 0
    %3003 = vmatpush1.bf16.msra.mxu0 %v2979
    %3004 = vmatprep.subr.bf16.mxu0 0
    %3005 = vmatpush1.bf16.msra.mxu0 0
    %3006 = vmatprep.subr.bf16.mxu0 0
    %3007 = vmatpush1.bf16.msra.mxu0 0
    %3008 = vmatprep.subr.bf16.mxu0 0
    %3009 = vmatpush1.bf16.msra.mxu0 0
    %3010 = vmatprep.subr.bf16.mxu0 0
    %3011 = vmatpush1.bf16.msra.mxu0 0
    %3012 = vmatprep.subr.bf16.mxu0 0
    %3013 = vmatpush1.bf16.msra.mxu0 0
    %3014 = vmatprep.subr.bf16.mxu0 0
    %3015 = vmatpush1.bf16.msra.mxu0 0
    %3016 = vmatprep.subr.bf16.mxu0 0
    %3017 = vmatpush1.bf16.msra.mxu0 0
    %3018 = vmatprep.subr.bf16.mxu0 0
    %3019 = vmatpush1.bf16.msra.mxu0 0
    %3020 = vmatprep.mubr.bf16.mxu0 0
    %3021 = vmatmul.mubr.bf16.gmra.mrb[0].mxu0 %v2938
    %v3022 = vpop.f32.mrb[0].mxu0
    %v3023 = vadd.f32 0.0, %v3022
    %v3024 = vpop.f32.mrb[0].mxu0
    %v3025 = vpop.f32.mrb[0].mxu0
    %v3026 = vpop.f32.mrb[0].mxu0
    %3027 = vdwg.mxu0
    %v3028 = vpack.i.b16 %v2477, %v2477
    %v3029 = vlaneseq
    %v3030 = vshrl.u32 %v3029, 7
    %v3031 = vsub.s32 0, %v3030
    %v3032 = vrot.slane %v3028, %v3031
    %v3050 = vunpack.c.l.b16 %v2538
    %v3051 = vunpack.c.l.b16 %v2539
    %v3052 = vunpack.c.l.b16 %v2540
    %v3053 = vunpack.c.l.b16 %v2541
    %v3054 = vunpack.c.l.b16 %v2542
    %v3055 = vunpack.c.l.b16 %v2543
    %v3056 = vunpack.c.l.b16 %v2544
    %v3057 = vunpack.c.l.b16 %v2545
    %v3058 = vunpack.c.l.b16 %v2546
    %v3059 = vunpack.c.l.b16 %v2547
    %v3060 = vunpack.c.l.b16 %v2548
    %v3061 = vunpack.c.l.b16 %v2549
    %v3062 = vunpack.c.l.b16 %v2550
    %v3063 = vunpack.c.l.b16 %v2551
    %v3064 = vunpack.c.l.b16 %v2552
    %v3065 = vunpack.c.l.b16 %v2553
    %v3066 = vpack.c.b16 %v3051, %v3050
    %v3067 = vpack.c.b16 %v3053, %v3052
    %v3068 = vpack.c.b16 %v3055, %v3054
    %v3069 = vpack.c.b16 %v3057, %v3056
    %v3070 = vpack.c.b16 %v3059, %v3058
    %v3071 = vpack.c.b16 %v3061, %v3060
    %v3072 = vpack.c.b16 %v3063, %v3062
    %v3073 = vpack.c.b16 %v3065, %v3064
    %3082 = vmatprep.subr.bf16.mxu0 0
    %3083 = vmatpush1.bf16.msra.mxu0 %v3066
    %3084 = vmatprep.subr.bf16.mxu0 0
    %3085 = vmatpush1.bf16.msra.mxu0 %v3067
    %3086 = vmatprep.subr.bf16.mxu0 0
    %3087 = vmatpush1.bf16.msra.mxu0 %v3068
    %3088 = vmatprep.subr.bf16.mxu0 0
    %3089 = vmatpush1.bf16.msra.mxu0 %v3069
    %3090 = vmatprep.subr.bf16.mxu0 0
    %3091 = vmatpush1.bf16.msra.mxu0 %v3070
    %3092 = vmatprep.subr.bf16.mxu0 0
    %3093 = vmatpush1.bf16.msra.mxu0 %v3071
    %3094 = vmatprep.subr.bf16.mxu0 0
    %3095 = vmatpush1.bf16.msra.mxu0 %v3072
    %3096 = vmatprep.subr.bf16.mxu0 0
    %3097 = vmatpush1.bf16.msra.mxu0 %v3073
    %3098 = vmatprep.subr.bf16.mxu0 0
    %3099 = vmatpush1.bf16.msra.mxu0 0
    %3100 = vmatprep.subr.bf16.mxu0 0
    %3101 = vmatpush1.bf16.msra.mxu0 0
    %3102 = vmatprep.subr.bf16.mxu0 0
    %3103 = vmatpush1.bf16.msra.mxu0 0
    %3104 = vmatprep.subr.bf16.mxu0 0
    %3105 = vmatpush1.bf16.msra.mxu0 0
    %3106 = vmatprep.subr.bf16.mxu0 0
    %3107 = vmatpush1.bf16.msra.mxu0 0
    %3108 = vmatprep.subr.bf16.mxu0 0
    %3109 = vmatpush1.bf16.msra.mxu0 0
    %3110 = vmatprep.subr.bf16.mxu0 0
    %3111 = vmatpush1.bf16.msra.mxu0 0
    %3112 = vmatprep.subr.bf16.mxu0 0
    %3113 = vmatpush1.bf16.msra.mxu0 0
    %3114 = vmatprep.mubr.bf16.mxu0 0
    %3115 = vmatmul.mubr.bf16.gmra.mrb[0].mxu0 %v3032
    %v3116 = vpop.f32.mrb[0].mxu0
    %v3117 = vadd.f32 0.0, %v3116
    %v3118 = vpop.f32.mrb[0].mxu0
    %v3119 = vpop.f32.mrb[0].mxu0
    %v3120 = vpop.f32.mrb[0].mxu0
    %3121 = vdwg.mxu0
    %v3122 = vpack.i.b16 %v2478, %v2478
    %v3123 = vlaneseq
    %v3124 = vshrl.u32 %v3123, 7
    %v3125 = vsub.s32 0, %v3124
    %v3126 = vrot.slane %v3122, %v3125
    %v3144 = vunpack.c.l.b16 %v2554
    %v3145 = vunpack.c.l.b16 %v2555
    %v3146 = vunpack.c.l.b16 %v2556
    %v3147 = vunpack.c.l.b16 %v2557
    %v3148 = vunpack.c.l.b16 %v2558
    %v3149 = vunpack.c.l.b16 %v2559
    %v3150 = vunpack.c.l.b16 %v2560
    %v3151 = vunpack.c.l.b16 %v2561
    %v3152 = vunpack.c.l.b16 %v2562
    %v3153 = vunpack.c.l.b16 %v2563
    %v3154 = vunpack.c.l.b16 %v2564
    %v3155 = vunpack.c.l.b16 %v2565
    %v3156 = vunpack.c.l.b16 %v2566
    %v3157 = vunpack.c.l.b16 %v2567
    %v3158 = vunpack.c.l.b16 %v2568
    %v3159 = vunpack.c.l.b16 %v2569
    %v3160 = vpack.c.b16 %v3145, %v3144
    %v3161 = vpack.c.b16 %v3147, %v3146
    %v3162 = vpack.c.b16 %v3149, %v3148
    %v3163 = vpack.c.b16 %v3151, %v3150
    %v3164 = vpack.c.b16 %v3153, %v3152
    %v3165 = vpack.c.b16 %v3155, %v3154
    %v3166 = vpack.c.b16 %v3157, %v3156
    %v3167 = vpack.c.b16 %v3159, %v3158
    %3176 = vmatprep.subr.bf16.mxu0 0
    %3177 = vmatpush1.bf16.msra.mxu0 %v3160
    %3178 = vmatprep.subr.bf16.mxu0 0
    %3179 = vmatpush1.bf16.msra.mxu0 %v3161
    %3180 = vmatprep.subr.bf16.mxu0 0
    %3181 = vmatpush1.bf16.msra.mxu0 %v3162
    %3182 = vmatprep.subr.bf16.mxu0 0
    %3183 = vmatpush1.bf16.msra.mxu0 %v3163
    %3184 = vmatprep.subr.bf16.mxu0 0
    %3185 = vmatpush1.bf16.msra.mxu0 %v3164
    %3186 = vmatprep.subr.bf16.mxu0 0
    %3187 = vmatpush1.bf16.msra.mxu0 %v3165
    %3188 = vmatprep.subr.bf16.mxu0 0
    %3189 = vmatpush1.bf16.msra.mxu0 %v3166
    %3190 = vmatprep.subr.bf16.mxu0 0
    %3191 = vmatpush1.bf16.msra.mxu0 %v3167
    %3192 = vmatprep.subr.bf16.mxu0 0
    %3193 = vmatpush1.bf16.msra.mxu0 0
    %3194 = vmatprep.subr.bf16.mxu0 0
    %3195 = vmatpush1.bf16.msra.mxu0 0
    %3196 = vmatprep.subr.bf16.mxu0 0
    %3197 = vmatpush1.bf16.msra.mxu0 0
    %3198 = vmatprep.subr.bf16.mxu0 0
    %3199 = vmatpush1.bf16.msra.mxu0 0
    %3200 = vmatprep.subr.bf16.mxu0 0
    %3201 = vmatpush1.bf16.msra.mxu0 0
    %3202 = vmatprep.subr.bf16.mxu0 0
    %3203 = vmatpush1.bf16.msra.mxu0 0
    %3204 = vmatprep.subr.bf16.mxu0 0
    %3205 = vmatpush1.bf16.msra.mxu0 0
    %3206 = vmatprep.subr.bf16.mxu0 0
    %3207 = vmatpush1.bf16.msra.mxu0 0
    %3208 = vmatprep.mubr.bf16.mxu0 0
    %3209 = vmatmul.mubr.bf16.gmra.mrb[0].mxu0 %v3126
    %v3210 = vpop.f32.mrb[0].mxu0
    %v3211 = vadd.f32 0.0, %v3210
    %v3212 = vpop.f32.mrb[0].mxu0
    %v3213 = vpop.f32.mrb[0].mxu0
    %v3214 = vpop.f32.mrb[0].mxu0
    %3215 = vdwg.mxu0
    %v3216 = vpack.i.b16 %v2479, %v2479
    %v3217 = vlaneseq
    %v3218 = vshrl.u32 %v3217, 7
    %v3219 = vsub.s32 0, %v3218
    %v3220 = vrot.slane %v3216, %v3219
    %v3238 = vunpack.c.l.b16 %v2570
    %v3239 = vunpack.c.l.b16 %v2571
    %v3240 = vunpack.c.l.b16 %v2572
    %v3241 = vunpack.c.l.b16 %v2573
    %v3242 = vunpack.c.l.b16 %v2574
    %v3243 = vunpack.c.l.b16 %v2575
    %v3244 = vunpack.c.l.b16 %v2576
    %v3245 = vunpack.c.l.b16 %v2577
    %v3246 = vunpack.c.l.b16 %v2578
    %v3247 = vunpack.c.l.b16 %v2579
    %v3248 = vunpack.c.l.b16 %v2580
    %v3249 = vunpack.c.l.b16 %v2581
    %v3250 = vunpack.c.l.b16 %v2582
    %v3251 = vunpack.c.l.b16 %v2583
    %v3252 = vunpack.c.l.b16 %v2584
    %v3253 = vunpack.c.l.b16 %v2585
    %v3254 = vpack.c.b16 %v3239, %v3238
    %v3255 = vpack.c.b16 %v3241, %v3240
    %v3256 = vpack.c.b16 %v3243, %v3242
    %v3257 = vpack.c.b16 %v3245, %v3244
    %v3258 = vpack.c.b16 %v3247, %v3246
    %v3259 = vpack.c.b16 %v3249, %v3248
    %v3260 = vpack.c.b16 %v3251, %v3250
    %v3261 = vpack.c.b16 %v3253, %v3252
    %3270 = vmatprep.subr.bf16.mxu0 0
    %3271 = vmatpush1.bf16.msra.mxu0 %v3254
    %3272 = vmatprep.subr.bf16.mxu0 0
    %3273 = vmatpush1.bf16.msra.mxu0 %v3255
    %3274 = vmatprep.subr.bf16.mxu0 0
    %3275 = vmatpush1.bf16.msra.mxu0 %v3256
    %3276 = vmatprep.subr.bf16.mxu0 0
    %3277 = vmatpush1.bf16.msra.mxu0 %v3257
    %3278 = vmatprep.subr.bf16.mxu0 0
    %3279 = vmatpush1.bf16.msra.mxu0 %v3258
    %3280 = vmatprep.subr.bf16.mxu0 0
    %3281 = vmatpush1.bf16.msra.mxu0 %v3259
    %3282 = vmatprep.subr.bf16.mxu0 0
    %3283 = vmatpush1.bf16.msra.mxu0 %v3260
    %3284 = vmatprep.subr.bf16.mxu0 0
    %3285 = vmatpush1.bf16.msra.mxu0 %v3261
    %3286 = vmatprep.subr.bf16.mxu0 0
    %3287 = vmatpush1.bf16.msra.mxu0 0
    %3288 = vmatprep.subr.bf16.mxu0 0
    %3289 = vmatpush1.bf16.msra.mxu0 0
    %3290 = vmatprep.subr.bf16.mxu0 0
    %3291 = vmatpush1.bf16.msra.mxu0 0
    %3292 = vmatprep.subr.bf16.mxu0 0
    %3293 = vmatpush1.bf16.msra.mxu0 0
    %3294 = vmatprep.subr.bf16.mxu0 0
    %3295 = vmatpush1.bf16.msra.mxu0 0
    %3296 = vmatprep.subr.bf16.mxu0 0
    %3297 = vmatpush1.bf16.msra.mxu0 0
    %3298 = vmatprep.subr.bf16.mxu0 0
    %3299 = vmatpush1.bf16.msra.mxu0 0
    %3300 = vmatprep.subr.bf16.mxu0 0
    %3301 = vmatpush1.bf16.msra.mxu0 0
    %3302 = vmatprep.mubr.bf16.mxu0 0
    %3303 = vmatmul.mubr.bf16.gmra.mrb[0].mxu0 %v3220
    %v3304 = vpop.f32.mrb[0].mxu0
    %v3305 = vadd.f32 0.0, %v3304
    %v3306 = vpop.f32.mrb[0].mxu0
    %v3307 = vpop.f32.mrb[0].mxu0
    %v3308 = vpop.f32.mrb[0].mxu0
    %3309 = vdwg.mxu0
    %v3310 = vpack.i.b16 %v2480, %v2480
    %v3311 = vlaneseq
    %v3312 = vshrl.u32 %v3311, 7
    %v3313 = vsub.s32 0, %v3312
    %v3314 = vrot.slane %v3310, %v3313
    %v3332 = vunpack.c.l.b16 %v2586
    %v3333 = vunpack.c.l.b16 %v2587
    %v3334 = vunpack.c.l.b16 %v2588
    %v3335 = vunpack.c.l.b16 %v2589
    %v3336 = vunpack.c.l.b16 %v2590
    %v3337 = vunpack.c.l.b16 %v2591
    %v3338 = vunpack.c.l.b16 %v2592
    %v3339 = vunpack.c.l.b16 %v2593
    %v3340 = vunpack.c.l.b16 %v2594
    %v3341 = vunpack.c.l.b16 %v2595
    %v3342 = vunpack.c.l.b16 %v2596
    %v3343 = vunpack.c.l.b16 %v2597
    %v3344 = vunpack.c.l.b16 %v2598
    %v3345 = vunpack.c.l.b16 %v2599
    %v3346 = vunpack.c.l.b16 %v2600
    %v3347 = vunpack.c.l.b16 %v2601
    %v3348 = vpack.c.b16 %v3333, %v3332
    %v3349 = vpack.c.b16 %v3335, %v3334
    %v3350 = vpack.c.b16 %v3337, %v3336
    %v3351 = vpack.c.b16 %v3339, %v3338
    %v3352 = vpack.c.b16 %v3341, %v3340
    %v3353 = vpack.c.b16 %v3343, %v3342
    %v3354 = vpack.c.b16 %v3345, %v3344
    %v3355 = vpack.c.b16 %v3347, %v3346
    %3364 = vmatprep.subr.bf16.mxu0 0
    %3365 = vmatpush1.bf16.msra.mxu0 %v3348
    %3366 = vmatprep.subr.bf16.mxu0 0
    %3367 = vmatpush1.bf16.msra.mxu0 %v3349
    %3368 = vmatprep.subr.bf16.mxu0 0
    %3369 = vmatpush1.bf16.msra.mxu0 %v3350
    %3370 = vmatprep.subr.bf16.mxu0 0
    %3371 = vmatpush1.bf16.msra.mxu0 %v3351
    %3372 = vmatprep.subr.bf16.mxu0 0
    %3373 = vmatpush1.bf16.msra.mxu0 %v3352
    %3374 = vmatprep.subr.bf16.mxu0 0
    %3375 = vmatpush1.bf16.msra.mxu0 %v3353
    %3376 = vmatprep.subr.bf16.mxu0 0
    %3377 = vmatpush1.bf16.msra.mxu0 %v3354
    %3378 = vmatprep.subr.bf16.mxu0 0
    %3379 = vmatpush1.bf16.msra.mxu0 %v3355
    %3380 = vmatprep.subr.bf16.mxu0 0
    %3381 = vmatpush1.bf16.msra.mxu0 0
    %3382 = vmatprep.subr.bf16.mxu0 0
    %3383 = vmatpush1.bf16.msra.mxu0 0
    %3384 = vmatprep.subr.bf16.mxu0 0
    %3385 = vmatpush1.bf16.msra.mxu0 0
    %3386 = vmatprep.subr.bf16.mxu0 0
    %3387 = vmatpush1.bf16.msra.mxu0 0
    %3388 = vmatprep.subr.bf16.mxu0 0
    %3389 = vmatpush1.bf16.msra.mxu0 0
    %3390 = vmatprep.subr.bf16.mxu0 0
    %3391 = vmatpush1.bf16.msra.mxu0 0
    %3392 = vmatprep.subr.bf16.mxu0 0
    %3393 = vmatpush1.bf16.msra.mxu0 0
    %3394 = vmatprep.subr.bf16.mxu0 0
    %3395 = vmatpush1.bf16.msra.mxu0 0
    %3396 = vmatprep.mubr.bf16.mxu0 0
    %3397 = vmatmul.mubr.bf16.gmra.mrb[0].mxu0 %v3314
    %v3398 = vpop.f32.mrb[0].mxu0
    %v3399 = vadd.f32 0.0, %v3398
    %v3400 = vpop.f32.mrb[0].mxu0
    %v3401 = vpop.f32.mrb[0].mxu0
    %v3402 = vpop.f32.mrb[0].mxu0
    %3403 = vdwg.mxu0
    %v3404 = vpack.i.b16 %v2481, %v2481
    %v3405 = vlaneseq
    %v3406 = vshrl.u32 %v3405, 7
    %v3407 = vsub.s32 0, %v3406
    %v3408 = vrot.slane %v3404, %v3407
    %v3426 = vunpack.c.l.b16 %v2602
    %v3427 = vunpack.c.l.b16 %v2603
    %v3428 = vunpack.c.l.b16 %v2604
    %v3429 = vunpack.c.l.b16 %v2605
    %v3430 = vunpack.c.l.b16 %v2606
    %v3431 = vunpack.c.l.b16 %v2607
    %v3432 = vunpack.c.l.b16 %v2608
    %v3433 = vunpack.c.l.b16 %v2609
    %v3434 = vunpack.c.l.b16 %v2610
    %v3435 = vunpack.c.l.b16 %v2611
    %v3436 = vunpack.c.l.b16 %v2612
    %v3437 = vunpack.c.l.b16 %v2613
    %v3438 = vunpack.c.l.b16 %v2614
    %v3439 = vunpack.c.l.b16 %v2615
    %v3440 = vunpack.c.l.b16 %v2616
    %v3441 = vunpack.c.l.b16 %v2617
    %v3442 = vpack.c.b16 %v3427, %v3426
    %v3443 = vpack.c.b16 %v3429, %v3428
    %v3444 = vpack.c.b16 %v3431, %v3430
    %v3445 = vpack.c.b16 %v3433, %v3432
    %v3446 = vpack.c.b16 %v3435, %v3434
    %v3447 = vpack.c.b16 %v3437, %v3436
    %v3448 = vpack.c.b16 %v3439, %v3438
    %v3449 = vpack.c.b16 %v3441, %v3440
    %3458 = vmatprep.subr.bf16.mxu0 0
    %3459 = vmatpush1.bf16.msra.mxu0 %v3442
    %3460 = vmatprep.subr.bf16.mxu0 0
    %3461 = vmatpush1.bf16.msra.mxu0 %v3443
    %3462 = vmatprep.subr.bf16.mxu0 0
    %3463 = vmatpush1.bf16.msra.mxu0 %v3444
    %3464 = vmatprep.subr.bf16.mxu0 0
    %3465 = vmatpush1.bf16.msra.mxu0 %v3445
    %3466 = vmatprep.subr.bf16.mxu0 0
    %3467 = vmatpush1.bf16.msra.mxu0 %v3446
    %3468 = vmatprep.subr.bf16.mxu0 0
    %3469 = vmatpush1.bf16.msra.mxu0 %v3447
    %3470 = vmatprep.subr.bf16.mxu0 0
    %3471 = vmatpush1.bf16.msra.mxu0 %v3448
    %3472 = vmatprep.subr.bf16.mxu0 0
    %3473 = vmatpush1.bf16.msra.mxu0 %v3449
    %3474 = vmatprep.subr.bf16.mxu0 0
    %3475 = vmatpush1.bf16.msra.mxu0 0
    %3476 = vmatprep.subr.bf16.mxu0 0
    %3477 = vmatpush1.bf16.msra.mxu0 0
    %3478 = vmatprep.subr.bf16.mxu0 0
    %3479 = vmatpush1.bf16.msra.mxu0 0
    %3480 = vmatprep.subr.bf16.mxu0 0
    %3481 = vmatpush1.bf16.msra.mxu0 0
    %3482 = vmatprep.subr.bf16.mxu0 0
    %3483 = vmatpush1.bf16.msra.mxu0 0
    %3484 = vmatprep.subr.bf16.mxu0 0
    %3485 = vmatpush1.bf16.msra.mxu0 0
    %3486 = vmatprep.subr.bf16.mxu0 0
    %3487 = vmatpush1.bf16.msra.mxu0 0
    %3488 = vmatprep.subr.bf16.mxu0 0
    %3489 = vmatpush1.bf16.msra.mxu0 0
    %3490 = vmatprep.mubr.bf16.mxu0 0
    %3491 = vmatmul.mubr.bf16.gmra.mrb[0].mxu0 %v3408
    %v3492 = vpop.f32.mrb[0].mxu0
    %v3493 = vadd.f32 0.0, %v3492
    %v3494 = vpop.f32.mrb[0].mxu0
    %v3495 = vpop.f32.mrb[0].mxu0
    %v3496 = vpop.f32.mrb[0].mxu0
    %3497 = vdwg.mxu0
    %v3498 = vpack.i.b16 %v2482, %v2482
    %v3499 = vlaneseq
    %v3500 = vshrl.u32 %v3499, 7
    %v3501 = vsub.s32 0, %v3500
    %v3502 = vrot.slane %v3498, %v3501
    %v3520 = vunpack.c.l.b16 %v2618
    %v3521 = vunpack.c.l.b16 %v2619
    %v3522 = vunpack.c.l.b16 %v2620
    %v3523 = vunpack.c.l.b16 %v2621
    %v3524 = vunpack.c.l.b16 %v2622
    %v3525 = vunpack.c.l.b16 %v2623
    %v3526 = vunpack.c.l.b16 %v2624
    %v3527 = vunpack.c.l.b16 %v2625
    %v3528 = vunpack.c.l.b16 %v2626
    %v3529 = vunpack.c.l.b16 %v2627
    %v3530 = vunpack.c.l.b16 %v2628
    %v3531 = vunpack.c.l.b16 %v2629
    %v3532 = vunpack.c.l.b16 %v2630
    %v3533 = vunpack.c.l.b16 %v2631
    %v3534 = vunpack.c.l.b16 %v2632
    %v3535 = vunpack.c.l.b16 %v2633
    %v3536 = vpack.c.b16 %v3521, %v3520
    %v3537 = vpack.c.b16 %v3523, %v3522
    %v3538 = vpack.c.b16 %v3525, %v3524
    %v3539 = vpack.c.b16 %v3527, %v3526
    %v3540 = vpack.c.b16 %v3529, %v3528
    %v3541 = vpack.c.b16 %v3531, %v3530
    %v3542 = vpack.c.b16 %v3533, %v3532
    %v3543 = vpack.c.b16 %v3535, %v3534
    %3552 = vmatprep.subr.bf16.mxu0 0
    %3553 = vmatpush1.bf16.msra.mxu0 %v3536
    %3554 = vmatprep.subr.bf16.mxu0 0
    %3555 = vmatpush1.bf16.msra.mxu0 %v3537
    %3556 = vmatprep.subr.bf16.mxu0 0
    %3557 = vmatpush1.bf16.msra.mxu0 %v3538
    %3558 = vmatprep.subr.bf16.mxu0 0
    %3559 = vmatpush1.bf16.msra.mxu0 %v3539
    %3560 = vmatprep.subr.bf16.mxu0 0
    %3561 = vmatpush1.bf16.msra.mxu0 %v3540
    %3562 = vmatprep.subr.bf16.mxu0 0
    %3563 = vmatpush1.bf16.msra.mxu0 %v3541
    %3564 = vmatprep.subr.bf16.mxu0 0
    %3565 = vmatpush1.bf16.msra.mxu0 %v3542
    %3566 = vmatprep.subr.bf16.mxu0 0
    %3567 = vmatpush1.bf16.msra.mxu0 %v3543
    %3568 = vmatprep.subr.bf16.mxu0 0
    %3569 = vmatpush1.bf16.msra.mxu0 0
    %3570 = vmatprep.subr.bf16.mxu0 0
    %3571 = vmatpush1.bf16.msra.mxu0 0
    %3572 = vmatprep.subr.bf16.mxu0 0
    %3573 = vmatpush1.bf16.msra.mxu0 0
    %3574 = vmatprep.subr.bf16.mxu0 0
    %3575 = vmatpush1.bf16.msra.mxu0 0
    %3576 = vmatprep.subr.bf16.mxu0 0
    %3577 = vmatpush1.bf16.msra.mxu0 0
    %3578 = vmatprep.subr.bf16.mxu0 0
    %3579 = vmatpush1.bf16.msra.mxu0 0
    %3580 = vmatprep.subr.bf16.mxu0 0
    %3581 = vmatpush1.bf16.msra.mxu0 0
    %3582 = vmatprep.subr.bf16.mxu0 0
    %3583 = vmatpush1.bf16.msra.mxu0 0
    %3584 = vmatprep.mubr.bf16.mxu0 0
    %3585 = vmatmul.mubr.bf16.gmra.mrb[0].mxu0 %v3502
    %v3586 = vpop.f32.mrb[0].mxu0
    %v3587 = vadd.f32 0.0, %v3586
    %v3588 = vpop.f32.mrb[0].mxu0
    %v3589 = vpop.f32.mrb[0].mxu0
    %v3590 = vpop.f32.mrb[0].mxu0
    %3591 = vdwg.mxu0
    %v3592 = vpack.i.b16 %v2483, %v2483
    %v3593 = vlaneseq
    %v3594 = vshrl.u32 %v3593, 7
    %v3595 = vsub.s32 0, %v3594
    %v3596 = vrot.slane %v3592, %v3595
    %v3614 = vunpack.c.l.b16 %v2634
    %v3615 = vunpack.c.l.b16 %v2635
    %v3616 = vunpack.c.l.b16 %v2636
    %v3617 = vunpack.c.l.b16 %v2637
    %v3618 = vunpack.c.l.b16 %v2638
    %v3619 = vunpack.c.l.b16 %v2639
    %v3620 = vunpack.c.l.b16 %v2640
    %v3621 = vunpack.c.l.b16 %v2641
    %v3622 = vunpack.c.l.b16 %v2642
    %v3623 = vunpack.c.l.b16 %v2643
    %v3624 = vunpack.c.l.b16 %v2644
    %v3625 = vunpack.c.l.b16 %v2645
    %v3626 = vunpack.c.l.b16 %v2646
    %v3627 = vunpack.c.l.b16 %v2647
    %v3628 = vunpack.c.l.b16 %v2648
    %v3629 = vunpack.c.l.b16 %v2649
    %v3630 = vpack.c.b16 %v3615, %v3614
    %v3631 = vpack.c.b16 %v3617, %v3616
    %v3632 = vpack.c.b16 %v3619, %v3618
    %v3633 = vpack.c.b16 %v3621, %v3620
    %v3634 = vpack.c.b16 %v3623, %v3622
    %v3635 = vpack.c.b16 %v3625, %v3624
    %v3636 = vpack.c.b16 %v3627, %v3626
    %v3637 = vpack.c.b16 %v3629, %v3628
    %3646 = vmatprep.subr.bf16.mxu0 0
    %3647 = vmatpush1.bf16.msra.mxu0 %v3630
    %3648 = vmatprep.subr.bf16.mxu0 0
    %3649 = vmatpush1.bf16.msra.mxu0 %v3631
    %3650 = vmatprep.subr.bf16.mxu0 0
    %3651 = vmatpush1.bf16.msra.mxu0 %v3632
    %3652 = vmatprep.subr.bf16.mxu0 0
    %3653 = vmatpush1.bf16.msra.mxu0 %v3633
    %3654 = vmatprep.subr.bf16.mxu0 0
    %3655 = vmatpush1.bf16.msra.mxu0 %v3634
    %3656 = vmatprep.subr.bf16.mxu0 0
    %3657 = vmatpush1.bf16.msra.mxu0 %v3635
    %3658 = vmatprep.subr.bf16.mxu0 0
    %3659 = vmatpush1.bf16.msra.mxu0 %v3636
    %3660 = vmatprep.subr.bf16.mxu0 0
    %3661 = vmatpush1.bf16.msra.mxu0 %v3637
    %3662 = vmatprep.subr.bf16.mxu0 0
    %3663 = vmatpush1.bf16.msra.mxu0 0
    %3664 = vmatprep.subr.bf16.mxu0 0
    %3665 = vmatpush1.bf16.msra.mxu0 0
    %3666 = vmatprep.subr.bf16.mxu0 0
    %3667 = vmatpush1.bf16.msra.mxu0 0
    %3668 = vmatprep.subr.bf16.mxu0 0
    %3669 = vmatpush1.bf16.msra.mxu0 0
    %3670 = vmatprep.subr.bf16.mxu0 0
    %3671 = vmatpush1.bf16.msra.mxu0 0
    %3672 = vmatprep.subr.bf16.mxu0 0
    %3673 = vmatpush1.bf16.msra.mxu0 0
    %3674 = vmatprep.subr.bf16.mxu0 0
    %3675 = vmatpush1.bf16.msra.mxu0 0
    %3676 = vmatprep.subr.bf16.mxu0 0
    %3677 = vmatpush1.bf16.msra.mxu0 0
    %3678 = vmatprep.mubr.bf16.mxu0 0
    %3679 = vmatmul.mubr.bf16.gmra.mrb[0].mxu0 %v3596
    %v3680 = vpop.f32.mrb[0].mxu0
    %v3681 = vadd.f32 0.0, %v3680
    %v3682 = vpop.f32.mrb[0].mxu0
    %v3683 = vpop.f32.mrb[0].mxu0
    %v3684 = vpop.f32.mrb[0].mxu0
    %3685 = vdwg.mxu0
    %v3686 = vpack.i.b16 %v2484, %v2484
    %v3687 = vlaneseq
    %v3688 = vshrl.u32 %v3687, 7
    %v3689 = vsub.s32 0, %v3688
    %v3690 = vrot.slane %v3686, %v3689
    %v3708 = vunpack.c.l.b16 %v2650
    %v3709 = vunpack.c.l.b16 %v2651
    %v3710 = vunpack.c.l.b16 %v2652
    %v3711 = vunpack.c.l.b16 %v2653
    %v3712 = vunpack.c.l.b16 %v2654
    %v3713 = vunpack.c.l.b16 %v2655
    %v3714 = vunpack.c.l.b16 %v2656
    %v3715 = vunpack.c.l.b16 %v2657
    %v3716 = vunpack.c.l.b16 %v2658
    %v3717 = vunpack.c.l.b16 %v2659
    %v3718 = vunpack.c.l.b16 %v2660
    %v3719 = vunpack.c.l.b16 %v2661
    %v3720 = vunpack.c.l.b16 %v2662
    %v3721 = vunpack.c.l.b16 %v2663
    %v3722 = vunpack.c.l.b16 %v2664
    %v3723 = vunpack.c.l.b16 %v2665
    %v3724 = vpack.c.b16 %v3709, %v3708
    %v3725 = vpack.c.b16 %v3711, %v3710
    %v3726 = vpack.c.b16 %v3713, %v3712
    %v3727 = vpack.c.b16 %v3715, %v3714
    %v3728 = vpack.c.b16 %v3717, %v3716
    %v3729 = vpack.c.b16 %v3719, %v3718
    %v3730 = vpack.c.b16 %v3721, %v3720
    %v3731 = vpack.c.b16 %v3723, %v3722
    %3740 = vmatprep.subr.bf16.mxu0 0
    %3741 = vmatpush1.bf16.msra.mxu0 %v3724
    %3742 = vmatprep.subr.bf16.mxu0 0
    %3743 = vmatpush1.bf16.msra.mxu0 %v3725
    %3744 = vmatprep.subr.bf16.mxu0 0
    %3745 = vmatpush1.bf16.msra.mxu0 %v3726
    %3746 = vmatprep.subr.bf16.mxu0 0
    %3747 = vmatpush1.bf16.msra.mxu0 %v3727
    %3748 = vmatprep.subr.bf16.mxu0 0
    %3749 = vmatpush1.bf16.msra.mxu0 %v3728
    %3750 = vmatprep.subr.bf16.mxu0 0
    %3751 = vmatpush1.bf16.msra.mxu0 %v3729
    %3752 = vmatprep.subr.bf16.mxu0 0
    %3753 = vmatpush1.bf16.msra.mxu0 %v3730
    %3754 = vmatprep.subr.bf16.mxu0 0
    %3755 = vmatpush1.bf16.msra.mxu0 %v3731
    %3756 = vmatprep.subr.bf16.mxu0 0
    %3757 = vmatpush1.bf16.msra.mxu0 0
    %3758 = vmatprep.subr.bf16.mxu0 0
    %3759 = vmatpush1.bf16.msra.mxu0 0
    %3760 = vmatprep.subr.bf16.mxu0 0
    %3761 = vmatpush1.bf16.msra.mxu0 0
    %3762 = vmatprep.subr.bf16.mxu0 0
    %3763 = vmatpush1.bf16.msra.mxu0 0
    %3764 = vmatprep.subr.bf16.mxu0 0
    %3765 = vmatpush1.bf16.msra.mxu0 0
    %3766 = vmatprep.subr.bf16.mxu0 0
    %3767 = vmatpush1.bf16.msra.mxu0 0
    %3768 = vmatprep.subr.bf16.mxu0 0
    %3769 = vmatpush1.bf16.msra.mxu0 0
    %3770 = vmatprep.subr.bf16.mxu0 0
    %3771 = vmatpush1.bf16.msra.mxu0 0
    %3772 = vmatprep.mubr.bf16.mxu0 0
    %3773 = vmatmul.mubr.bf16.gmra.mrb[0].mxu0 %v3690
    %v3774 = vpop.f32.mrb[0].mxu0
    %v3775 = vadd.f32 0.0, %v3774
    %v3776 = vpop.f32.mrb[0].mxu0
    %v3777 = vpop.f32.mrb[0].mxu0
    %v3778 = vpop.f32.mrb[0].mxu0
    %3779 = vdwg.mxu0
    %v3780 = vpack.i.b16 %v2485, %v2485
    %v3781 = vlaneseq
    %v3782 = vshrl.u32 %v3781, 7
    %v3783 = vsub.s32 0, %v3782
    %v3784 = vrot.slane %v3780, %v3783
    %v3802 = vunpack.c.l.b16 %v2666
    %v3803 = vunpack.c.l.b16 %v2667
    %v3804 = vunpack.c.l.b16 %v2668
    %v3805 = vunpack.c.l.b16 %v2669
    %v3806 = vunpack.c.l.b16 %v2670
    %v3807 = vunpack.c.l.b16 %v2671
    %v3808 = vunpack.c.l.b16 %v2672
    %v3809 = vunpack.c.l.b16 %v2673
    %v3810 = vunpack.c.l.b16 %v2674
    %v3811 = vunpack.c.l.b16 %v2675
    %v3812 = vunpack.c.l.b16 %v2676
    %v3813 = vunpack.c.l.b16 %v2677
    %v3814 = vunpack.c.l.b16 %v2678
    %v3815 = vunpack.c.l.b16 %v2679
    %v3816 = vunpack.c.l.b16 %v2680
    %v3817 = vunpack.c.l.b16 %v2681
    %v3818 = vpack.c.b16 %v3803, %v3802
    %v3819 = vpack.c.b16 %v3805, %v3804
    %v3820 = vpack.c.b16 %v3807, %v3806
    %v3821 = vpack.c.b16 %v3809, %v3808
    %v3822 = vpack.c.b16 %v3811, %v3810
    %v3823 = vpack.c.b16 %v3813, %v3812
    %v3824 = vpack.c.b16 %v3815, %v3814
    %v3825 = vpack.c.b16 %v3817, %v3816
    %3834 = vmatprep.subr.bf16.mxu0 0
    %3835 = vmatpush1.bf16.msra.mxu0 %v3818
    %3836 = vmatprep.subr.bf16.mxu0 0
    %3837 = vmatpush1.bf16.msra.mxu0 %v3819
    %3838 = vmatprep.subr.bf16.mxu0 0
    %3839 = vmatpush1.bf16.msra.mxu0 %v3820
    %3840 = vmatprep.subr.bf16.mxu0 0
    %3841 = vmatpush1.bf16.msra.mxu0 %v3821
    %3842 = vmatprep.subr.bf16.mxu0 0
    %3843 = vmatpush1.bf16.msra.mxu0 %v3822
    %3844 = vmatprep.subr.bf16.mxu0 0
    %3845 = vmatpush1.bf16.msra.mxu0 %v3823
    %3846 = vmatprep.subr.bf16.mxu0 0
    %3847 = vmatpush1.bf16.msra.mxu0 %v3824
    %3848 = vmatprep.subr.bf16.mxu0 0
    %3849 = vmatpush1.bf16.msra.mxu0 %v3825
    %3850 = vmatprep.subr.bf16.mxu0 0
    %3851 = vmatpush1.bf16.msra.mxu0 0
    %3852 = vmatprep.subr.bf16.mxu0 0
    %3853 = vmatpush1.bf16.msra.mxu0 0
    %3854 = vmatprep.subr.bf16.mxu0 0
    %3855 = vmatpush1.bf16.msra.mxu0 0
    %3856 = vmatprep.subr.bf16.mxu0 0
    %3857 = vmatpush1.bf16.msra.mxu0 0
    %3858 = vmatprep.subr.bf16.mxu0 0
    %3859 = vmatpush1.bf16.msra.mxu0 0
    %3860 = vmatprep.subr.bf16.mxu0 0
    %3861 = vmatpush1.bf16.msra.mxu0 0
    %3862 = vmatprep.subr.bf16.mxu0 0
    %3863 = vmatpush1.bf16.msra.mxu0 0
    %3864 = vmatprep.subr.bf16.mxu0 0
    %3865 = vmatpush1.bf16.msra.mxu0 0
    %3866 = vmatprep.mubr.bf16.mxu0 0
    %3867 = vmatmul.mubr.bf16.gmra.mrb[0].mxu0 %v3784
    %v3868 = vpop.f32.mrb[0].mxu0
    %v3869 = vadd.f32 0.0, %v3868
    %v3870 = vpop.f32.mrb[0].mxu0
    %v3871 = vpop.f32.mrb[0].mxu0
    %v3872 = vpop.f32.mrb[0].mxu0
    %3873 = vdwg.mxu0
    %v3874 = vpack.i.b16 %v2486, %v2486
    %v3875 = vlaneseq
    %v3876 = vshrl.u32 %v3875, 7
    %v3877 = vsub.s32 0, %v3876
    %v3878 = vrot.slane %v3874, %v3877
    %v3896 = vunpack.c.l.b16 %v2682
    %v3897 = vunpack.c.l.b16 %v2683
    %v3898 = vunpack.c.l.b16 %v2684
    %v3899 = vunpack.c.l.b16 %v2685
    %v3900 = vunpack.c.l.b16 %v2686
    %v3901 = vunpack.c.l.b16 %v2687
    %v3902 = vunpack.c.l.b16 %v2688
    %v3903 = vunpack.c.l.b16 %v2689
    %v3904 = vunpack.c.l.b16 %v2690
    %v3905 = vunpack.c.l.b16 %v2691
    %v3906 = vunpack.c.l.b16 %v2692
    %v3907 = vunpack.c.l.b16 %v2693
    %v3908 = vunpack.c.l.b16 %v2694
    %v3909 = vunpack.c.l.b16 %v2695
    %v3910 = vunpack.c.l.b16 %v2696
    %v3911 = vunpack.c.l.b16 %v2697
    %v3912 = vpack.c.b16 %v3897, %v3896
    %v3913 = vpack.c.b16 %v3899, %v3898
    %v3914 = vpack.c.b16 %v3901, %v3900
    %v3915 = vpack.c.b16 %v3903, %v3902
    %v3916 = vpack.c.b16 %v3905, %v3904
    %v3917 = vpack.c.b16 %v3907, %v3906
    %v3918 = vpack.c.b16 %v3909, %v3908
    %v3919 = vpack.c.b16 %v3911, %v3910
    %3928 = vmatprep.subr.bf16.mxu0 0
    %3929 = vmatpush1.bf16.msra.mxu0 %v3912
    %3930 = vmatprep.subr.bf16.mxu0 0
    %3931 = vmatpush1.bf16.msra.mxu0 %v3913
    %3932 = vmatprep.subr.bf16.mxu0 0
    %3933 = vmatpush1.bf16.msra.mxu0 %v3914
    %3934 = vmatprep.subr.bf16.mxu0 0
    %3935 = vmatpush1.bf16.msra.mxu0 %v3915
    %3936 = vmatprep.subr.bf16.mxu0 0
    %3937 = vmatpush1.bf16.msra.mxu0 %v3916
    %3938 = vmatprep.subr.bf16.mxu0 0
    %3939 = vmatpush1.bf16.msra.mxu0 %v3917
    %3940 = vmatprep.subr.bf16.mxu0 0
    %3941 = vmatpush1.bf16.msra.mxu0 %v3918
    %3942 = vmatprep.subr.bf16.mxu0 0
    %3943 = vmatpush1.bf16.msra.mxu0 %v3919
    %3944 = vmatprep.subr.bf16.mxu0 0
    %3945 = vmatpush1.bf16.msra.mxu0 0
    %3946 = vmatprep.subr.bf16.mxu0 0
    %3947 = vmatpush1.bf16.msra.mxu0 0
    %3948 = vmatprep.subr.bf16.mxu0 0
    %3949 = vmatpush1.bf16.msra.mxu0 0
    %3950 = vmatprep.subr.bf16.mxu0 0
    %3951 = vmatpush1.bf16.msra.mxu0 0
    %3952 = vmatprep.subr.bf16.mxu0 0
    %3953 = vmatpush1.bf16.msra.mxu0 0
    %3954 = vmatprep.subr.bf16.mxu0 0
    %3955 = vmatpush1.bf16.msra.mxu0 0
    %3956 = vmatprep.subr.bf16.mxu0 0
    %3957 = vmatpush1.bf16.msra.mxu0 0
    %3958 = vmatprep.subr.bf16.mxu0 0
    %3959 = vmatpush1.bf16.msra.mxu0 0
    %3960 = vmatprep.mubr.bf16.mxu0 0
    %3961 = vmatmul.mubr.bf16.gmra.mrb[0].mxu0 %v3878
    %v3962 = vpop.f32.mrb[0].mxu0
    %v3963 = vadd.f32 0.0, %v3962
    %v3964 = vpop.f32.mrb[0].mxu0
    %v3965 = vpop.f32.mrb[0].mxu0
    %v3966 = vpop.f32.mrb[0].mxu0
    %3967 = vdwg.mxu0
    %v3968 = vpack.i.b16 %v2487, %v2487
    %v3969 = vlaneseq
    %v3970 = vshrl.u32 %v3969, 7
    %v3971 = vsub.s32 0, %v3970
    %v3972 = vrot.slane %v3968, %v3971
    %v3990 = vunpack.c.l.b16 %v2698
    %v3991 = vunpack.c.l.b16 %v2699
    %v3992 = vunpack.c.l.b16 %v2700
    %v3993 = vunpack.c.l.b16 %v2701
    %v3994 = vunpack.c.l.b16 %v2702
    %v3995 = vunpack.c.l.b16 %v2703
    %v3996 = vunpack.c.l.b16 %v2704
    %v3997 = vunpack.c.l.b16 %v2705
    %v3998 = vunpack.c.l.b16 %v2706
    %v3999 = vunpack.c.l.b16 %v2707
    %v4000 = vunpack.c.l.b16 %v2708
    %v4001 = vunpack.c.l.b16 %v2709
    %v4002 = vunpack.c.l.b16 %v2710
    %v4003 = vunpack.c.l.b16 %v2711
    %v4004 = vunpack.c.l.b16 %v2712
    %v4005 = vunpack.c.l.b16 %v2713
    %v4006 = vpack.c.b16 %v3991, %v3990
    %v4007 = vpack.c.b16 %v3993, %v3992
    %v4008 = vpack.c.b16 %v3995, %v3994
    %v4009 = vpack.c.b16 %v3997, %v3996
    %v4010 = vpack.c.b16 %v3999, %v3998
    %v4011 = vpack.c.b16 %v4001, %v4000
    %v4012 = vpack.c.b16 %v4003, %v4002
    %v4013 = vpack.c.b16 %v4005, %v4004
    %4022 = vmatprep.subr.bf16.mxu0 0
    %4023 = vmatpush1.bf16.msra.mxu0 %v4006
    %4024 = vmatprep.subr.bf16.mxu0 0
    %4025 = vmatpush1.bf16.msra.mxu0 %v4007
    %4026 = vmatprep.subr.bf16.mxu0 0
    %4027 = vmatpush1.bf16.msra.mxu0 %v4008
    %4028 = vmatprep.subr.bf16.mxu0 0
    %4029 = vmatpush1.bf16.msra.mxu0 %v4009
    %4030 = vmatprep.subr.bf16.mxu0 0
    %4031 = vmatpush1.bf16.msra.mxu0 %v4010
    %4032 = vmatprep.subr.bf16.mxu0 0
    %4033 = vmatpush1.bf16.msra.mxu0 %v4011
    %4034 = vmatprep.subr.bf16.mxu0 0
    %4035 = vmatpush1.bf16.msra.mxu0 %v4012
    %4036 = vmatprep.subr.bf16.mxu0 0
    %4037 = vmatpush1.bf16.msra.mxu0 %v4013
    %4038 = vmatprep.subr.bf16.mxu0 0
    %4039 = vmatpush1.bf16.msra.mxu0 0
    %4040 = vmatprep.subr.bf16.mxu0 0
    %4041 = vmatpush1.bf16.msra.mxu0 0
    %4042 = vmatprep.subr.bf16.mxu0 0
    %4043 = vmatpush1.bf16.msra.mxu0 0
    %4044 = vmatprep.subr.bf16.mxu0 0
    %4045 = vmatpush1.bf16.msra.mxu0 0
    %4046 = vmatprep.subr.bf16.mxu0 0
    %4047 = vmatpush1.bf16.msra.mxu0 0
    %4048 = vmatprep.subr.bf16.mxu0 0
    %4049 = vmatpush1.bf16.msra.mxu0 0
    %4050 = vmatprep.subr.bf16.mxu0 0
    %4051 = vmatpush1.bf16.msra.mxu0 0
    %4052 = vmatprep.subr.bf16.mxu0 0
    %4053 = vmatpush1.bf16.msra.mxu0 0
    %4054 = vmatprep.mubr.bf16.mxu0 0
    %4055 = vmatmul.mubr.bf16.gmra.mrb[0].mxu0 %v3972
    %v4056 = vpop.f32.mrb[0].mxu0
    %v4057 = vadd.f32 0.0, %v4056
    %v4058 = vpop.f32.mrb[0].mxu0
    %v4059 = vpop.f32.mrb[0].mxu0
    %v4060 = vpop.f32.mrb[0].mxu0
    %4061 = vdwg.mxu0
    %v4062 = vpack.i.b16 %v2488, %v2488
    %v4063 = vlaneseq
    %v4064 = vshrl.u32 %v4063, 7
    %v4065 = vsub.s32 0, %v4064
    %v4066 = vrot.slane %v4062, %v4065
    %v4084 = vunpack.c.l.b16 %v2714
    %v4085 = vunpack.c.l.b16 %v2715
    %v4086 = vunpack.c.l.b16 %v2716
    %v4087 = vunpack.c.l.b16 %v2717
    %v4088 = vunpack.c.l.b16 %v2718
    %v4089 = vunpack.c.l.b16 %v2719
    %v4090 = vunpack.c.l.b16 %v2720
    %v4091 = vunpack.c.l.b16 %v2721
    %v4092 = vunpack.c.l.b16 %v2722
    %v4093 = vunpack.c.l.b16 %v2723
    %v4094 = vunpack.c.l.b16 %v2724
    %v4095 = vunpack.c.l.b16 %v2725
    %v4096 = vunpack.c.l.b16 %v2726
    %v4097 = vunpack.c.l.b16 %v2727
    %v4098 = vunpack.c.l.b16 %v2728
    %v4099 = vunpack.c.l.b16 %v2729
    %v4100 = vpack.c.b16 %v4085, %v4084
    %v4101 = vpack.c.b16 %v4087, %v4086
    %v4102 = vpack.c.b16 %v4089, %v4088
    %v4103 = vpack.c.b16 %v4091, %v4090
    %v4104 = vpack.c.b16 %v4093, %v4092
    %v4105 = vpack.c.b16 %v4095, %v4094
    %v4106 = vpack.c.b16 %v4097, %v4096
    %v4107 = vpack.c.b16 %v4099, %v4098
    %4116 = vmatprep.subr.bf16.mxu0 0
    %4117 = vmatpush1.bf16.msra.mxu0 %v4100
    %4118 = vmatprep.subr.bf16.mxu0 0
    %4119 = vmatpush1.bf16.msra.mxu0 %v4101
    %4120 = vmatprep.subr.bf16.mxu0 0
    %4121 = vmatpush1.bf16.msra.mxu0 %v4102
    %4122 = vmatprep.subr.bf16.mxu0 0
    %4123 = vmatpush1.bf16.msra.mxu0 %v4103
    %4124 = vmatprep.subr.bf16.mxu0 0
    %4125 = vmatpush1.bf16.msra.mxu0 %v4104
    %4126 = vmatprep.subr.bf16.mxu0 0
    %4127 = vmatpush1.bf16.msra.mxu0 %v4105
    %4128 = vmatprep.subr.bf16.mxu0 0
    %4129 = vmatpush1.bf16.msra.mxu0 %v4106
    %4130 = vmatprep.subr.bf16.mxu0 0
    %4131 = vmatpush1.bf16.msra.mxu0 %v4107
    %4132 = vmatprep.subr.bf16.mxu0 0
    %4133 = vmatpush1.bf16.msra.mxu0 0
    %4134 = vmatprep.subr.bf16.mxu0 0
    %4135 = vmatpush1.bf16.msra.mxu0 0
    %4136 = vmatprep.subr.bf16.mxu0 0
    %4137 = vmatpush1.bf16.msra.mxu0 0
    %4138 = vmatprep.subr.bf16.mxu0 0
    %4139 = vmatpush1.bf16.msra.mxu0 0
    %4140 = vmatprep.subr.bf16.mxu0 0
    %4141 = vmatpush1.bf16.msra.mxu0 0
    %4142 = vmatprep.subr.bf16.mxu0 0
    %4143 = vmatpush1.bf16.msra.mxu0 0
    %4144 = vmatprep.subr.bf16.mxu0 0
    %4145 = vmatpush1.bf16.msra.mxu0 0
    %4146 = vmatprep.subr.bf16.mxu0 0
    %4147 = vmatpush1.bf16.msra.mxu0 0
    %4148 = vmatprep.mubr.bf16.mxu0 0
    %4149 = vmatmul.mubr.bf16.gmra.mrb[0].mxu0 %v4066
    %v4150 = vpop.f32.mrb[0].mxu0
    %v4151 = vadd.f32 0.0, %v4150
    %v4152 = vpop.f32.mrb[0].mxu0
    %v4153 = vpop.f32.mrb[0].mxu0
    %v4154 = vpop.f32.mrb[0].mxu0
    %4155 = vdwg.mxu0
    %v4156 = vpack.i.b16 %v2489, %v2489
    %v4157 = vlaneseq
    %v4158 = vshrl.u32 %v4157, 7
    %v4159 = vsub.s32 0, %v4158
    %v4160 = vrot.slane %v4156, %v4159
    %v4178 = vunpack.c.l.b16 %v2730
    %v4179 = vunpack.c.l.b16 %v2731
    %v4180 = vunpack.c.l.b16 %v2732
    %v4181 = vunpack.c.l.b16 %v2733
    %v4182 = vunpack.c.l.b16 %v2734
    %v4183 = vunpack.c.l.b16 %v2735
    %v4184 = vunpack.c.l.b16 %v2736
    %v4185 = vunpack.c.l.b16 %v2737
    %v4186 = vunpack.c.l.b16 %v2738
    %v4187 = vunpack.c.l.b16 %v2739
    %v4188 = vunpack.c.l.b16 %v2740
    %v4189 = vunpack.c.l.b16 %v2741
    %v4190 = vunpack.c.l.b16 %v2742
    %v4191 = vunpack.c.l.b16 %v2743
    %v4192 = vunpack.c.l.b16 %v2744
    %v4193 = vunpack.c.l.b16 %v2745
    %v4194 = vpack.c.b16 %v4179, %v4178
    %v4195 = vpack.c.b16 %v4181, %v4180
    %v4196 = vpack.c.b16 %v4183, %v4182
    %v4197 = vpack.c.b16 %v4185, %v4184
    %v4198 = vpack.c.b16 %v4187, %v4186
    %v4199 = vpack.c.b16 %v4189, %v4188
    %v4200 = vpack.c.b16 %v4191, %v4190
    %v4201 = vpack.c.b16 %v4193, %v4192
    %4210 = vmatprep.subr.bf16.mxu0 0
    %4211 = vmatpush1.bf16.msra.mxu0 %v4194
    %4212 = vmatprep.subr.bf16.mxu0 0
    %4213 = vmatpush1.bf16.msra.mxu0 %v4195
    %4214 = vmatprep.subr.bf16.mxu0 0
    %4215 = vmatpush1.bf16.msra.mxu0 %v4196
    %4216 = vmatprep.subr.bf16.mxu0 0
    %4217 = vmatpush1.bf16.msra.mxu0 %v4197
    %4218 = vmatprep.subr.bf16.mxu0 0
    %4219 = vmatpush1.bf16.msra.mxu0 %v4198
    %4220 = vmatprep.subr.bf16.mxu0 0
    %4221 = vmatpush1.bf16.msra.mxu0 %v4199
    %4222 = vmatprep.subr.bf16.mxu0 0
    %4223 = vmatpush1.bf16.msra.mxu0 %v4200
    %4224 = vmatprep.subr.bf16.mxu0 0
    %4225 = vmatpush1.bf16.msra.mxu0 %v4201
    %4226 = vmatprep.subr.bf16.mxu0 0
    %4227 = vmatpush1.bf16.msra.mxu0 0
    %4228 = vmatprep.subr.bf16.mxu0 0
    %4229 = vmatpush1.bf16.msra.mxu0 0
    %4230 = vmatprep.subr.bf16.mxu0 0
    %4231 = vmatpush1.bf16.msra.mxu0 0
    %4232 = vmatprep.subr.bf16.mxu0 0
    %4233 = vmatpush1.bf16.msra.mxu0 0
    %4234 = vmatprep.subr.bf16.mxu0 0
    %4235 = vmatpush1.bf16.msra.mxu0 0
    %4236 = vmatprep.subr.bf16.mxu0 0
    %4237 = vmatpush1.bf16.msra.mxu0 0
    %4238 = vmatprep.subr.bf16.mxu0 0
    %4239 = vmatpush1.bf16.msra.mxu0 0
    %4240 = vmatprep.subr.bf16.mxu0 0
    %4241 = vmatpush1.bf16.msra.mxu0 0
    %4242 = vmatprep.mubr.bf16.mxu0 0
    %4243 = vmatmul.mubr.bf16.gmra.mrb[0].mxu0 %v4160
    %v4244 = vpop.f32.mrb[0].mxu0
    %v4245 = vadd.f32 0.0, %v4244
    %v4246 = vpop.f32.mrb[0].mxu0
    %v4247 = vpop.f32.mrb[0].mxu0
    %v4248 = vpop.f32.mrb[0].mxu0
    %4249 = vdwg.mxu0
    %v4266 = vrot.slane %v2929, 7
    %v4267 = vsel %vm2367, %v4266, %v2835
    %v4268 = vrot.slane %v3023, 6
    %v4269 = vsel %vm2370, %v4268, %v4267
    %v4270 = vrot.slane %v3117, 5
    %v4271 = vsel %vm2373, %v4270, %v4269
    %v4272 = vrot.slane %v3211, 4
    %v4273 = vsel %vm2376, %v4272, %v4271
    %v4274 = vrot.slane %v3305, 3
    %v4275 = vsel %vm2379, %v4274, %v4273
    %v4276 = vrot.slane %v3399, 2
    %v4277 = vsel %vm2382, %v4276, %v4275
    %v4278 = vrot.slane %v3493, 1
    %v4279 = vsel %vm2385, %v4278, %v4277
    %v4280 = vrot.slane %v3681, 7
    %v4281 = vsel %vm2367, %v4280, %v3587
    %v4282 = vrot.slane %v3775, 6
    %v4283 = vsel %vm2370, %v4282, %v4281
    %v4284 = vrot.slane %v3869, 5
    %v4285 = vsel %vm2373, %v4284, %v4283
    %v4286 = vrot.slane %v3963, 4
    %v4287 = vsel %vm2376, %v4286, %v4285
    %v4288 = vrot.slane %v4057, 3
    %v4289 = vsel %vm2379, %v4288, %v4287
    %v4290 = vrot.slane %v4151, 2
    %v4291 = vsel %vm2382, %v4290, %v4289
    %v4292 = vrot.slane %v4245, 1
    %v4293 = vsel %vm2385, %v4292, %v4291
    %v4296 = vadd.f32 %v517, %v4279
    %v4297 = vadd.f32 %v518, %v4293
    %v4298 = vmul.f32 %v4296, 0.70710677
    %v4299 = vmul.f32 %v4297, 0.70710677
    %v4300 = vpack.c.bf16 %v4299, %v4298
    %v4302 = vunpack.c.l.b16 %v4300
    %v4303 = vunpack.c.h.b16 %v4300
    %v4304 = vpack.c.b16 %v4302, %v4302
    %v4305 = vpack.c.b16 %v4303, %v4303
    %4308 = vst [vmem:[#allocation11] sm:$0xf] %v4304
    %4309 = vst [vmem:[#allocation11 + $0x4] sm:$0xf] %v4305
    // Predicated region
    $region46: #{tpu_custom_call.1} parent=1 // pred_check
      _
    $region47: #{tpu_custom_call.1} parent=1 // pred_check_branch
      %4311 = sbr.rel (0) target = $region49
    $region48: #{tpu_custom_call.1} parent=1 // pred_region
      %s4313 = ssub.s32 128, 128
      %4314 = vsyncadd [#allocation4], %s4313
      %s4315 = sshll.u32 [#allocation11], 4
      %s4316 = int_to_ptr.vmem [resolvable:$true] %s4315
      %4321 = dma.vmem_to_hbm [thread:$0]  %s4316, 128, %s6, [#allocation4], 64, 64, 4
    $region49: #{tpu_custom_call.1} parent=1 // pred_fallthru
      _
    // Predicated region
    $region50: #{tpu_custom_call.1} parent=1 // pred_check
      _
    $region51: #{tpu_custom_call.1} parent=1 // pred_check_branch
      %4323 = sbr.rel (0) target = $region53
    $region52: #{tpu_custom_call.1} parent=1 // pred_region
      %4324 = dma.done [#allocation4], 128
    $region53: #{tpu_custom_call.1} parent=1 // pred_fallthru
      _
    %4325 = vsyncpa [#allocation3], 1
    %4326 = vsyncpa [#allocation6], 1
    %4327 = vsyncpa [#allocation9], 1
    %4328 = vsyncpa [#allocation4], 1

</llo_original>
